<compile_context>
chip_gen: v7x
topology: tpu7x:2x2x1
jax: 0.10.0
libtpu: 0.0.40
codegen_flags: <defaults>
</compile_context>

<pallas_src>
import numpy as np

import jax
import jax.numpy as jnp
from jax import lax
from jax.experimental import pallas as pl
from jax.experimental.pallas import tpu as pltpu


# ------------------------------- constants ---------------------------------

LAT_H = LAT_W = 16          # latent spatial size
IMG_H = IMG_W = 128         # pixel image size (8x latent)
P = LAT_H * LAT_W           # 256 spatial positions -> lane axis
C_LAT = 4                   # latent channels
CL8 = 8                     # latent channels padded to a full sublane group
C_IN_UNET = C_LAT + 1 + C_LAT   # latents + mask + masked-image latents = 9
D_TXT = 32                  # text embedding dim
D_HID = 32                  # unet hidden dim
SEQ = 8                     # token sequence length
VOCAB = 64
VAE_SCALE = 0.18215

# row offsets inside the packed weight array (all multiples of 8 -> aligned
# f32 sublane slices; lane width is always the full 32 columns)
_R_WIN = 0                  # (Dh, 32): w_in[:4]^T in cols 0:4
_R_WQ = 32                  # (Dh, 32): wq^T * (1/sqrt(Dh))
_R_K = 64                   # (2S, 32): k_uncond rows 0:S, k_cond rows S:2S
_R_VTU = 80                 # (Dh, 32): v_uncond^T in cols 0:S
_R_VTC = 112                # (Dh, 32): v_cond^T   in cols 0:S
_R_WOUT = 144               # (8, 32):  w_out^T, rows 4:8 zero
_R_WDEC = 152               # (8, 32):  (w_dec^T / VAE_SCALE), cols 0:4, rows 3:8 zero
_W_ROWS = 160


# ----------------------------- Pallas kernel -------------------------------

def _denoise_kernel(coefs_ref, base_ref, lat0_ref, w_ref, b_ref, out_ref):
    """One grid step = one sample: full denoising loop + CFG + DDIM + decode.

    Activations are lane-dense (channels, P) with P=256 lanes. The latents
    (CL8, P) are carried through an in-kernel fori_loop (2 vregs), never
    touching VMEM/HBM between steps.
    """
    steps = base_ref.shape[0]
    Dh = base_ref.shape[1]
    Pn = base_ref.shape[2]

    # ---- static, sublane-aligned views of the packed weights; cast to bf16
    # once (outside the loop) so every matmul runs the bf16 MXU path --------
    w_in_lat = w_ref[_R_WIN:_R_WIN + Dh, :][:, :CL8].astype(jnp.bfloat16)    # (Dh, 8)
    wq       = w_ref[_R_WQ:_R_WQ + Dh, :].astype(jnp.bfloat16)               # (Dh, Dh)
    k_stack  = w_ref[_R_K:_R_K + 2 * SEQ, :].astype(jnp.bfloat16)            # (2S, Dh)
    vT_u     = w_ref[_R_VTU:_R_VTU + Dh, :][:, :SEQ].astype(jnp.bfloat16)    # (Dh, S)
    vT_c     = w_ref[_R_VTC:_R_VTC + Dh, :][:, :SEQ].astype(jnp.bfloat16)    # (Dh, S)
    w_out    = w_ref[_R_WOUT:_R_WOUT + CL8, :].astype(jnp.bfloat16)          # (8, Dh)
    w_dec    = w_ref[_R_WDEC:_R_WDEC + CL8, :][:, :CL8].astype(jnp.bfloat16) # (8, 8)
    b_out    = b_ref[0:CL8]                                                  # (8, 1) f32
    b_dec    = b_ref[CL8:2 * CL8]                                            # (8, 1) f32

    def softmax_tok(x):                     # softmax over the token axis (axis 0), f32
        x = x - jnp.max(x, axis=0, keepdims=True)
        e = jnp.exp(x)
        return e * pl.reciprocal(jnp.sum(e, axis=0, keepdims=True), approx=True)

    def step_fn(s, lat):                    # lat: (CL8, P) f32, loop-carried
        a = coefs_ref[4 * s]                # DDIM: x_{t-1} = a * x_t + bc * eps
        bc = coefs_ref[4 * s + 1]
        g = coefs_ref[4 * s + 2]            # guidance scale

        # UNet input projection; mask / masked-image / bias / timestep-emb
        # contribution is the precomputed per-step `base` table.
        h = jnp.dot(w_in_lat, lat.astype(jnp.bfloat16),
                    preferred_element_type=jnp.float32) + base_ref[s]        # (Dh, P)
        h_bf = h.astype(jnp.bfloat16)

        # shared query; both CFG branches' scores in ONE stacked-K matmul
        q = jnp.dot(wq, h_bf, preferred_element_type=jnp.float32)            # (Dh, P)
        sc = jnp.dot(k_stack, q.astype(jnp.bfloat16),
                     preferred_element_type=jnp.float32)                     # (2S, P)
        p_u = softmax_tok(sc[0:SEQ]).astype(jnp.bfloat16)
        p_c = softmax_tok(sc[SEQ:2 * SEQ]).astype(jnp.bfloat16)

        gb_u = jax.nn.gelu(
            h + jnp.dot(vT_u, p_u, preferred_element_type=jnp.float32),
            approximate=True).astype(jnp.bfloat16)
        gb_c = jax.nn.gelu(
            h + jnp.dot(vT_c, p_c, preferred_element_type=jnp.float32),
            approximate=True).astype(jnp.bfloat16)

        # ONE output projection over both branches stacked along lanes (Dh, 2P)
        gb = jnp.concatenate([gb_u, gb_c], axis=1)
        eps2 = jnp.dot(w_out, gb, preferred_element_type=jnp.float32) + b_out  # (8, 2P)
        eps_u = eps2[:, :Pn]
        eps_c = eps2[:, Pn:]
        eps = eps_u + g * (eps_c - eps_u)   # classifier-free guidance

        return a * lat + bc * eps           # DDIM update (padded rows stay 0)

    lat = lax.fori_loop(0, steps, step_fn, lat0_ref[0], unroll=steps <= 8)

    # fused "VAE" decode (1/VAE_SCALE folded into w_dec) + post-processing
    # ((x/2 + 0.5).clamp(0, 1)); channels 3:8 are padding, dropped outside.
    dec = jnp.dot(w_dec, lat.astype(jnp.bfloat16),
                  preferred_element_type=jnp.float32) + b_dec                # (8, P)
    out_ref[0] = jnp.clip(dec * 0.5 + 0.5, 0.0, 1.0)


def fused_denoise(coefs, base_steps, lat0, w_pack, b_pack):
    """Whole denoising loop (+decode) in a single pallas_call, grid=(N,)."""
    N = lat0.shape[0]
    steps, Dh, Pn = base_steps.shape

    return pl.pallas_call(
        _denoise_kernel,
        out_shape=jax.ShapeDtypeStruct((N, CL8, Pn), jnp.float32),
        grid=(N,),
        in_specs=[
            pl.BlockSpec(memory_space=pltpu.MemorySpace.SMEM),       # coefs (1D table)
            pl.BlockSpec((steps, Dh, Pn), lambda n: (0, 0, 0)),      # base+temb table
            pl.BlockSpec((1, CL8, Pn), lambda n: (n, 0, 0)),         # init latents
            pl.BlockSpec((_W_ROWS, Dh), lambda n: (0, 0)),           # packed weights
            pl.BlockSpec((2 * CL8, 1), lambda n: (0, 0)),            # packed biases
        ],
        out_specs=pl.BlockSpec((1, CL8, Pn), lambda n: (n, 0, 0)),
        compiler_params=pltpu.CompilerParams(
            dimension_semantics=("parallel",)),      # N samples -> both TCs on v7x
    )(coefs, base_steps, lat0, w_pack, b_pack)


# ------------------------------- glue (JAX) ---------------------------------

def init_params(key):
    ks = jax.random.split(key, 12)
    n = lambda k, s, scale: (jax.random.normal(k, s, jnp.float32) * scale)
    return {
        # text "encoder"
        "tok_emb": n(ks[0], (VOCAB, D_TXT), 0.05),
        "pos_emb": n(ks[1], (SEQ, D_TXT), 0.05),
        # VAE
        "w_enc": n(ks[2], (3, C_LAT), 0.5),
        "b_enc": jnp.zeros((1, C_LAT), jnp.float32),
        "w_dec": n(ks[3], (C_LAT, 3), 0.5),
        "b_dec": jnp.zeros((1, 3), jnp.float32),
        # UNet
        "w_in": n(ks[4], (C_IN_UNET, D_HID), 0.3),
        "b_in": jnp.zeros((1, D_HID), jnp.float32),
        "wq": n(ks[5], (D_HID, D_HID), 0.2),
        "wk": n(ks[6], (D_TXT, D_HID), 0.2),
        "wv": n(ks[7], (D_TXT, D_HID), 0.2),
        "w_out": n(ks[8], (D_HID, C_LAT), 0.2),
        "b_out": jnp.zeros((1, C_LAT), jnp.float32),
    }


def encode_text(token_ids, params):
    # TODO(synk): full CLIP transformer replaced by embedding + layernorm.
    emb = params["tok_emb"][token_ids] + params["pos_emb"][None, :, :]
    mu = emb.mean(-1, keepdims=True)
    var = emb.var(-1, keepdims=True)
    return (emb - mu) / jnp.sqrt(var + 1e-5)        # (B, S, D_TXT)


def avgpool8_nhwc(x):
    B, H, W, C = x.shape
    return x.reshape(B, H // 8, 8, W // 8, 8, C).mean(axis=(2, 4))


def _make_schedule(steps, guidance_scale, d_hid):
    """Host-side (numpy) DDIM schedule + timestep embeddings: no device syncs."""
    betas = np.linspace(1e-4, 0.02, 1000, dtype=np.float64)
    alphas_cumprod = np.cumprod(1.0 - betas)
    timesteps = np.linspace(999, 0, steps).astype(np.int64)
    coefs = np.zeros((steps, 4), np.float32)        # [a_coef, b_coef, g, 0]
    tembs = np.zeros((steps, d_hid, 1), np.float32)
    half = d_hid // 2
    freqs = np.exp(-np.log(10000.0) * np.arange(half, dtype=np.float64) / half)
    for s in range(steps):
        t = int(timesteps[s])
        a_t = float(alphas_cumprod[t])
        a_prev = (float(alphas_cumprod[int(timesteps[s + 1])])
                  if s + 1 < steps else 1.0)
        a_coef = (a_prev / a_t) ** 0.5
        b_coef = (1.0 - a_prev) ** 0.5 - a_coef * (1.0 - a_t) ** 0.5
        coefs[s] = [a_coef, b_coef, guidance_scale, 0.0]
        args = t * freqs
        tembs[s, :, 0] = np.concatenate([np.cos(args), np.sin(args)])
    # 1-D coefs table (SMEM-friendly), per-step timestep-embedding table
    return jnp.asarray(coefs.reshape(-1)), jnp.asarray(tembs)


@jax.jit
def _forward_core(prompt_ids, neg_prompt_ids, image, mask, noise,
                  coefs, temb_tab, params):
    N = noise.shape[0]
    Dh = D_HID

    # ---- text conditioning: cond/uncond K,V hoisted out of the denoise loop ----
    txt_c = encode_text(prompt_ids, params)[0]              # (S, D_TXT)
    txt_u = encode_text(neg_prompt_ids, params)[0]
    k_c = txt_c @ params["wk"]                              # (S, Dh)
    k_u = txt_u @ params["wk"]
    vT_c = (txt_c @ params["wv"]).T                         # (Dh, S)
    vT_u = (txt_u @ params["wv"]).T

    # ---- "VAE" encode masked image + downsample mask (done once) ----
    img_nhwc = jnp.transpose(image, (0, 2, 3, 1))           # NCHW -> NHWC
    mask_nhwc = jnp.transpose(mask, (0, 2, 3, 1))
    masked_img = img_nhwc * (1.0 - mask_nhwc)
    masked_small = avgpool8_nhwc(2.0 * masked_img - 1.0).reshape(P, 3)
    mask_small = (avgpool8_nhwc(mask_nhwc) > 0.5).astype(jnp.float32).reshape(P, 1)
    masked_lat = (masked_small @ params["w_enc"] + params["b_enc"]) * VAE_SCALE  # (P,4)

    # loop-invariant part of the UNet input projection (mask + masked-image
    # columns of w_in + bias), lane-dense (Dh, P); timestep embedding folded
    # in per step -> (steps, Dh, P) table, VMEM-resident in the kernel.
    # NOTE: shared across the N samples; only correct because image/mask batch is 1.
    w_in = params["w_in"]
    base = (mask_small @ w_in[4:5] + masked_lat @ w_in[5:9] + params["b_in"]).T  # (Dh, P)
    base_steps = base[None, :, :] + temb_tab                # (steps, Dh, P)

    # ---- pack every tiny weight into one f32 array (sliced in-kernel) ----
    w_pack = jnp.zeros((_W_ROWS, Dh), jnp.float32)
    w_pack = w_pack.at[_R_WIN:_R_WIN + Dh, 0:C_LAT].set(w_in[:C_LAT].T)
    w_pack = w_pack.at[_R_WQ:_R_WQ + Dh, :].set(params["wq"].T * (1.0 / (Dh ** 0.5)))
    w_pack = w_pack.at[_R_K:_R_K + SEQ, :].set(k_u)
    w_pack = w_pack.at[_R_K + SEQ:_R_K + 2 * SEQ, :].set(k_c)
    w_pack = w_pack.at[_R_VTU:_R_VTU + Dh, 0:SEQ].set(vT_u)
    w_pack = w_pack.at[_R_VTC:_R_VTC + Dh, 0:SEQ].set(vT_c)
    w_pack = w_pack.at[_R_WOUT:_R_WOUT + C_LAT, :].set(params["w_out"].T)
    w_pack = w_pack.at[_R_WDEC:_R_WDEC + 3, 0:C_LAT].set(params["w_dec"].T / VAE_SCALE)

    b_pack = jnp.zeros((2 * CL8, 1), jnp.float32)
    b_pack = b_pack.at[0:C_LAT, :].set(params["b_out"].T)
    b_pack = b_pack.at[CL8:CL8 + 3, :].set(params["b_dec"].T)

    # latent channels padded 4 -> 8 so all kernel loads/stores are full-sublane
    lat0 = jnp.zeros((N, CL8, P), jnp.float32).at[:, :C_LAT, :].set(noise)

    out_T = fused_denoise(coefs, base_steps, lat0, w_pack, b_pack)   # (N, 8, P) in [0,1]

    dec = jnp.transpose(out_T[:, :3, :], (0, 2, 1)).reshape(N, LAT_H, LAT_W, 3)
    # nearest 8x upsample via broadcast+reshape (no gather-like repeats)
    images = jnp.broadcast_to(dec[:, :, None, :, None, :],
                              (N, LAT_H, 8, LAT_W, 8, 3)).reshape(N, IMG_H, IMG_W, 3)
    return images                                           # (N, 128, 128, 3)


def inpainting_forward(prompt_ids, image, mask, params, *, steps=4,
                       guidance_scale=7.5, neg_prompt_ids=None,
                       num_samples=1, seed=0):
    """Mirrors Inpainting_Model.forward semantics on synthetic weights.

    prompt_ids: int32 [1, SEQ]; image: float32 NCHW [1, 3, 128, 128] in [0,1];
    mask: float32 NCHW [1, 1, 128, 128] (1 = region to inpaint).
    Returns images float32 NHWC [num_samples, 128, 128, 3] in [0, 1].
    """
    if neg_prompt_ids is None:
        neg_prompt_ids = jnp.zeros_like(prompt_ids)
    coefs, temb_tab = _make_schedule(steps, guidance_scale, D_HID)
    # initial noise latents (generator.manual_seed(seed)), lane-dense (N, C, P)
    noise = jax.random.normal(jax.random.PRNGKey(seed),
                              (num_samples, C_LAT, P), jnp.float32)
    return _forward_core(prompt_ids, neg_prompt_ids, image, mask, noise,
                         coefs, temb_tab, params)


# ---------------------------------- main -------------------------------------

if __name__ == "__main__":
    key = jax.random.PRNGKey(0)
    k_img, k_ids, _ = jax.random.split(key, 3)

    params = init_params(jax.random.PRNGKey(42))

    image = jax.random.uniform(k_img, (1, 3, IMG_H, IMG_W), jnp.float32)
    mask = jnp.zeros((1, 1, IMG_H, IMG_W), jnp.float32)
    mask = mask.at[:, :, 32:96, 32:96].set(1.0)
    prompt_ids = jax.random.randint(k_ids, (1, SEQ), 0, VOCAB, jnp.int32)

    # num_samples=2 keeps the leading "parallel" grid axis non-degenerate
    # (second TensorCore on v7x gets a sample of its own).
    out = inpainting_forward(prompt_ids, image, mask, params,
                             steps=4, guidance_scale=7.5,
                             num_samples=2, seed=0)
    out = jax.block_until_ready(out)
    assert out.shape == (2, IMG_H, IMG_W, 3)
    assert bool(jnp.all(jnp.isfinite(out)))
    print("KERNEL_OK")
</pallas_src>

<mosaic_0001>
module attributes {stable_mosaic.version = 11 : i64} {
  func.func @_denoise_kernel(%arg0: i32, %arg1: memref<16xf32, #tpu.memory_space<smem>>, %arg2: memref<4x32x256xf32, #tpu.memory_space<vmem>>, %arg3: memref<1x8x256xf32, #tpu.memory_space<vmem>>, %arg4: memref<160x32xf32, #tpu.memory_space<vmem>>, %arg5: memref<16x1xf32, #tpu.memory_space<vmem>>, %arg6: memref<1x8x256xf32, #tpu.memory_space<vmem>>) attributes {dimension_semantics = [#tpu.dimension_semantics<parallel>], iteration_bounds = array<i64: 2>, scalar_prefetch = 0 : i64, scratch_operands = 0 : i64, tpu.core_type = #tpu.core_type<tc>, window_params = [{transform_indices = @transform_0, window_bounds = array<i64: 16>}, {pipeline_mode = #tpu.pipeline_mode<synchronous>, transform_indices = @transform_1, window_bounds = array<i64: 4, 32, 256>}, {transform_indices = @transform_2, window_bounds = array<i64: 1, 8, 256>}, {pipeline_mode = #tpu.pipeline_mode<synchronous>, transform_indices = @transform_3, window_bounds = array<i64: 160, 32>}, {pipeline_mode = #tpu.pipeline_mode<synchronous>, transform_indices = @transform_4, window_bounds = array<i64: 16, 1>}, {transform_indices = @transform_5, window_bounds = array<i64: 1, 8, 256>}]} {
    %c0 = arith.constant 0 : index
    %c0_0 = arith.constant 0 : index
    %0 = vector.load %arg4[%c0, %c0_0] : memref<160x32xf32, #tpu.memory_space<vmem>>, vector<32x32xf32>
    %1 = vector.extract_strided_slice %0 {offsets = [0, 0], sizes = [32, 8], strides = [1, 1]} : vector<32x32xf32> to vector<32x8xf32>
    %2 = arith.truncf %1 : vector<32x8xf32> to vector<32x8xbf16>
    %c32 = arith.constant 32 : index
    %c0_1 = arith.constant 0 : index
    %3 = vector.load %arg4[%c32, %c0_1] : memref<160x32xf32, #tpu.memory_space<vmem>>, vector<32x32xf32>
    %4 = arith.truncf %3 : vector<32x32xf32> to vector<32x32xbf16>
    %c64 = arith.constant 64 : index
    %c0_2 = arith.constant 0 : index
    %5 = vector.load %arg4[%c64, %c0_2] : memref<160x32xf32, #tpu.memory_space<vmem>>, vector<16x32xf32>
    %6 = arith.truncf %5 : vector<16x32xf32> to vector<16x32xbf16>
    %c80 = arith.constant 80 : index
    %c0_3 = arith.constant 0 : index
    %7 = vector.load %arg4[%c80, %c0_3] : memref<160x32xf32, #tpu.memory_space<vmem>>, vector<32x32xf32>
    %8 = vector.extract_strided_slice %7 {offsets = [0, 0], sizes = [32, 8], strides = [1, 1]} : vector<32x32xf32> to vector<32x8xf32>
    %9 = arith.truncf %8 : vector<32x8xf32> to vector<32x8xbf16>
    %c112 = arith.constant 112 : index
    %c0_4 = arith.constant 0 : index
    %10 = vector.load %arg4[%c112, %c0_4] : memref<160x32xf32, #tpu.memory_space<vmem>>, vector<32x32xf32>
    %11 = vector.extract_strided_slice %10 {offsets = [0, 0], sizes = [32, 8], strides = [1, 1]} : vector<32x32xf32> to vector<32x8xf32>
    %12 = arith.truncf %11 : vector<32x8xf32> to vector<32x8xbf16>
    %c144 = arith.constant 144 : index
    %c0_5 = arith.constant 0 : index
    %13 = vector.load %arg4[%c144, %c0_5] : memref<160x32xf32, #tpu.memory_space<vmem>>, vector<8x32xf32>
    %14 = arith.truncf %13 : vector<8x32xf32> to vector<8x32xbf16>
    %c152 = arith.constant 152 : index
    %c0_6 = arith.constant 0 : index
    %15 = vector.load %arg4[%c152, %c0_6] : memref<160x32xf32, #tpu.memory_space<vmem>>, vector<8x32xf32>
    %16 = vector.extract_strided_slice %15 {offsets = [0, 0], sizes = [8, 8], strides = [1, 1]} : vector<8x32xf32> to vector<8x8xf32>
    %17 = arith.truncf %16 : vector<8x8xf32> to vector<8x8xbf16>
    %c0_7 = arith.constant 0 : index
    %c0_8 = arith.constant 0 : index
    %18 = vector.load %arg5[%c0_7, %c0_8] : memref<16x1xf32, #tpu.memory_space<vmem>>, vector<8x1xf32>
    %c8 = arith.constant 8 : index
    %c0_9 = arith.constant 0 : index
    %19 = vector.load %arg5[%c8, %c0_9] : memref<16x1xf32, #tpu.memory_space<vmem>>, vector<8x1xf32>
    %c0_10 = arith.constant 0 : index
    %c0_11 = arith.constant 0 : index
    %c0_12 = arith.constant 0 : index
    %20 = vector.load %arg3[%c0_10, %c0_11, %c0_12] : memref<1x8x256xf32, #tpu.memory_space<vmem>>, vector<1x8x256xf32>
    %21 = vector.shape_cast %20 : vector<1x8x256xf32> to vector<8x256xf32>
    %c0_i32 = arith.constant 0 : i32
    %c4_i32 = arith.constant 4 : i32
    %22 = arith.muli %c4_i32, %c0_i32 : i32
    %23 = arith.index_cast %22 : i32 to index
    %24 = memref.load %arg1[%23] : memref<16xf32, #tpu.memory_space<smem>>
    %c4_i32_13 = arith.constant 4 : i32
    %25 = arith.muli %c4_i32_13, %c0_i32 : i32
    %c1_i32 = arith.constant 1 : i32
    %26 = arith.addi %25, %c1_i32 : i32
    %27 = arith.index_cast %26 : i32 to index
    %28 = memref.load %arg1[%27] : memref<16xf32, #tpu.memory_space<smem>>
    %c4_i32_14 = arith.constant 4 : i32
    %29 = arith.muli %c4_i32_14, %c0_i32 : i32
    %c2_i32 = arith.constant 2 : i32
    %30 = arith.addi %29, %c2_i32 : i32
    %31 = arith.index_cast %30 : i32 to index
    %32 = memref.load %arg1[%31] : memref<16xf32, #tpu.memory_space<smem>>
    %33 = arith.truncf %21 : vector<8x256xf32> to vector<8x256xbf16>
    %cst = arith.constant dense<0.000000e+00> : vector<32x256xf32>
    %34 = tpu.matmul %2, %33, %cst {dimension_numbers = #tpu.dot_dimension_numbers<[1], [0], [0], [1], [0, 0, 1, 1], [], []>} : vector<32x8xbf16>, vector<8x256xbf16>, vector<32x256xf32> -> vector<32x256xf32>
    %35 = arith.index_cast %c0_i32 : i32 to index
    %c0_15 = arith.constant 0 : index
    %c0_16 = arith.constant 0 : index
    %36 = vector.load %arg2[%35, %c0_15, %c0_16] : memref<4x32x256xf32, #tpu.memory_space<vmem>>, vector<1x32x256xf32>
    %37 = vector.shape_cast %36 : vector<1x32x256xf32> to vector<32x256xf32>
    %38 = arith.addf %34, %37 : vector<32x256xf32>
    %39 = arith.truncf %38 : vector<32x256xf32> to vector<32x256xbf16>
    %cst_17 = arith.constant dense<0.000000e+00> : vector<32x256xf32>
    %40 = tpu.matmul %4, %39, %cst_17 {dimension_numbers = #tpu.dot_dimension_numbers<[1], [0], [0], [1], [0, 0, 1, 1], [], []>} : vector<32x32xbf16>, vector<32x256xbf16>, vector<32x256xf32> -> vector<32x256xf32>
    %41 = arith.truncf %40 : vector<32x256xf32> to vector<32x256xbf16>
    %cst_18 = arith.constant dense<0.000000e+00> : vector<16x256xf32>
    %42 = tpu.matmul %6, %41, %cst_18 {dimension_numbers = #tpu.dot_dimension_numbers<[1], [0], [0], [1], [0, 0, 1, 1], [], []>} : vector<16x32xbf16>, vector<32x256xbf16>, vector<16x256xf32> -> vector<16x256xf32>
    %43 = vector.extract_strided_slice %42 {offsets = [0, 0], sizes = [8, 256], strides = [1, 1]} : vector<16x256xf32> to vector<8x256xf32>
    %cst_19 = arith.constant dense<0xFF800000> : vector<256xf32>
    %44 = vector.multi_reduction <maximumf>, %43, %cst_19 [0] : vector<8x256xf32> to vector<256xf32>
    %45 = vector.shape_cast %44 : vector<256xf32> to vector<1x256xf32>
    %46 = vector.broadcast %45 : vector<1x256xf32> to vector<8x256xf32>
    %47 = arith.subf %43, %46 : vector<8x256xf32>
    %48 = math.exp %47 : vector<8x256xf32>
    %cst_20 = arith.constant dense<0.000000e+00> : vector<256xf32>
    %49 = vector.multi_reduction <add>, %48, %cst_20 [0] : vector<8x256xf32> to vector<256xf32>
    %50 = vector.shape_cast %49 : vector<256xf32> to vector<1x256xf32>
    %51 = tpu.reciprocal %50 {approx = true} : vector<1x256xf32> -> vector<1x256xf32>
    %52 = vector.broadcast %51 : vector<1x256xf32> to vector<8x256xf32>
    %53 = arith.mulf %48, %52 : vector<8x256xf32>
    %54 = arith.truncf %53 : vector<8x256xf32> to vector<8x256xbf16>
    %55 = vector.extract_strided_slice %42 {offsets = [8, 0], sizes = [8, 256], strides = [1, 1]} : vector<16x256xf32> to vector<8x256xf32>
    %cst_21 = arith.constant dense<0xFF800000> : vector<256xf32>
    %56 = vector.multi_reduction <maximumf>, %55, %cst_21 [0] : vector<8x256xf32> to vector<256xf32>
    %57 = vector.shape_cast %56 : vector<256xf32> to vector<1x256xf32>
    %58 = vector.broadcast %57 : vector<1x256xf32> to vector<8x256xf32>
    %59 = arith.subf %55, %58 : vector<8x256xf32>
    %60 = math.exp %59 : vector<8x256xf32>
    %cst_22 = arith.constant dense<0.000000e+00> : vector<256xf32>
    %61 = vector.multi_reduction <add>, %60, %cst_22 [0] : vector<8x256xf32> to vector<256xf32>
    %62 = vector.shape_cast %61 : vector<256xf32> to vector<1x256xf32>
    %63 = tpu.reciprocal %62 {approx = true} : vector<1x256xf32> -> vector<1x256xf32>
    %64 = vector.broadcast %63 : vector<1x256xf32> to vector<8x256xf32>
    %65 = arith.mulf %60, %64 : vector<8x256xf32>
    %66 = arith.truncf %65 : vector<8x256xf32> to vector<8x256xbf16>
    %cst_23 = arith.constant dense<0.000000e+00> : vector<32x256xf32>
    %67 = tpu.matmul %9, %54, %cst_23 {dimension_numbers = #tpu.dot_dimension_numbers<[1], [0], [0], [1], [0, 0, 1, 1], [], []>} : vector<32x8xbf16>, vector<8x256xbf16>, vector<32x256xf32> -> vector<32x256xf32>
    %68 = arith.addf %38, %67 : vector<32x256xf32>
    %69 = arith.mulf %68, %68 : vector<32x256xf32>
    %70 = arith.mulf %68, %69 : vector<32x256xf32>
    %cst_24 = arith.constant 4.471500e-02 : f32
    %71 = vector.broadcast %cst_24 : f32 to vector<32x256xf32>
    %72 = arith.mulf %71, %70 : vector<32x256xf32>
    %73 = arith.addf %68, %72 : vector<32x256xf32>
    %cst_25 = arith.constant 0.797884583 : f32
    %74 = vector.broadcast %cst_25 : f32 to vector<32x256xf32>
    %75 = arith.mulf %74, %73 : vector<32x256xf32>
    %76 = math.tanh %75 : vector<32x256xf32>
    %cst_26 = arith.constant 1.000000e+00 : f32
    %77 = vector.broadcast %cst_26 : f32 to vector<32x256xf32>
    %78 = arith.addf %77, %76 : vector<32x256xf32>
    %cst_27 = arith.constant 5.000000e-01 : f32
    %79 = vector.broadcast %cst_27 : f32 to vector<32x256xf32>
    %80 = arith.mulf %79, %78 : vector<32x256xf32>
    %81 = arith.mulf %68, %80 : vector<32x256xf32>
    %82 = arith.truncf %81 : vector<32x256xf32> to vector<32x256xbf16>
    %cst_28 = arith.constant dense<0.000000e+00> : vector<32x256xf32>
    %83 = tpu.matmul %12, %66, %cst_28 {dimension_numbers = #tpu.dot_dimension_numbers<[1], [0], [0], [1], [0, 0, 1, 1], [], []>} : vector<32x8xbf16>, vector<8x256xbf16>, vector<32x256xf32> -> vector<32x256xf32>
    %84 = arith.addf %38, %83 : vector<32x256xf32>
    %85 = arith.mulf %84, %84 : vector<32x256xf32>
    %86 = arith.mulf %84, %85 : vector<32x256xf32>
    %cst_29 = arith.constant 4.471500e-02 : f32
    %87 = vector.broadcast %cst_29 : f32 to vector<32x256xf32>
    %88 = arith.mulf %87, %86 : vector<32x256xf32>
    %89 = arith.addf %84, %88 : vector<32x256xf32>
    %cst_30 = arith.constant 0.797884583 : f32
    %90 = vector.broadcast %cst_30 : f32 to vector<32x256xf32>
    %91 = arith.mulf %90, %89 : vector<32x256xf32>
    %92 = math.tanh %91 : vector<32x256xf32>
    %cst_31 = arith.constant 1.000000e+00 : f32
    %93 = vector.broadcast %cst_31 : f32 to vector<32x256xf32>
    %94 = arith.addf %93, %92 : vector<32x256xf32>
    %cst_32 = arith.constant 5.000000e-01 : f32
    %95 = vector.broadcast %cst_32 : f32 to vector<32x256xf32>
    %96 = arith.mulf %95, %94 : vector<32x256xf32>
    %97 = arith.mulf %84, %96 : vector<32x256xf32>
    %98 = arith.truncf %97 : vector<32x256xf32> to vector<32x256xbf16>
    %99 = tpu.concatenate %82, %98 in 1 : vector<32x256xbf16>, vector<32x256xbf16> -> vector<32x512xbf16>
    %cst_33 = arith.constant dense<0.000000e+00> : vector<8x512xf32>
    %100 = tpu.matmul %14, %99, %cst_33 {dimension_numbers = #tpu.dot_dimension_numbers<[1], [0], [0], [1], [0, 0, 1, 1], [], []>} : vector<8x32xbf16>, vector<32x512xbf16>, vector<8x512xf32> -> vector<8x512xf32>
    %101 = vector.broadcast %18 : vector<8x1xf32> to vector<8x512xf32>
    %102 = arith.addf %100, %101 : vector<8x512xf32>
    %103 = vector.extract_strided_slice %102 {offsets = [0, 0], sizes = [8, 256], strides = [1, 1]} : vector<8x512xf32> to vector<8x256xf32>
    %104 = vector.extract_strided_slice %102 {offsets = [0, 256], sizes = [8, 256], strides = [1, 1]} : vector<8x512xf32> to vector<8x256xf32>
    %105 = arith.subf %104, %103 : vector<8x256xf32>
    %106 = vector.broadcast %32 : f32 to vector<8x256xf32>
    %107 = arith.mulf %106, %105 : vector<8x256xf32>
    %108 = arith.addf %103, %107 : vector<8x256xf32>
    %109 = vector.broadcast %24 : f32 to vector<8x256xf32>
    %110 = arith.mulf %109, %21 : vector<8x256xf32>
    %111 = vector.broadcast %28 : f32 to vector<8x256xf32>
    %112 = arith.mulf %111, %108 : vector<8x256xf32>
    %113 = arith.addf %110, %112 : vector<8x256xf32>
    %c1_i32_34 = arith.constant 1 : i32
    %c4_i32_35 = arith.constant 4 : i32
    %114 = arith.muli %c4_i32_35, %c1_i32_34 : i32
    %115 = arith.index_cast %114 : i32 to index
    %116 = memref.load %arg1[%115] : memref<16xf32, #tpu.memory_space<smem>>
    %c4_i32_36 = arith.constant 4 : i32
    %117 = arith.muli %c4_i32_36, %c1_i32_34 : i32
    %c1_i32_37 = arith.constant 1 : i32
    %118 = arith.addi %117, %c1_i32_37 : i32
    %119 = arith.index_cast %118 : i32 to index
    %120 = memref.load %arg1[%119] : memref<16xf32, #tpu.memory_space<smem>>
    %c4_i32_38 = arith.constant 4 : i32
    %121 = arith.muli %c4_i32_38, %c1_i32_34 : i32
    %c2_i32_39 = arith.constant 2 : i32
    %122 = arith.addi %121, %c2_i32_39 : i32
    %123 = arith.index_cast %122 : i32 to index
    %124 = memref.load %arg1[%123] : memref<16xf32, #tpu.memory_space<smem>>
    %125 = arith.truncf %113 : vector<8x256xf32> to vector<8x256xbf16>
    %cst_40 = arith.constant dense<0.000000e+00> : vector<32x256xf32>
    %126 = tpu.matmul %2, %125, %cst_40 {dimension_numbers = #tpu.dot_dimension_numbers<[1], [0], [0], [1], [0, 0, 1, 1], [], []>} : vector<32x8xbf16>, vector<8x256xbf16>, vector<32x256xf32> -> vector<32x256xf32>
    %127 = arith.index_cast %c1_i32_34 : i32 to index
    %c0_41 = arith.constant 0 : index
    %c0_42 = arith.constant 0 : index
    %128 = vector.load %arg2[%127, %c0_41, %c0_42] : memref<4x32x256xf32, #tpu.memory_space<vmem>>, vector<1x32x256xf32>
    %129 = vector.shape_cast %128 : vector<1x32x256xf32> to vector<32x256xf32>
    %130 = arith.addf %126, %129 : vector<32x256xf32>
    %131 = arith.truncf %130 : vector<32x256xf32> to vector<32x256xbf16>
    %cst_43 = arith.constant dense<0.000000e+00> : vector<32x256xf32>
    %132 = tpu.matmul %4, %131, %cst_43 {dimension_numbers = #tpu.dot_dimension_numbers<[1], [0], [0], [1], [0, 0, 1, 1], [], []>} : vector<32x32xbf16>, vector<32x256xbf16>, vector<32x256xf32> -> vector<32x256xf32>
    %133 = arith.truncf %132 : vector<32x256xf32> to vector<32x256xbf16>
    %cst_44 = arith.constant dense<0.000000e+00> : vector<16x256xf32>
    %134 = tpu.matmul %6, %133, %cst_44 {dimension_numbers = #tpu.dot_dimension_numbers<[1], [0], [0], [1], [0, 0, 1, 1], [], []>} : vector<16x32xbf16>, vector<32x256xbf16>, vector<16x256xf32> -> vector<16x256xf32>
    %135 = vector.extract_strided_slice %134 {offsets = [0, 0], sizes = [8, 256], strides = [1, 1]} : vector<16x256xf32> to vector<8x256xf32>
    %cst_45 = arith.constant dense<0xFF800000> : vector<256xf32>
    %136 = vector.multi_reduction <maximumf>, %135, %cst_45 [0] : vector<8x256xf32> to vector<256xf32>
    %137 = vector.shape_cast %136 : vector<256xf32> to vector<1x256xf32>
    %138 = vector.broadcast %137 : vector<1x256xf32> to vector<8x256xf32>
    %139 = arith.subf %135, %138 : vector<8x256xf32>
    %140 = math.exp %139 : vector<8x256xf32>
    %cst_46 = arith.constant dense<0.000000e+00> : vector<256xf32>
    %141 = vector.multi_reduction <add>, %140, %cst_46 [0] : vector<8x256xf32> to vector<256xf32>
    %142 = vector.shape_cast %141 : vector<256xf32> to vector<1x256xf32>
    %143 = tpu.reciprocal %142 {approx = true} : vector<1x256xf32> -> vector<1x256xf32>
    %144 = vector.broadcast %143 : vector<1x256xf32> to vector<8x256xf32>
    %145 = arith.mulf %140, %144 : vector<8x256xf32>
    %146 = arith.truncf %145 : vector<8x256xf32> to vector<8x256xbf16>
    %147 = vector.extract_strided_slice %134 {offsets = [8, 0], sizes = [8, 256], strides = [1, 1]} : vector<16x256xf32> to vector<8x256xf32>
    %cst_47 = arith.constant dense<0xFF800000> : vector<256xf32>
    %148 = vector.multi_reduction <maximumf>, %147, %cst_47 [0] : vector<8x256xf32> to vector<256xf32>
    %149 = vector.shape_cast %148 : vector<256xf32> to vector<1x256xf32>
    %150 = vector.broadcast %149 : vector<1x256xf32> to vector<8x256xf32>
    %151 = arith.subf %147, %150 : vector<8x256xf32>
    %152 = math.exp %151 : vector<8x256xf32>
    %cst_48 = arith.constant dense<0.000000e+00> : vector<256xf32>
    %153 = vector.multi_reduction <add>, %152, %cst_48 [0] : vector<8x256xf32> to vector<256xf32>
    %154 = vector.shape_cast %153 : vector<256xf32> to vector<1x256xf32>
    %155 = tpu.reciprocal %154 {approx = true} : vector<1x256xf32> -> vector<1x256xf32>
    %156 = vector.broadcast %155 : vector<1x256xf32> to vector<8x256xf32>
    %157 = arith.mulf %152, %156 : vector<8x256xf32>
    %158 = arith.truncf %157 : vector<8x256xf32> to vector<8x256xbf16>
    %cst_49 = arith.constant dense<0.000000e+00> : vector<32x256xf32>
    %159 = tpu.matmul %9, %146, %cst_49 {dimension_numbers = #tpu.dot_dimension_numbers<[1], [0], [0], [1], [0, 0, 1, 1], [], []>} : vector<32x8xbf16>, vector<8x256xbf16>, vector<32x256xf32> -> vector<32x256xf32>
    %160 = arith.addf %130, %159 : vector<32x256xf32>
    %161 = arith.mulf %160, %160 : vector<32x256xf32>
    %162 = arith.mulf %160, %161 : vector<32x256xf32>
    %cst_50 = arith.constant 4.471500e-02 : f32
    %163 = vector.broadcast %cst_50 : f32 to vector<32x256xf32>
    %164 = arith.mulf %163, %162 : vector<32x256xf32>
    %165 = arith.addf %160, %164 : vector<32x256xf32>
    %cst_51 = arith.constant 0.797884583 : f32
    %166 = vector.broadcast %cst_51 : f32 to vector<32x256xf32>
    %167 = arith.mulf %166, %165 : vector<32x256xf32>
    %168 = math.tanh %167 : vector<32x256xf32>
    %cst_52 = arith.constant 1.000000e+00 : f32
    %169 = vector.broadcast %cst_52 : f32 to vector<32x256xf32>
    %170 = arith.addf %169, %168 : vector<32x256xf32>
    %cst_53 = arith.constant 5.000000e-01 : f32
    %171 = vector.broadcast %cst_53 : f32 to vector<32x256xf32>
    %172 = arith.mulf %171, %170 : vector<32x256xf32>
    %173 = arith.mulf %160, %172 : vector<32x256xf32>
    %174 = arith.truncf %173 : vector<32x256xf32> to vector<32x256xbf16>
    %cst_54 = arith.constant dense<0.000000e+00> : vector<32x256xf32>
    %175 = tpu.matmul %12, %158, %cst_54 {dimension_numbers = #tpu.dot_dimension_numbers<[1], [0], [0], [1], [0, 0, 1, 1], [], []>} : vector<32x8xbf16>, vector<8x256xbf16>, vector<32x256xf32> -> vector<32x256xf32>
    %176 = arith.addf %130, %175 : vector<32x256xf32>
    %177 = arith.mulf %176, %176 : vector<32x256xf32>
    %178 = arith.mulf %176, %177 : vector<32x256xf32>
    %cst_55 = arith.constant 4.471500e-02 : f32
    %179 = vector.broadcast %cst_55 : f32 to vector<32x256xf32>
    %180 = arith.mulf %179, %178 : vector<32x256xf32>
    %181 = arith.addf %176, %180 : vector<32x256xf32>
    %cst_56 = arith.constant 0.797884583 : f32
    %182 = vector.broadcast %cst_56 : f32 to vector<32x256xf32>
    %183 = arith.mulf %182, %181 : vector<32x256xf32>
    %184 = math.tanh %183 : vector<32x256xf32>
    %cst_57 = arith.constant 1.000000e+00 : f32
    %185 = vector.broadcast %cst_57 : f32 to vector<32x256xf32>
    %186 = arith.addf %185, %184 : vector<32x256xf32>
    %cst_58 = arith.constant 5.000000e-01 : f32
    %187 = vector.broadcast %cst_58 : f32 to vector<32x256xf32>
    %188 = arith.mulf %187, %186 : vector<32x256xf32>
    %189 = arith.mulf %176, %188 : vector<32x256xf32>
    %190 = arith.truncf %189 : vector<32x256xf32> to vector<32x256xbf16>
    %191 = tpu.concatenate %174, %190 in 1 : vector<32x256xbf16>, vector<32x256xbf16> -> vector<32x512xbf16>
    %cst_59 = arith.constant dense<0.000000e+00> : vector<8x512xf32>
    %192 = tpu.matmul %14, %191, %cst_59 {dimension_numbers = #tpu.dot_dimension_numbers<[1], [0], [0], [1], [0, 0, 1, 1], [], []>} : vector<8x32xbf16>, vector<32x512xbf16>, vector<8x512xf32> -> vector<8x512xf32>
    %193 = vector.broadcast %18 : vector<8x1xf32> to vector<8x512xf32>
    %194 = arith.addf %192, %193 : vector<8x512xf32>
    %195 = vector.extract_strided_slice %194 {offsets = [0, 0], sizes = [8, 256], strides = [1, 1]} : vector<8x512xf32> to vector<8x256xf32>
    %196 = vector.extract_strided_slice %194 {offsets = [0, 256], sizes = [8, 256], strides = [1, 1]} : vector<8x512xf32> to vector<8x256xf32>
    %197 = arith.subf %196, %195 : vector<8x256xf32>
    %198 = vector.broadcast %124 : f32 to vector<8x256xf32>
    %199 = arith.mulf %198, %197 : vector<8x256xf32>
    %200 = arith.addf %195, %199 : vector<8x256xf32>
    %201 = vector.broadcast %116 : f32 to vector<8x256xf32>
    %202 = arith.mulf %201, %113 : vector<8x256xf32>
    %203 = vector.broadcast %120 : f32 to vector<8x256xf32>
    %204 = arith.mulf %203, %200 : vector<8x256xf32>
    %205 = arith.addf %202, %204 : vector<8x256xf32>
    %c2_i32_60 = arith.constant 2 : i32
    %c4_i32_61 = arith.constant 4 : i32
    %206 = arith.muli %c4_i32_61, %c2_i32_60 : i32
    %207 = arith.index_cast %206 : i32 to index
    %208 = memref.load %arg1[%207] : memref<16xf32, #tpu.memory_space<smem>>
    %c4_i32_62 = arith.constant 4 : i32
    %209 = arith.muli %c4_i32_62, %c2_i32_60 : i32
    %c1_i32_63 = arith.constant 1 : i32
    %210 = arith.addi %209, %c1_i32_63 : i32
    %211 = arith.index_cast %210 : i32 to index
    %212 = memref.load %arg1[%211] : memref<16xf32, #tpu.memory_space<smem>>
    %c4_i32_64 = arith.constant 4 : i32
    %213 = arith.muli %c4_i32_64, %c2_i32_60 : i32
    %c2_i32_65 = arith.constant 2 : i32
    %214 = arith.addi %213, %c2_i32_65 : i32
    %215 = arith.index_cast %214 : i32 to index
    %216 = memref.load %arg1[%215] : memref<16xf32, #tpu.memory_space<smem>>
    %217 = arith.truncf %205 : vector<8x256xf32> to vector<8x256xbf16>
    %cst_66 = arith.constant dense<0.000000e+00> : vector<32x256xf32>
    %218 = tpu.matmul %2, %217, %cst_66 {dimension_numbers = #tpu.dot_dimension_numbers<[1], [0], [0], [1], [0, 0, 1, 1], [], []>} : vector<32x8xbf16>, vector<8x256xbf16>, vector<32x256xf32> -> vector<32x256xf32>
    %219 = arith.index_cast %c2_i32_60 : i32 to index
    %c0_67 = arith.constant 0 : index
    %c0_68 = arith.constant 0 : index
    %220 = vector.load %arg2[%219, %c0_67, %c0_68] : memref<4x32x256xf32, #tpu.memory_space<vmem>>, vector<1x32x256xf32>
    %221 = vector.shape_cast %220 : vector<1x32x256xf32> to vector<32x256xf32>
    %222 = arith.addf %218, %221 : vector<32x256xf32>
    %223 = arith.truncf %222 : vector<32x256xf32> to vector<32x256xbf16>
    %cst_69 = arith.constant dense<0.000000e+00> : vector<32x256xf32>
    %224 = tpu.matmul %4, %223, %cst_69 {dimension_numbers = #tpu.dot_dimension_numbers<[1], [0], [0], [1], [0, 0, 1, 1], [], []>} : vector<32x32xbf16>, vector<32x256xbf16>, vector<32x256xf32> -> vector<32x256xf32>
    %225 = arith.truncf %224 : vector<32x256xf32> to vector<32x256xbf16>
    %cst_70 = arith.constant dense<0.000000e+00> : vector<16x256xf32>
    %226 = tpu.matmul %6, %225, %cst_70 {dimension_numbers = #tpu.dot_dimension_numbers<[1], [0], [0], [1], [0, 0, 1, 1], [], []>} : vector<16x32xbf16>, vector<32x256xbf16>, vector<16x256xf32> -> vector<16x256xf32>
    %227 = vector.extract_strided_slice %226 {offsets = [0, 0], sizes = [8, 256], strides = [1, 1]} : vector<16x256xf32> to vector<8x256xf32>
    %cst_71 = arith.constant dense<0xFF800000> : vector<256xf32>
    %228 = vector.multi_reduction <maximumf>, %227, %cst_71 [0] : vector<8x256xf32> to vector<256xf32>
    %229 = vector.shape_cast %228 : vector<256xf32> to vector<1x256xf32>
    %230 = vector.broadcast %229 : vector<1x256xf32> to vector<8x256xf32>
    %231 = arith.subf %227, %230 : vector<8x256xf32>
    %232 = math.exp %231 : vector<8x256xf32>
    %cst_72 = arith.constant dense<0.000000e+00> : vector<256xf32>
    %233 = vector.multi_reduction <add>, %232, %cst_72 [0] : vector<8x256xf32> to vector<256xf32>
    %234 = vector.shape_cast %233 : vector<256xf32> to vector<1x256xf32>
    %235 = tpu.reciprocal %234 {approx = true} : vector<1x256xf32> -> vector<1x256xf32>
    %236 = vector.broadcast %235 : vector<1x256xf32> to vector<8x256xf32>
    %237 = arith.mulf %232, %236 : vector<8x256xf32>
    %238 = arith.truncf %237 : vector<8x256xf32> to vector<8x256xbf16>
    %239 = vector.extract_strided_slice %226 {offsets = [8, 0], sizes = [8, 256], strides = [1, 1]} : vector<16x256xf32> to vector<8x256xf32>
    %cst_73 = arith.constant dense<0xFF800000> : vector<256xf32>
    %240 = vector.multi_reduction <maximumf>, %239, %cst_73 [0] : vector<8x256xf32> to vector<256xf32>
    %241 = vector.shape_cast %240 : vector<256xf32> to vector<1x256xf32>
    %242 = vector.broadcast %241 : vector<1x256xf32> to vector<8x256xf32>
    %243 = arith.subf %239, %242 : vector<8x256xf32>
    %244 = math.exp %243 : vector<8x256xf32>
    %cst_74 = arith.constant dense<0.000000e+00> : vector<256xf32>
    %245 = vector.multi_reduction <add>, %244, %cst_74 [0] : vector<8x256xf32> to vector<256xf32>
    %246 = vector.shape_cast %245 : vector<256xf32> to vector<1x256xf32>
    %247 = tpu.reciprocal %246 {approx = true} : vector<1x256xf32> -> vector<1x256xf32>
    %248 = vector.broadcast %247 : vector<1x256xf32> to vector<8x256xf32>
    %249 = arith.mulf %244, %248 : vector<8x256xf32>
    %250 = arith.truncf %249 : vector<8x256xf32> to vector<8x256xbf16>
    %cst_75 = arith.constant dense<0.000000e+00> : vector<32x256xf32>
    %251 = tpu.matmul %9, %238, %cst_75 {dimension_numbers = #tpu.dot_dimension_numbers<[1], [0], [0], [1], [0, 0, 1, 1], [], []>} : vector<32x8xbf16>, vector<8x256xbf16>, vector<32x256xf32> -> vector<32x256xf32>
    %252 = arith.addf %222, %251 : vector<32x256xf32>
    %253 = arith.mulf %252, %252 : vector<32x256xf32>
    %254 = arith.mulf %252, %253 : vector<32x256xf32>
    %cst_76 = arith.constant 4.471500e-02 : f32
    %255 = vector.broadcast %cst_76 : f32 to vector<32x256xf32>
    %256 = arith.mulf %255, %254 : vector<32x256xf32>
    %257 = arith.addf %252, %256 : vector<32x256xf32>
    %cst_77 = arith.constant 0.797884583 : f32
    %258 = vector.broadcast %cst_77 : f32 to vector<32x256xf32>
    %259 = arith.mulf %258, %257 : vector<32x256xf32>
    %260 = math.tanh %259 : vector<32x256xf32>
    %cst_78 = arith.constant 1.000000e+00 : f32
    %261 = vector.broadcast %cst_78 : f32 to vector<32x256xf32>
    %262 = arith.addf %261, %260 : vector<32x256xf32>
    %cst_79 = arith.constant 5.000000e-01 : f32
    %263 = vector.broadcast %cst_79 : f32 to vector<32x256xf32>
    %264 = arith.mulf %263, %262 : vector<32x256xf32>
    %265 = arith.mulf %252, %264 : vector<32x256xf32>
    %266 = arith.truncf %265 : vector<32x256xf32> to vector<32x256xbf16>
    %cst_80 = arith.constant dense<0.000000e+00> : vector<32x256xf32>
    %267 = tpu.matmul %12, %250, %cst_80 {dimension_numbers = #tpu.dot_dimension_numbers<[1], [0], [0], [1], [0, 0, 1, 1], [], []>} : vector<32x8xbf16>, vector<8x256xbf16>, vector<32x256xf32> -> vector<32x256xf32>
    %268 = arith.addf %222, %267 : vector<32x256xf32>
    %269 = arith.mulf %268, %268 : vector<32x256xf32>
    %270 = arith.mulf %268, %269 : vector<32x256xf32>
    %cst_81 = arith.constant 4.471500e-02 : f32
    %271 = vector.broadcast %cst_81 : f32 to vector<32x256xf32>
    %272 = arith.mulf %271, %270 : vector<32x256xf32>
    %273 = arith.addf %268, %272 : vector<32x256xf32>
    %cst_82 = arith.constant 0.797884583 : f32
    %274 = vector.broadcast %cst_82 : f32 to vector<32x256xf32>
    %275 = arith.mulf %274, %273 : vector<32x256xf32>
    %276 = math.tanh %275 : vector<32x256xf32>
    %cst_83 = arith.constant 1.000000e+00 : f32
    %277 = vector.broadcast %cst_83 : f32 to vector<32x256xf32>
    %278 = arith.addf %277, %276 : vector<32x256xf32>
    %cst_84 = arith.constant 5.000000e-01 : f32
    %279 = vector.broadcast %cst_84 : f32 to vector<32x256xf32>
    %280 = arith.mulf %279, %278 : vector<32x256xf32>
    %281 = arith.mulf %268, %280 : vector<32x256xf32>
    %282 = arith.truncf %281 : vector<32x256xf32> to vector<32x256xbf16>
    %283 = tpu.concatenate %266, %282 in 1 : vector<32x256xbf16>, vector<32x256xbf16> -> vector<32x512xbf16>
    %cst_85 = arith.constant dense<0.000000e+00> : vector<8x512xf32>
    %284 = tpu.matmul %14, %283, %cst_85 {dimension_numbers = #tpu.dot_dimension_numbers<[1], [0], [0], [1], [0, 0, 1, 1], [], []>} : vector<8x32xbf16>, vector<32x512xbf16>, vector<8x512xf32> -> vector<8x512xf32>
    %285 = vector.broadcast %18 : vector<8x1xf32> to vector<8x512xf32>
    %286 = arith.addf %284, %285 : vector<8x512xf32>
    %287 = vector.extract_strided_slice %286 {offsets = [0, 0], sizes = [8, 256], strides = [1, 1]} : vector<8x512xf32> to vector<8x256xf32>
    %288 = vector.extract_strided_slice %286 {offsets = [0, 256], sizes = [8, 256], strides = [1, 1]} : vector<8x512xf32> to vector<8x256xf32>
    %289 = arith.subf %288, %287 : vector<8x256xf32>
    %290 = vector.broadcast %216 : f32 to vector<8x256xf32>
    %291 = arith.mulf %290, %289 : vector<8x256xf32>
    %292 = arith.addf %287, %291 : vector<8x256xf32>
    %293 = vector.broadcast %208 : f32 to vector<8x256xf32>
    %294 = arith.mulf %293, %205 : vector<8x256xf32>
    %295 = vector.broadcast %212 : f32 to vector<8x256xf32>
    %296 = arith.mulf %295, %292 : vector<8x256xf32>
    %297 = arith.addf %294, %296 : vector<8x256xf32>
    %c3_i32 = arith.constant 3 : i32
    %c4_i32_86 = arith.constant 4 : i32
    %298 = arith.muli %c4_i32_86, %c3_i32 : i32
    %299 = arith.index_cast %298 : i32 to index
    %300 = memref.load %arg1[%299] : memref<16xf32, #tpu.memory_space<smem>>
    %c4_i32_87 = arith.constant 4 : i32
    %301 = arith.muli %c4_i32_87, %c3_i32 : i32
    %c1_i32_88 = arith.constant 1 : i32
    %302 = arith.addi %301, %c1_i32_88 : i32
    %303 = arith.index_cast %302 : i32 to index
    %304 = memref.load %arg1[%303] : memref<16xf32, #tpu.memory_space<smem>>
    %c4_i32_89 = arith.constant 4 : i32
    %305 = arith.muli %c4_i32_89, %c3_i32 : i32
    %c2_i32_90 = arith.constant 2 : i32
    %306 = arith.addi %305, %c2_i32_90 : i32
    %307 = arith.index_cast %306 : i32 to index
    %308 = memref.load %arg1[%307] : memref<16xf32, #tpu.memory_space<smem>>
    %309 = arith.truncf %297 : vector<8x256xf32> to vector<8x256xbf16>
    %cst_91 = arith.constant dense<0.000000e+00> : vector<32x256xf32>
    %310 = tpu.matmul %2, %309, %cst_91 {dimension_numbers = #tpu.dot_dimension_numbers<[1], [0], [0], [1], [0, 0, 1, 1], [], []>} : vector<32x8xbf16>, vector<8x256xbf16>, vector<32x256xf32> -> vector<32x256xf32>
    %311 = arith.index_cast %c3_i32 : i32 to index
    %c0_92 = arith.constant 0 : index
    %c0_93 = arith.constant 0 : index
    %312 = vector.load %arg2[%311, %c0_92, %c0_93] : memref<4x32x256xf32, #tpu.memory_space<vmem>>, vector<1x32x256xf32>
    %313 = vector.shape_cast %312 : vector<1x32x256xf32> to vector<32x256xf32>
    %314 = arith.addf %310, %313 : vector<32x256xf32>
    %315 = arith.truncf %314 : vector<32x256xf32> to vector<32x256xbf16>
    %cst_94 = arith.constant dense<0.000000e+00> : vector<32x256xf32>
    %316 = tpu.matmul %4, %315, %cst_94 {dimension_numbers = #tpu.dot_dimension_numbers<[1], [0], [0], [1], [0, 0, 1, 1], [], []>} : vector<32x32xbf16>, vector<32x256xbf16>, vector<32x256xf32> -> vector<32x256xf32>
    %317 = arith.truncf %316 : vector<32x256xf32> to vector<32x256xbf16>
    %cst_95 = arith.constant dense<0.000000e+00> : vector<16x256xf32>
    %318 = tpu.matmul %6, %317, %cst_95 {dimension_numbers = #tpu.dot_dimension_numbers<[1], [0], [0], [1], [0, 0, 1, 1], [], []>} : vector<16x32xbf16>, vector<32x256xbf16>, vector<16x256xf32> -> vector<16x256xf32>
    %319 = vector.extract_strided_slice %318 {offsets = [0, 0], sizes = [8, 256], strides = [1, 1]} : vector<16x256xf32> to vector<8x256xf32>
    %cst_96 = arith.constant dense<0xFF800000> : vector<256xf32>
    %320 = vector.multi_reduction <maximumf>, %319, %cst_96 [0] : vector<8x256xf32> to vector<256xf32>
    %321 = vector.shape_cast %320 : vector<256xf32> to vector<1x256xf32>
    %322 = vector.broadcast %321 : vector<1x256xf32> to vector<8x256xf32>
    %323 = arith.subf %319, %322 : vector<8x256xf32>
    %324 = math.exp %323 : vector<8x256xf32>
    %cst_97 = arith.constant dense<0.000000e+00> : vector<256xf32>
    %325 = vector.multi_reduction <add>, %324, %cst_97 [0] : vector<8x256xf32> to vector<256xf32>
    %326 = vector.shape_cast %325 : vector<256xf32> to vector<1x256xf32>
    %327 = tpu.reciprocal %326 {approx = true} : vector<1x256xf32> -> vector<1x256xf32>
    %328 = vector.broadcast %327 : vector<1x256xf32> to vector<8x256xf32>
    %329 = arith.mulf %324, %328 : vector<8x256xf32>
    %330 = arith.truncf %329 : vector<8x256xf32> to vector<8x256xbf16>
    %331 = vector.extract_strided_slice %318 {offsets = [8, 0], sizes = [8, 256], strides = [1, 1]} : vector<16x256xf32> to vector<8x256xf32>
    %cst_98 = arith.constant dense<0xFF800000> : vector<256xf32>
    %332 = vector.multi_reduction <maximumf>, %331, %cst_98 [0] : vector<8x256xf32> to vector<256xf32>
    %333 = vector.shape_cast %332 : vector<256xf32> to vector<1x256xf32>
    %334 = vector.broadcast %333 : vector<1x256xf32> to vector<8x256xf32>
    %335 = arith.subf %331, %334 : vector<8x256xf32>
    %336 = math.exp %335 : vector<8x256xf32>
    %cst_99 = arith.constant dense<0.000000e+00> : vector<256xf32>
    %337 = vector.multi_reduction <add>, %336, %cst_99 [0] : vector<8x256xf32> to vector<256xf32>
    %338 = vector.shape_cast %337 : vector<256xf32> to vector<1x256xf32>
    %339 = tpu.reciprocal %338 {approx = true} : vector<1x256xf32> -> vector<1x256xf32>
    %340 = vector.broadcast %339 : vector<1x256xf32> to vector<8x256xf32>
    %341 = arith.mulf %336, %340 : vector<8x256xf32>
    %342 = arith.truncf %341 : vector<8x256xf32> to vector<8x256xbf16>
    %cst_100 = arith.constant dense<0.000000e+00> : vector<32x256xf32>
    %343 = tpu.matmul %9, %330, %cst_100 {dimension_numbers = #tpu.dot_dimension_numbers<[1], [0], [0], [1], [0, 0, 1, 1], [], []>} : vector<32x8xbf16>, vector<8x256xbf16>, vector<32x256xf32> -> vector<32x256xf32>
    %344 = arith.addf %314, %343 : vector<32x256xf32>
    %345 = arith.mulf %344, %344 : vector<32x256xf32>
    %346 = arith.mulf %344, %345 : vector<32x256xf32>
    %cst_101 = arith.constant 4.471500e-02 : f32
    %347 = vector.broadcast %cst_101 : f32 to vector<32x256xf32>
    %348 = arith.mulf %347, %346 : vector<32x256xf32>
    %349 = arith.addf %344, %348 : vector<32x256xf32>
    %cst_102 = arith.constant 0.797884583 : f32
    %350 = vector.broadcast %cst_102 : f32 to vector<32x256xf32>
    %351 = arith.mulf %350, %349 : vector<32x256xf32>
    %352 = math.tanh %351 : vector<32x256xf32>
    %cst_103 = arith.constant 1.000000e+00 : f32
    %353 = vector.broadcast %cst_103 : f32 to vector<32x256xf32>
    %354 = arith.addf %353, %352 : vector<32x256xf32>
    %cst_104 = arith.constant 5.000000e-01 : f32
    %355 = vector.broadcast %cst_104 : f32 to vector<32x256xf32>
    %356 = arith.mulf %355, %354 : vector<32x256xf32>
    %357 = arith.mulf %344, %356 : vector<32x256xf32>
    %358 = arith.truncf %357 : vector<32x256xf32> to vector<32x256xbf16>
    %cst_105 = arith.constant dense<0.000000e+00> : vector<32x256xf32>
    %359 = tpu.matmul %12, %342, %cst_105 {dimension_numbers = #tpu.dot_dimension_numbers<[1], [0], [0], [1], [0, 0, 1, 1], [], []>} : vector<32x8xbf16>, vector<8x256xbf16>, vector<32x256xf32> -> vector<32x256xf32>
    %360 = arith.addf %314, %359 : vector<32x256xf32>
    %361 = arith.mulf %360, %360 : vector<32x256xf32>
    %362 = arith.mulf %360, %361 : vector<32x256xf32>
    %cst_106 = arith.constant 4.471500e-02 : f32
    %363 = vector.broadcast %cst_106 : f32 to vector<32x256xf32>
    %364 = arith.mulf %363, %362 : vector<32x256xf32>
    %365 = arith.addf %360, %364 : vector<32x256xf32>
    %cst_107 = arith.constant 0.797884583 : f32
    %366 = vector.broadcast %cst_107 : f32 to vector<32x256xf32>
    %367 = arith.mulf %366, %365 : vector<32x256xf32>
    %368 = math.tanh %367 : vector<32x256xf32>
    %cst_108 = arith.constant 1.000000e+00 : f32
    %369 = vector.broadcast %cst_108 : f32 to vector<32x256xf32>
    %370 = arith.addf %369, %368 : vector<32x256xf32>
    %cst_109 = arith.constant 5.000000e-01 : f32
    %371 = vector.broadcast %cst_109 : f32 to vector<32x256xf32>
    %372 = arith.mulf %371, %370 : vector<32x256xf32>
    %373 = arith.mulf %360, %372 : vector<32x256xf32>
    %374 = arith.truncf %373 : vector<32x256xf32> to vector<32x256xbf16>
    %375 = tpu.concatenate %358, %374 in 1 : vector<32x256xbf16>, vector<32x256xbf16> -> vector<32x512xbf16>
    %cst_110 = arith.constant dense<0.000000e+00> : vector<8x512xf32>
    %376 = tpu.matmul %14, %375, %cst_110 {dimension_numbers = #tpu.dot_dimension_numbers<[1], [0], [0], [1], [0, 0, 1, 1], [], []>} : vector<8x32xbf16>, vector<32x512xbf16>, vector<8x512xf32> -> vector<8x512xf32>
    %377 = vector.broadcast %18 : vector<8x1xf32> to vector<8x512xf32>
    %378 = arith.addf %376, %377 : vector<8x512xf32>
    %379 = vector.extract_strided_slice %378 {offsets = [0, 0], sizes = [8, 256], strides = [1, 1]} : vector<8x512xf32> to vector<8x256xf32>
    %380 = vector.extract_strided_slice %378 {offsets = [0, 256], sizes = [8, 256], strides = [1, 1]} : vector<8x512xf32> to vector<8x256xf32>
    %381 = arith.subf %380, %379 : vector<8x256xf32>
    %382 = vector.broadcast %308 : f32 to vector<8x256xf32>
    %383 = arith.mulf %382, %381 : vector<8x256xf32>
    %384 = arith.addf %379, %383 : vector<8x256xf32>
    %385 = vector.broadcast %300 : f32 to vector<8x256xf32>
    %386 = arith.mulf %385, %297 : vector<8x256xf32>
    %387 = vector.broadcast %304 : f32 to vector<8x256xf32>
    %388 = arith.mulf %387, %384 : vector<8x256xf32>
    %389 = arith.addf %386, %388 : vector<8x256xf32>
    %c4_i32_111 = arith.constant 4 : i32
    %390 = arith.truncf %389 : vector<8x256xf32> to vector<8x256xbf16>
    %cst_112 = arith.constant dense<0.000000e+00> : vector<8x256xf32>
    %391 = tpu.matmul %17, %390, %cst_112 {dimension_numbers = #tpu.dot_dimension_numbers<[1], [0], [0], [1], [0, 0, 1, 1], [], []>} : vector<8x8xbf16>, vector<8x256xbf16>, vector<8x256xf32> -> vector<8x256xf32>
    %392 = vector.broadcast %19 : vector<8x1xf32> to vector<8x256xf32>
    %393 = arith.addf %391, %392 : vector<8x256xf32>
    %cst_113 = arith.constant 5.000000e-01 : f32
    %394 = vector.broadcast %cst_113 : f32 to vector<8x256xf32>
    %395 = arith.mulf %393, %394 : vector<8x256xf32>
    %cst_114 = arith.constant 5.000000e-01 : f32
    %396 = vector.broadcast %cst_114 : f32 to vector<8x256xf32>
    %397 = arith.addf %395, %396 : vector<8x256xf32>
    %cst_115 = arith.constant 0.000000e+00 : f32
    %cst_116 = arith.constant 1.000000e+00 : f32
    %398 = vector.broadcast %cst_115 : f32 to vector<8x256xf32>
    %399 = arith.maximumf %398, %397 : vector<8x256xf32>
    %400 = vector.broadcast %cst_116 : f32 to vector<8x256xf32>
    %401 = arith.minimumf %400, %399 : vector<8x256xf32>
    %c0_117 = arith.constant 0 : index
    %c0_118 = arith.constant 0 : index
    %c0_119 = arith.constant 0 : index
    %402 = vector.load %arg6[%c0_117, %c0_118, %c0_119] : memref<1x8x256xf32, #tpu.memory_space<vmem>>, vector<1x8x256xf32>
    %403 = vector.shape_cast %402 : vector<1x8x256xf32> to vector<8x256xf32>
    %404 = vector.shape_cast %401 : vector<8x256xf32> to vector<1x8x256xf32>
    tpu.vector_store %arg6[%c0_117, %c0_118, %c0_119], %404 {strides = array<i32>} : memref<1x8x256xf32, #tpu.memory_space<vmem>>, vector<1x8x256xf32>,
    return
  }
  func.func @transform_0(%arg0: i32) -> i32 {
    %c0_i32 = arith.constant 0 : i32
    %c0_i32_0 = arith.constant 0 : i32
    return %c0_i32 : i32
  }
  func.func @transform_1(%arg0: i32) -> (i32, i32, i32) {
    %c0_i32 = arith.constant 0 : i32
    %c0_i32_0 = arith.constant 0 : i32
    %c0_i32_1 = arith.constant 0 : i32
    %c0_i32_2 = arith.constant 0 : i32
    return %c0_i32, %c0_i32_0, %c0_i32_1 : i32, i32, i32
  }
  func.func @transform_2(%arg0: i32) -> (i32, i32, i32) {
    %c0_i32 = arith.constant 0 : i32
    %c0_i32_0 = arith.constant 0 : i32
    %c0_i32_1 = arith.constant 0 : i32
    return %arg0, %c0_i32, %c0_i32_0 : i32, i32, i32
  }
  func.func @transform_3(%arg0: i32) -> (i32, i32) {
    %c0_i32 = arith.constant 0 : i32
    %c0_i32_0 = arith.constant 0 : i32
    %c0_i32_1 = arith.constant 0 : i32
    return %c0_i32, %c0_i32_0 : i32, i32
  }
  func.func @transform_4(%arg0: i32) -> (i32, i32) {
    %c0_i32 = arith.constant 0 : i32
    %c0_i32_0 = arith.constant 0 : i32
    %c0_i32_1 = arith.constant 0 : i32
    return %c0_i32, %c0_i32_0 : i32, i32
  }
  func.func @transform_5(%arg0: i32) -> (i32, i32, i32) {
    %c0_i32 = arith.constant 0 : i32
    %c0_i32_0 = arith.constant 0 : i32
    %c0_i32_1 = arith.constant 0 : i32
    return %arg0, %c0_i32, %c0_i32_0 : i32, i32, i32
  }
}

</mosaic_0001>

<llo_original>
// kernel: _forward_core.1
$region0: #{_forward_core.1}
  #allocation0 [shape = 'u32[]', space=smem, size = 0x4, offset = 0x4, fixed_abs, tag = 'smem constant byte address 0x4 - core index']
  #allocation1 [shape = 'u32[144,128]{1,0:T(1,128)}', space=vmem, size = 0x12000, scoped, tag = 'internal scratch']
  %s0 = inlined_call_operand.vmem [shape: f32[16], index: 0, kind: input, shape index: {}]
  %s1 = inlined_call_operand.vmem [shape: f32[4,32,256], index: 1, kind: input, shape index: {}]
  %s2 = inlined_call_operand.vmem [shape: f32[2,8,256], index: 2, kind: input, shape index: {}]
  %s3 = inlined_call_operand.vmem [shape: f32[160,32], index: 3, kind: input, shape index: {}]
  %s4 = inlined_call_operand.vmem [shape: f32[16,1], index: 4, kind: input, shape index: {}]
  %s5 = inlined_call_operand.vmem [shape: f32[2,8,256], index: 5, kind: output, shape index: {}]
  %s6 = sld [smem:[#allocation0]]
  $region57: #{_forward_core.1} parent=0
    _
  %s8 = ssub.s32 1, %s6
  %s9 = scalar_select 0, %s8, %s6
  $region1: #{_forward_core.1} parent=0
    #allocation2 [shape = 'u8[512]{0}', space=smem, size = 0x200, scoped, tag = 'input window, operand 0, single buffered']
    #allocation3 [shape = 's32[2]{0}', space=sflag, size = 0x8, scoped, tag = 'scoped memory for _forward_core.1']
    %10 = vsyncpa [#allocation3], 0
    loop: start=0, step=1, limit=4
    $region2: #{_forward_core.1} parent=1 // loop_pre_header
      _
    $region3: #{_forward_core.1} parent=1 // loop_header
      %s12 = sphi 0, %s16
      %p13 = scmp.ge.s32.totalorder %s12, 4
      %s20 = sphi 0, %s20
      %s22 = sphi 0, %s20
      %s23 = sphi 0, %s22
      %s37 = sphi 0, %s23
      %s41 = sphi 0, %s41
      %s43 = sphi 0, %s41
      %s44 = sphi 0, %s43
      %s58 = sphi 0, %s44
      %s64 = sphi 0, %s66
      %s67 = sphi 0, %s64
      %s68 = sphi 0, %s67
      %s84 = sphi 0, %s68
      %s88 = sphi 0, %s88
      %s90 = sphi 0, %s88
      %s91 = sphi 0, %s90
      %s105 = sphi 0, %s91
      %s109 = sphi 0, %s109
      %s111 = sphi 0, %s109
      %s112 = sphi 0, %s111
      %s126 = sphi 0, %s112
      %s132 = sphi 0, %s134
      %s135 = sphi 0, %s132
      %s136 = sphi 0, %s135
      %s152 = sphi 0, %s136
    $region4: #{_forward_core.1} parent=1 // loop_header_branch
      %15 = sbr.rel (%p13) target = $region8
    $region5: #{_forward_core.1} parent=1 // loop_body
      %s17 = ssub.s32 %s12, 1
      %s18 = ssub.s32 %s12, 2
      %s19 = sadd.s32 %s12, 1
      %s21 = sadd.s32 %s20, 1
      %p24 = scmp.eq.s32.totalorder %s12, 1
      %p25 = scmp.ne.s32.totalorder %s20, %s22
      %p26 = scmp.eq.s32.totalorder %s12, 0
      %p27 = por %p25, %p26
      %p28 = scmp.ne.s32.totalorder %s20, %s22
      %p29 = scmp.eq.s32.totalorder %s17, 1
      %p30 = por %p28, %p29
      %p31 = scmp.ne.s32.totalorder %s22, %s23
      %p32 = scmp.eq.s32.totalorder %s17, 0
      %p33 = por %p31, %p32
      %p34 = scmp.ne.s32.totalorder %s22, %s23
      %p35 = scmp.eq.s32.totalorder %s18, 1
      %p36 = por %p34, %p35
      %p38 = scmp.ne.s32.totalorder %s23, %s37
      %p39 = scmp.eq.s32.totalorder %s18, 0
      %p40 = por %p38, %p39
      %s42 = sadd.s32 %s41, 1
      %p45 = scmp.eq.s32.totalorder %s12, 1
      %p46 = scmp.ne.s32.totalorder %s41, %s43
      %p47 = scmp.eq.s32.totalorder %s12, 0
      %p48 = por %p46, %p47
      %p49 = scmp.ne.s32.totalorder %s41, %s43
      %p50 = scmp.eq.s32.totalorder %s17, 1
      %p51 = por %p49, %p50
      %p52 = scmp.ne.s32.totalorder %s43, %s44
      %p53 = scmp.eq.s32.totalorder %s17, 0
      %p54 = por %p52, %p53
      %p55 = scmp.ne.s32.totalorder %s43, %s44
      %p56 = scmp.eq.s32.totalorder %s18, 1
      %p57 = por %p55, %p56
      %p59 = scmp.ne.s32.totalorder %s44, %s58
      %p60 = scmp.eq.s32.totalorder %s18, 0
      %p61 = por %p59, %p60
      %s62 = ssub.s32 %s12, %s19
      %p63 = scmp.eq.s32.totalorder %s62, 0
      %s65 = sadd.s32 %s64, 1
      %s66 = scalar_select %p63, %s64, %s65
      %p69 = pneg %p63
      %p70 = scmp.eq.s32.totalorder %s12, 1
      %p71 = por %p69, %p70
      %p72 = scmp.ne.s32.totalorder %s64, %s67
      %p73 = scmp.eq.s32.totalorder %s12, 0
      %p74 = por %p72, %p73
      %p75 = scmp.ne.s32.totalorder %s64, %s67
      %p76 = scmp.eq.s32.totalorder %s17, 1
      %p77 = por %p75, %p76
      %p78 = scmp.ne.s32.totalorder %s67, %s68
      %p79 = scmp.eq.s32.totalorder %s17, 0
      %p80 = por %p78, %p79
      %p81 = scmp.ne.s32.totalorder %s67, %s68
      %p82 = scmp.eq.s32.totalorder %s18, 1
      %p83 = por %p81, %p82
      %p85 = scmp.ne.s32.totalorder %s68, %s84
      %p86 = scmp.eq.s32.totalorder %s18, 0
      %p87 = por %p85, %p86
      %s89 = sadd.s32 %s88, 1
      %p92 = scmp.eq.s32.totalorder %s12, 1
      %p93 = scmp.ne.s32.totalorder %s88, %s90
      %p94 = scmp.eq.s32.totalorder %s12, 0
      %p95 = por %p93, %p94
      %p96 = scmp.ne.s32.totalorder %s88, %s90
      %p97 = scmp.eq.s32.totalorder %s17, 1
      %p98 = por %p96, %p97
      %p99 = scmp.ne.s32.totalorder %s90, %s91
      %p100 = scmp.eq.s32.totalorder %s17, 0
      %p101 = por %p99, %p100
      %p102 = scmp.ne.s32.totalorder %s90, %s91
      %p103 = scmp.eq.s32.totalorder %s18, 1
      %p104 = por %p102, %p103
      %p106 = scmp.ne.s32.totalorder %s91, %s105
      %p107 = scmp.eq.s32.totalorder %s18, 0
      %p108 = por %p106, %p107
      %s110 = sadd.s32 %s109, 1
      %p113 = scmp.eq.s32.totalorder %s12, 1
      %p114 = scmp.ne.s32.totalorder %s109, %s111
      %p115 = scmp.eq.s32.totalorder %s12, 0
      %p116 = por %p114, %p115
      %p117 = scmp.ne.s32.totalorder %s109, %s111
      %p118 = scmp.eq.s32.totalorder %s17, 1
      %p119 = por %p117, %p118
      %p120 = scmp.ne.s32.totalorder %s111, %s112
      %p121 = scmp.eq.s32.totalorder %s17, 0
      %p122 = por %p120, %p121
      %p123 = scmp.ne.s32.totalorder %s111, %s112
      %p124 = scmp.eq.s32.totalorder %s18, 1
      %p125 = por %p123, %p124
      %p127 = scmp.ne.s32.totalorder %s112, %s126
      %p128 = scmp.eq.s32.totalorder %s18, 0
      %p129 = por %p127, %p128
      %s130 = ssub.s32 %s12, %s19
      %p131 = scmp.eq.s32.totalorder %s130, 0
      %s133 = sadd.s32 %s132, 1
      %s134 = scalar_select %p131, %s132, %s133
      %p137 = pneg %p131
      %p138 = scmp.eq.s32.totalorder %s12, 1
      %p139 = por %p137, %p138
      %p140 = scmp.ne.s32.totalorder %s132, %s135
      %p141 = scmp.eq.s32.totalorder %s12, 0
      %p142 = por %p140, %p141
      %p143 = scmp.ne.s32.totalorder %s132, %s135
      %p144 = scmp.eq.s32.totalorder %s17, 1
      %p145 = por %p143, %p144
      %p146 = scmp.ne.s32.totalorder %s135, %s136
      %p147 = scmp.eq.s32.totalorder %s17, 0
      %p148 = por %p146, %p147
      %p149 = scmp.ne.s32.totalorder %s135, %s136
      %p150 = scmp.eq.s32.totalorder %s18, 1
      %p151 = por %p149, %p150
      %p153 = scmp.ne.s32.totalorder %s136, %s152
      %p154 = scmp.eq.s32.totalorder %s18, 0
      %p155 = por %p153, %p154
      %p156 = scmp.le.s32.totalorder 1, %s12
      %p157 = scmp.lt.s32.totalorder %s12, 3
      %p158 = pnand %p156, %p157
      %p159 = pneg %p158
      // Predicated region
      $region9: #{_forward_core.1} parent=5 // pred_check
        _
      $region10: #{_forward_core.1} parent=5 // pred_check_branch
        %161 = sbr.rel (%p158) target = $region12
      $region11: #{_forward_core.1} parent=5 // pred_region
        %s162 = ssub.s32 %s12, 1
        // Predicated region
        $region13: #{_forward_core.1} parent=11 // pred_check
          %p163 = pneg %p33
        $region14: #{_forward_core.1} parent=11 // pred_check_branch
          %165 = sbr.rel (%p163) target = $region16
        $region15: #{_forward_core.1} parent=11 // pred_region
          %s167 = ssub.s32 16, 16
          %168 = vsyncadd [#allocation3], %s167
          %s170 = sshll.u32 %s0, 4
          %s171 = int_to_ptr.vmem [resolvable:$true] %s170
          %173 = dma.vmem_to_smem %s171, 16, [#allocation2], [#allocation3]
        $region16: #{_forward_core.1} parent=11 // pred_fallthru
          _
        // Predicated region
        $region17: #{_forward_core.1} parent=11 // pred_check
          %p174 = pneg %p54
        $region18: #{_forward_core.1} parent=11 // pred_check_branch
          %176 = sbr.rel (%p174) target = $region20
        $region19: #{_forward_core.1} parent=11 // pred_region
          _
        $region20: #{_forward_core.1} parent=11 // pred_fallthru
          _
        // Predicated region
        $region21: #{_forward_core.1} parent=11 // pred_check
          %p177 = pneg %p101
        $region22: #{_forward_core.1} parent=11 // pred_check_branch
          %179 = sbr.rel (%p177) target = $region24
        $region23: #{_forward_core.1} parent=11 // pred_region
          _
        $region24: #{_forward_core.1} parent=11 // pred_fallthru
          _
        // Predicated region
        $region25: #{_forward_core.1} parent=11 // pred_check
          %p180 = pneg %p122
        $region26: #{_forward_core.1} parent=11 // pred_check_branch
          %182 = sbr.rel (%p180) target = $region28
        $region27: #{_forward_core.1} parent=11 // pred_region
          _
        $region28: #{_forward_core.1} parent=11 // pred_fallthru
          _
      $region12: #{_forward_core.1} parent=5 // pred_fallthru
        _
      %p183 = scmp.lt.s32.totalorder %s12, 2
      // Predicated region
      $region29: #{_forward_core.1} parent=5 // pred_check
        %p184 = pneg %p183
      $region30: #{_forward_core.1} parent=5 // pred_check_branch
        %186 = sbr.rel (%p184) target = $region32
      $region31: #{_forward_core.1} parent=5 // pred_region
        // Predicated region
        $region33: #{_forward_core.1} parent=31 // pred_check
          %p187 = pneg %p74
        $region34: #{_forward_core.1} parent=31 // pred_check_branch
          %189 = sbr.rel (%p187) target = $region36
        $region35: #{_forward_core.1} parent=31 // pred_region
          %p190 = scmp.lt.s32.totalorder %s12, 1
          %s191 = scalar_select %p190, %s12, 1
          %s192 = smul.addr %s191, 2
          %s193 = smul.addr %s192, 8
          %s194 = scalar_lea.vmem %s2, %s193
        $region36: #{_forward_core.1} parent=31 // pred_fallthru
          _
      $region32: #{_forward_core.1} parent=5 // pred_fallthru
        _
      %p195 = scmp.le.s32.totalorder 1, %s12
      %p196 = scmp.lt.s32.totalorder %s12, 3
      %p197 = pnand %p195, %p196
      %p198 = pneg %p197
      // Predicated region
      $region37: #{_forward_core.1} parent=5 // pred_check
        _
      $region38: #{_forward_core.1} parent=5 // pred_check_branch
        %200 = sbr.rel (%p197) target = $region40
      $region39: #{_forward_core.1} parent=5 // pred_region
        %s201 = ssub.s32 %s12, 1
        // Predicated region
        $region41: #{_forward_core.1} parent=39 // pred_check
          %p202 = pneg %p33
        $region42: #{_forward_core.1} parent=39 // pred_check_branch
          %204 = sbr.rel (%p202) target = $region44
        $region43: #{_forward_core.1} parent=39 // pred_region
          %205 = dma.done [#allocation3], 16
        $region44: #{_forward_core.1} parent=39 // pred_fallthru
          _
        %206 = sfence
        %p207 = pneg %p33
        %p208 = pneg %p30
        %p209 = pneg %p54
        %p210 = pneg %p51
        %p211 = scmp.lt.s32.totalorder %s17, 1
        %s212 = scalar_select %p211, %s17, 1
        %s213 = smul.addr %s212, 2
        %s214 = smul.addr %s213, 8
        %s215 = scalar_lea.vmem %s2, %s214
        %p216 = pneg %p80
        %p217 = pneg %p77
        %p218 = pneg %p101
        %p219 = pneg %p98
        %p220 = pneg %p122
        %p221 = pneg %p119
        %p222 = pneg %p148
        %p223 = pneg %p145
        %p224 = scmp.lt.s32.totalorder %s17, 1
        %s225 = scalar_select %p224, %s17, 1
        %s226 = smul.addr %s225, 2
        %s227 = smul.addr %s226, 8
        %s228 = scalar_lea.vmem %s5, %s227
        %p229 = scmp.lt.s32.totalorder %s17, 1
        %s230 = scalar_select %p229, %s17, 1
        %s231 = smul.addr %s230, 2
        %s232 = smul.addr %s231, 8
        %s233 = scalar_lea.vmem %s2, %s232
        %p234 = scmp.lt.s32.totalorder %s17, 1
        %s235 = scalar_select %p234, %s17, 1
        %s236 = smul.addr %s235, 2
        %s237 = smul.addr %s236, 8
        %s238 = scalar_lea.vmem %s5, %s237
        %v240 = vld [vmem:[%s3] sm:$0xff]
        %v241 = vld [vmem:[%s3 + $0x8] sm:$0xff]
        %v242 = vld [vmem:[%s3 + $0x10] sm:$0xff]
        %v243 = vld [vmem:[%s3 + $0x18] sm:$0xff]
        %v244 = vpack.c.bf16 %v241, %v240
        %v245 = vpack.c.bf16 %v243, %v242
        %v246 = vld [vmem:[%s3 + $0x20] sm:$0xff]
        %v247 = vld [vmem:[%s3 + $0x28] sm:$0xff]
        %v248 = vld [vmem:[%s3 + $0x30] sm:$0xff]
        %v249 = vld [vmem:[%s3 + $0x38] sm:$0xff]
        %v250 = vpack.c.bf16 %v247, %v246
        %v251 = vpack.c.bf16 %v249, %v248
        %v252 = vld [vmem:[%s3 + $0x40] sm:$0xff]
        %v253 = vld [vmem:[%s3 + $0x48] sm:$0xff]
        %v254 = vpack.c.bf16 %v253, %v252
        %v255 = vld [vmem:[%s3 + $0x50] sm:$0xff]
        %v256 = vld [vmem:[%s3 + $0x58] sm:$0xff]
        %v257 = vld [vmem:[%s3 + $0x60] sm:$0xff]
        %v258 = vld [vmem:[%s3 + $0x68] sm:$0xff]
        %v259 = vpack.c.bf16 %v256, %v255
        %v260 = vpack.c.bf16 %v258, %v257
        %v261 = vld [vmem:[%s3 + $0x70] sm:$0xff]
        %v262 = vld [vmem:[%s3 + $0x78] sm:$0xff]
        %v263 = vld [vmem:[%s3 + $0x80] sm:$0xff]
        %v264 = vld [vmem:[%s3 + $0x88] sm:$0xff]
        %v265 = vpack.c.bf16 %v262, %v261
        %v266 = vpack.c.bf16 %v264, %v263
        %v267 = vld [vmem:[%s3 + $0x90] sm:$0xff]
        %v268 = vpack.c.bf16 %v267, %v267
        %v269 = vld [vmem:[%s3 + $0x98] sm:$0xff]
        %v270 = vpack.c.bf16 %v269, %v269
        %v271 = vld [vmem:[%s4] sm:$0xff]
        %v272 = vld [vmem:[%s4 + $0x8] sm:$0xff]
        %v273 = vld [vmem:[%s233] sm:$0xff]
        %v274 = vld [vmem:[%s233 + $0x8] sm:$0xff]
        %s275 = sld [smem:[#allocation2]]
        %s276 = sld [smem:[#allocation2 + $0x1]]
        %s277 = sld [smem:[#allocation2 + $0x2]]
        %v278 = vpack.c.bf16 %v273, %v273
        %v279 = vpack.c.bf16 %v274, %v274
        %v280 = vld [vmem:[%s1] sm:$0xff]
        %v281 = vld [vmem:[%s1 + $0x8] sm:$0xff]
        %v282 = vld [vmem:[%s1 + $0x10] sm:$0xff]
        %v283 = vld [vmem:[%s1 + $0x18] sm:$0xff]
        %v284 = vld [vmem:[%s1 + $0x20] sm:$0xff]
        %v285 = vld [vmem:[%s1 + $0x28] sm:$0xff]
        %v286 = vld [vmem:[%s1 + $0x30] sm:$0xff]
        %v287 = vld [vmem:[%s1 + $0x38] sm:$0xff]
        %vm288 = vcmask 64512
        %v290 = vsel %vm288, %v244, 0
        %v293 = vsel %vm288, %v245, 0
        %vm295 = vcmask 1043456
        %v297 = vsel %vm295, %v278, 0
        %v300 = vsel %vm295, %v279, 0
        %302 = vmatprep.subr.bf16.mxu0 %v300
        %303 = vmatpush1.bf16.msra.mxu0 %v297
        %304 = vmatprep.subr.bf16.mxu0 0
        %305 = vmatpush1.bf16.msra.mxu0 0
        %306 = vmatprep.subr.bf16.mxu0 0
        %307 = vmatpush1.bf16.msra.mxu0 0
        %308 = vmatprep.subr.bf16.mxu0 0
        %309 = vmatpush1.bf16.msra.mxu0 0
        %310 = vmatprep.subr.bf16.mxu0 0
        %311 = vmatpush1.bf16.msra.mxu0 0
        %312 = vmatprep.subr.bf16.mxu0 0
        %313 = vmatpush1.bf16.msra.mxu0 0
        %314 = vmatprep.subr.bf16.mxu0 0
        %315 = vmatpush1.bf16.msra.mxu0 0
        %316 = vmatprep.subr.bf16.mxu0 0
        %317 = vmatpush1.bf16.msra.mxu0 0
        %318 = vmatprep.subr.bf16.mxu0 0
        %319 = vmatpush1.bf16.msra.mxu0 0
        %320 = vmatprep.subr.bf16.mxu0 0
        %321 = vmatpush1.bf16.msra.mxu0 0
        %322 = vmatprep.subr.bf16.mxu0 0
        %323 = vmatpush1.bf16.msra.mxu0 0
        %324 = vmatprep.subr.bf16.mxu0 0
        %325 = vmatpush1.bf16.msra.mxu0 0
        %326 = vmatprep.subr.bf16.mxu0 0
        %327 = vmatpush1.bf16.msra.mxu0 0
        %328 = vmatprep.subr.bf16.mxu0 0
        %329 = vmatpush1.bf16.msra.mxu0 0
        %330 = vmatprep.subr.bf16.mxu0 0
        %331 = vmatpush1.bf16.msra.mxu0 0
        %332 = vmatprep.subr.bf16.mxu0 0
        %333 = vmatpush1.bf16.msra.mxu0 0
        %334 = vmatprep.mubr.bf16.mxu0 0
        %335 = vmatmul.mubr.bf16.gmra.mrb[0].mxu0 %v290
        %v336 = vpop.f32.mrb[0].mxu0
        %v337 = vadd.f32 %v280, %v336
        %v338 = vpop.f32.mrb[0].mxu0
        %v339 = vadd.f32 %v281, %v338
        %v340 = vpop.f32.mrb[0].mxu0
        %v341 = vadd.f32 %v282, %v340
        %v342 = vpop.f32.mrb[0].mxu0
        %v343 = vadd.f32 %v283, %v342
        %344 = vmatprep.mubr.bf16.mxu0 0
        %345 = vmatmul.mubr.bf16.gmra.mrb[0].mxu0 %v293
        %v346 = vpop.f32.mrb[0].mxu0
        %v347 = vadd.f32 %v284, %v346
        %v348 = vpop.f32.mrb[0].mxu0
        %v349 = vadd.f32 %v285, %v348
        %v350 = vpop.f32.mrb[0].mxu0
        %v351 = vadd.f32 %v286, %v350
        %v352 = vpop.f32.mrb[0].mxu0
        %v353 = vadd.f32 %v287, %v352
        %354 = vdwg.mxu0
        %v355 = vpack.c.bf16 %v341, %v337
        %v356 = vpack.c.bf16 %v343, %v339
        %v357 = vpack.c.bf16 %v351, %v347
        %v358 = vpack.c.bf16 %v353, %v349
        %vm359 = vcmask 261120
        %v361 = vsel %vm359, %v250, 0
        %v364 = vsel %vm359, %v251, 0
        %366 = vmatprep.subr.bf16.mxu0 %v356
        %367 = vmatpush1.bf16.msra.mxu0 %v355
        %368 = vmatprep.subr.bf16.mxu0 %v358
        %369 = vmatpush1.bf16.msra.mxu0 %v357
        %370 = vmatprep.subr.bf16.mxu0 0
        %371 = vmatpush1.bf16.msra.mxu0 0
        %372 = vmatprep.subr.bf16.mxu0 0
        %373 = vmatpush1.bf16.msra.mxu0 0
        %374 = vmatprep.subr.bf16.mxu0 0
        %375 = vmatpush1.bf16.msra.mxu0 0
        %376 = vmatprep.subr.bf16.mxu0 0
        %377 = vmatpush1.bf16.msra.mxu0 0
        %378 = vmatprep.subr.bf16.mxu0 0
        %379 = vmatpush1.bf16.msra.mxu0 0
        %380 = vmatprep.subr.bf16.mxu0 0
        %381 = vmatpush1.bf16.msra.mxu0 0
        %382 = vmatprep.subr.bf16.mxu0 0
        %383 = vmatpush1.bf16.msra.mxu0 0
        %384 = vmatprep.subr.bf16.mxu0 0
        %385 = vmatpush1.bf16.msra.mxu0 0
        %386 = vmatprep.subr.bf16.mxu0 0
        %387 = vmatpush1.bf16.msra.mxu0 0
        %388 = vmatprep.subr.bf16.mxu0 0
        %389 = vmatpush1.bf16.msra.mxu0 0
        %390 = vmatprep.subr.bf16.mxu0 0
        %391 = vmatpush1.bf16.msra.mxu0 0
        %392 = vmatprep.subr.bf16.mxu0 0
        %393 = vmatpush1.bf16.msra.mxu0 0
        %394 = vmatprep.subr.bf16.mxu0 0
        %395 = vmatpush1.bf16.msra.mxu0 0
        %396 = vmatprep.subr.bf16.mxu0 0
        %397 = vmatpush1.bf16.msra.mxu0 0
        %398 = vmatprep.mubr.bf16.mxu0 0
        %399 = vmatmul.mubr.bf16.gmra.mrb[0].mxu0 %v361
        %v400 = vpop.f32.mrb[0].mxu0
        %v401 = vadd.f32 0.0, %v400
        %v402 = vpop.f32.mrb[0].mxu0
        %v403 = vadd.f32 0.0, %v402
        %v404 = vpop.f32.mrb[0].mxu0
        %v405 = vadd.f32 0.0, %v404
        %v406 = vpop.f32.mrb[0].mxu0
        %v407 = vadd.f32 0.0, %v406
        %408 = vmatprep.mubr.bf16.mxu0 0
        %409 = vmatmul.mubr.bf16.gmra.mrb[0].mxu0 %v364
        %v410 = vpop.f32.mrb[0].mxu0
        %v411 = vadd.f32 0.0, %v410
        %v412 = vpop.f32.mrb[0].mxu0
        %v413 = vadd.f32 0.0, %v412
        %v414 = vpop.f32.mrb[0].mxu0
        %v415 = vadd.f32 0.0, %v414
        %v416 = vpop.f32.mrb[0].mxu0
        %v417 = vadd.f32 0.0, %v416
        %418 = vdwg.mxu0
        %v419 = vpack.c.bf16 %v405, %v401
        %v420 = vpack.c.bf16 %v407, %v403
        %v421 = vpack.c.bf16 %v415, %v411
        %v422 = vpack.c.bf16 %v417, %v413
        %v424 = vsel %vm359, %v254, 0
        %426 = vmatprep.subr.bf16.mxu0 %v420
        %427 = vmatpush1.bf16.msra.mxu0 %v419
        %428 = vmatprep.subr.bf16.mxu0 %v422
        %429 = vmatpush1.bf16.msra.mxu0 %v421
        %430 = vmatprep.subr.bf16.mxu0 0
        %431 = vmatpush1.bf16.msra.mxu0 0
        %432 = vmatprep.subr.bf16.mxu0 0
        %433 = vmatpush1.bf16.msra.mxu0 0
        %434 = vmatprep.subr.bf16.mxu0 0
        %435 = vmatpush1.bf16.msra.mxu0 0
        %436 = vmatprep.subr.bf16.mxu0 0
        %437 = vmatpush1.bf16.msra.mxu0 0
        %438 = vmatprep.subr.bf16.mxu0 0
        %439 = vmatpush1.bf16.msra.mxu0 0
        %440 = vmatprep.subr.bf16.mxu0 0
        %441 = vmatpush1.bf16.msra.mxu0 0
        %442 = vmatprep.subr.bf16.mxu0 0
        %443 = vmatpush1.bf16.msra.mxu0 0
        %444 = vmatprep.subr.bf16.mxu0 0
        %445 = vmatpush1.bf16.msra.mxu0 0
        %446 = vmatprep.subr.bf16.mxu0 0
        %447 = vmatpush1.bf16.msra.mxu0 0
        %448 = vmatprep.subr.bf16.mxu0 0
        %449 = vmatpush1.bf16.msra.mxu0 0
        %450 = vmatprep.subr.bf16.mxu0 0
        %451 = vmatpush1.bf16.msra.mxu0 0
        %452 = vmatprep.subr.bf16.mxu0 0
        %453 = vmatpush1.bf16.msra.mxu0 0
        %454 = vmatprep.subr.bf16.mxu0 0
        %455 = vmatpush1.bf16.msra.mxu0 0
        %456 = vmatprep.subr.bf16.mxu0 0
        %457 = vmatpush1.bf16.msra.mxu0 0
        %458 = vmatprep.mubr.bf16.mxu0 0
        %459 = vmatmul.mubr.bf16.gmra.mrb[0].mxu0 %v424
        %v460 = vpop.f32.mrb[0].mxu0
        %v461 = vadd.f32 0.0, %v460
        %v462 = vpop.f32.mrb[0].mxu0
        %v463 = vadd.f32 0.0, %v462
        %v464 = vpop.f32.mrb[0].mxu0
        %v465 = vadd.f32 0.0, %v464
        %v466 = vpop.f32.mrb[0].mxu0
        %v467 = vadd.f32 0.0, %v466
        %468 = vdwg.mxu0
        %v469 = vrot.slane %v461, 4
        %v470 = vmax.f32 %v461, %v469
        %v471 = vrot.slane %v470, 2
        %v472 = vmax.f32 %v470, %v471
        %v473 = vrot.slane %v472, 1
        %v474 = vmax.f32 %v472, %v473
        %v475 = vrot.slane %v463, 4
        %v476 = vmax.f32 %v463, %v475
        %v477 = vrot.slane %v476, 2
        %v478 = vmax.f32 %v476, %v477
        %v479 = vrot.slane %v478, 1
        %v480 = vmax.f32 %v478, %v479
        %v481 = vsub.f32 %v461, %v474
        %v482 = vsub.f32 %v463, %v480
        %v483 = vmul.f32 %v481, 1.442695
        %v484 = vpow.pop %v483
        %v485 = vmul.f32 %v482, 1.442695
        %v486 = vpow.pop %v485
        %v487 = vrot.slane %v484, 4
        %v488 = vadd.f32 %v484, %v487
        %v489 = vrot.slane %v488, 2
        %v490 = vadd.f32 %v488, %v489
        %v491 = vrot.slane %v490, 1
        %v492 = vadd.f32 %v490, %v491
        %v493 = vrot.slane %v486, 4
        %v494 = vadd.f32 %v486, %v493
        %v495 = vrot.slane %v494, 2
        %v496 = vadd.f32 %v494, %v495
        %v497 = vrot.slane %v496, 1
        %v498 = vadd.f32 %v496, %v497
        %v499 = vrcp.pop %v492
        %v500 = vrcp.pop %v498
        %v501 = vmul.f32 %v484, %v499
        %v502 = vmul.f32 %v486, %v500
        %v503 = vpack.c.bf16 %v501, %v501
        %v504 = vpack.c.bf16 %v502, %v502
        %v505 = vrot.slane %v465, 4
        %v506 = vmax.f32 %v465, %v505
        %v507 = vrot.slane %v506, 2
        %v508 = vmax.f32 %v506, %v507
        %v509 = vrot.slane %v508, 1
        %v510 = vmax.f32 %v508, %v509
        %v511 = vrot.slane %v467, 4
        %v512 = vmax.f32 %v467, %v511
        %v513 = vrot.slane %v512, 2
        %v514 = vmax.f32 %v512, %v513
        %v515 = vrot.slane %v514, 1
        %v516 = vmax.f32 %v514, %v515
        %v517 = vsub.f32 %v465, %v510
        %v518 = vsub.f32 %v467, %v516
        %v519 = vmul.f32 %v517, 1.442695
        %v520 = vpow.pop %v519
        %v521 = vmul.f32 %v518, 1.442695
        %v522 = vpow.pop %v521
        %v523 = vrot.slane %v520, 4
        %v524 = vadd.f32 %v520, %v523
        %v525 = vrot.slane %v524, 2
        %v526 = vadd.f32 %v524, %v525
        %v527 = vrot.slane %v526, 1
        %v528 = vadd.f32 %v526, %v527
        %v529 = vrot.slane %v522, 4
        %v530 = vadd.f32 %v522, %v529
        %v531 = vrot.slane %v530, 2
        %v532 = vadd.f32 %v530, %v531
        %v533 = vrot.slane %v532, 1
        %v534 = vadd.f32 %v532, %v533
        %v535 = vrcp.pop %v528
        %v536 = vrcp.pop %v534
        %v537 = vmul.f32 %v520, %v535
        %v538 = vmul.f32 %v522, %v536
        %v539 = vpack.c.bf16 %v537, %v537
        %v540 = vpack.c.bf16 %v538, %v538
        %v542 = vsel %vm288, %v259, 0
        %v545 = vsel %vm288, %v260, 0
        %v548 = vsel %vm295, %v503, 0
        %v551 = vsel %vm295, %v504, 0
        %553 = vmatprep.subr.bf16.mxu0 %v551
        %554 = vmatpush1.bf16.msra.mxu0 %v548
        %555 = vmatprep.subr.bf16.mxu0 0
        %556 = vmatpush1.bf16.msra.mxu0 0
        %557 = vmatprep.subr.bf16.mxu0 0
        %558 = vmatpush1.bf16.msra.mxu0 0
        %559 = vmatprep.subr.bf16.mxu0 0
        %560 = vmatpush1.bf16.msra.mxu0 0
        %561 = vmatprep.subr.bf16.mxu0 0
        %562 = vmatpush1.bf16.msra.mxu0 0
        %563 = vmatprep.subr.bf16.mxu0 0
        %564 = vmatpush1.bf16.msra.mxu0 0
        %565 = vmatprep.subr.bf16.mxu0 0
        %566 = vmatpush1.bf16.msra.mxu0 0
        %567 = vmatprep.subr.bf16.mxu0 0
        %568 = vmatpush1.bf16.msra.mxu0 0
        %569 = vmatprep.subr.bf16.mxu0 0
        %570 = vmatpush1.bf16.msra.mxu0 0
        %571 = vmatprep.subr.bf16.mxu0 0
        %572 = vmatpush1.bf16.msra.mxu0 0
        %573 = vmatprep.subr.bf16.mxu0 0
        %574 = vmatpush1.bf16.msra.mxu0 0
        %575 = vmatprep.subr.bf16.mxu0 0
        %576 = vmatpush1.bf16.msra.mxu0 0
        %577 = vmatprep.subr.bf16.mxu0 0
        %578 = vmatpush1.bf16.msra.mxu0 0
        %579 = vmatprep.subr.bf16.mxu0 0
        %580 = vmatpush1.bf16.msra.mxu0 0
        %581 = vmatprep.subr.bf16.mxu0 0
        %582 = vmatpush1.bf16.msra.mxu0 0
        %583 = vmatprep.subr.bf16.mxu0 0
        %584 = vmatpush1.bf16.msra.mxu0 0
        %585 = vmatprep.mubr.bf16.mxu0 0
        %586 = vmatmul.mubr.bf16.gmra.mrb[0].mxu0 %v542
        %v587 = vpop.f32.mrb[0].mxu0
        %v588 = vadd.f32 0.0, %v587
        %v589 = vpop.f32.mrb[0].mxu0
        %v590 = vadd.f32 0.0, %v589
        %v591 = vpop.f32.mrb[0].mxu0
        %v592 = vadd.f32 0.0, %v591
        %v593 = vpop.f32.mrb[0].mxu0
        %v594 = vadd.f32 0.0, %v593
        %595 = vmatprep.mubr.bf16.mxu0 0
        %596 = vmatmul.mubr.bf16.gmra.mrb[0].mxu0 %v545
        %v597 = vpop.f32.mrb[0].mxu0
        %v598 = vadd.f32 0.0, %v597
        %v599 = vpop.f32.mrb[0].mxu0
        %v600 = vadd.f32 0.0, %v599
        %v601 = vpop.f32.mrb[0].mxu0
        %v602 = vadd.f32 0.0, %v601
        %v603 = vpop.f32.mrb[0].mxu0
        %v604 = vadd.f32 0.0, %v603
        %605 = vdwg.mxu0
        %v606 = vadd.f32 %v337, %v588
        %v607 = vadd.f32 %v339, %v590
        %v608 = vadd.f32 %v341, %v592
        %v609 = vadd.f32 %v343, %v594
        %v610 = vadd.f32 %v347, %v598
        %v611 = vadd.f32 %v349, %v600
        %v612 = vadd.f32 %v351, %v602
        %v613 = vadd.f32 %v353, %v604
        %v614 = vmul.f32 %v606, %v606
        %v615 = vmul.f32 %v607, %v607
        %v616 = vmul.f32 %v608, %v608
        %v617 = vmul.f32 %v609, %v609
        %v618 = vmul.f32 %v610, %v610
        %v619 = vmul.f32 %v611, %v611
        %v620 = vmul.f32 %v612, %v612
        %v621 = vmul.f32 %v613, %v613
        %v622 = vmul.f32 %v606, %v614
        %v623 = vmul.f32 %v607, %v615
        %v624 = vmul.f32 %v608, %v616
        %v625 = vmul.f32 %v609, %v617
        %v626 = vmul.f32 %v610, %v618
        %v627 = vmul.f32 %v611, %v619
        %v628 = vmul.f32 %v612, %v620
        %v629 = vmul.f32 %v613, %v621
        %v630 = vmul.f32 %v622, 0.044715
        %v631 = vmul.f32 %v623, 0.044715
        %v632 = vmul.f32 %v624, 0.044715
        %v633 = vmul.f32 %v625, 0.044715
        %v634 = vmul.f32 %v626, 0.044715
        %v635 = vmul.f32 %v627, 0.044715
        %v636 = vmul.f32 %v628, 0.044715
        %v637 = vmul.f32 %v629, 0.044715
        %v638 = vadd.f32 %v606, %v630
        %v639 = vadd.f32 %v607, %v631
        %v640 = vadd.f32 %v608, %v632
        %v641 = vadd.f32 %v609, %v633
        %v642 = vadd.f32 %v610, %v634
        %v643 = vadd.f32 %v611, %v635
        %v644 = vadd.f32 %v612, %v636
        %v645 = vadd.f32 %v613, %v637
        %v646 = vmul.f32 %v638, 0.7978846
        %v647 = vmul.f32 %v639, 0.7978846
        %v648 = vmul.f32 %v640, 0.7978846
        %v649 = vmul.f32 %v641, 0.7978846
        %v650 = vmul.f32 %v642, 0.7978846
        %v651 = vmul.f32 %v643, 0.7978846
        %v652 = vmul.f32 %v644, 0.7978846
        %v653 = vmul.f32 %v645, 0.7978846
        %v654 = vtanh.pop %v646
        %v655 = vtanh.pop %v647
        %v656 = vtanh.pop %v648
        %v657 = vtanh.pop %v649
        %v658 = vtanh.pop %v650
        %v659 = vtanh.pop %v651
        %v660 = vtanh.pop %v652
        %v661 = vtanh.pop %v653
        %v662 = vadd.f32 %v654, 1.0
        %v663 = vadd.f32 %v655, 1.0
        %v664 = vadd.f32 %v656, 1.0
        %v665 = vadd.f32 %v657, 1.0
        %v666 = vadd.f32 %v658, 1.0
        %v667 = vadd.f32 %v659, 1.0
        %v668 = vadd.f32 %v660, 1.0
        %v669 = vadd.f32 %v661, 1.0
        %v670 = vmul.f32 %v662, 0.5
        %v671 = vmul.f32 %v663, 0.5
        %v672 = vmul.f32 %v664, 0.5
        %v673 = vmul.f32 %v665, 0.5
        %v674 = vmul.f32 %v666, 0.5
        %v675 = vmul.f32 %v667, 0.5
        %v676 = vmul.f32 %v668, 0.5
        %v677 = vmul.f32 %v669, 0.5
        %v678 = vmul.f32 %v606, %v670
        %v679 = vmul.f32 %v607, %v671
        %v680 = vmul.f32 %v608, %v672
        %v681 = vmul.f32 %v609, %v673
        %v682 = vmul.f32 %v610, %v674
        %v683 = vmul.f32 %v611, %v675
        %v684 = vmul.f32 %v612, %v676
        %v685 = vmul.f32 %v613, %v677
        %v686 = vpack.c.bf16 %v680, %v678
        %v687 = vpack.c.bf16 %v681, %v679
        %v688 = vpack.c.bf16 %v684, %v682
        %v689 = vpack.c.bf16 %v685, %v683
        %v691 = vsel %vm288, %v265, 0
        %v694 = vsel %vm288, %v266, 0
        %v697 = vsel %vm295, %v539, 0
        %v700 = vsel %vm295, %v540, 0
        %702 = vmatprep.subr.bf16.mxu0 %v700
        %703 = vmatpush1.bf16.msra.mxu0 %v697
        %704 = vmatprep.subr.bf16.mxu0 0
        %705 = vmatpush1.bf16.msra.mxu0 0
        %706 = vmatprep.subr.bf16.mxu0 0
        %707 = vmatpush1.bf16.msra.mxu0 0
        %708 = vmatprep.subr.bf16.mxu0 0
        %709 = vmatpush1.bf16.msra.mxu0 0
        %710 = vmatprep.subr.bf16.mxu0 0
        %711 = vmatpush1.bf16.msra.mxu0 0
        %712 = vmatprep.subr.bf16.mxu0 0
        %713 = vmatpush1.bf16.msra.mxu0 0
        %714 = vmatprep.subr.bf16.mxu0 0
        %715 = vmatpush1.bf16.msra.mxu0 0
        %716 = vmatprep.subr.bf16.mxu0 0
        %717 = vmatpush1.bf16.msra.mxu0 0
        %718 = vmatprep.subr.bf16.mxu0 0
        %719 = vmatpush1.bf16.msra.mxu0 0
        %720 = vmatprep.subr.bf16.mxu0 0
        %721 = vmatpush1.bf16.msra.mxu0 0
        %722 = vmatprep.subr.bf16.mxu0 0
        %723 = vmatpush1.bf16.msra.mxu0 0
        %724 = vmatprep.subr.bf16.mxu0 0
        %725 = vmatpush1.bf16.msra.mxu0 0
        %726 = vmatprep.subr.bf16.mxu0 0
        %727 = vmatpush1.bf16.msra.mxu0 0
        %728 = vmatprep.subr.bf16.mxu0 0
        %729 = vmatpush1.bf16.msra.mxu0 0
        %730 = vmatprep.subr.bf16.mxu0 0
        %731 = vmatpush1.bf16.msra.mxu0 0
        %732 = vmatprep.subr.bf16.mxu0 0
        %733 = vmatpush1.bf16.msra.mxu0 0
        %734 = vmatprep.mubr.bf16.mxu0 0
        %735 = vmatmul.mubr.bf16.gmra.mrb[0].mxu0 %v691
        %v736 = vpop.f32.mrb[0].mxu0
        %v737 = vadd.f32 0.0, %v736
        %v738 = vpop.f32.mrb[0].mxu0
        %v739 = vadd.f32 0.0, %v738
        %v740 = vpop.f32.mrb[0].mxu0
        %v741 = vadd.f32 0.0, %v740
        %v742 = vpop.f32.mrb[0].mxu0
        %v743 = vadd.f32 0.0, %v742
        %744 = vmatprep.mubr.bf16.mxu0 0
        %745 = vmatmul.mubr.bf16.gmra.mrb[0].mxu0 %v694
        %v746 = vpop.f32.mrb[0].mxu0
        %v747 = vadd.f32 0.0, %v746
        %v748 = vpop.f32.mrb[0].mxu0
        %v749 = vadd.f32 0.0, %v748
        %v750 = vpop.f32.mrb[0].mxu0
        %v751 = vadd.f32 0.0, %v750
        %v752 = vpop.f32.mrb[0].mxu0
        %v753 = vadd.f32 0.0, %v752
        %754 = vdwg.mxu0
        %v755 = vadd.f32 %v337, %v737
        %v756 = vadd.f32 %v339, %v739
        %v757 = vadd.f32 %v341, %v741
        %v758 = vadd.f32 %v343, %v743
        %v759 = vadd.f32 %v347, %v747
        %v760 = vadd.f32 %v349, %v749
        %v761 = vadd.f32 %v351, %v751
        %v762 = vadd.f32 %v353, %v753
        %v763 = vmul.f32 %v755, %v755
        %v764 = vmul.f32 %v756, %v756
        %v765 = vmul.f32 %v757, %v757
        %v766 = vmul.f32 %v758, %v758
        %v767 = vmul.f32 %v759, %v759
        %v768 = vmul.f32 %v760, %v760
        %v769 = vmul.f32 %v761, %v761
        %v770 = vmul.f32 %v762, %v762
        %v771 = vmul.f32 %v755, %v763
        %v772 = vmul.f32 %v756, %v764
        %v773 = vmul.f32 %v757, %v765
        %v774 = vmul.f32 %v758, %v766
        %v775 = vmul.f32 %v759, %v767
        %v776 = vmul.f32 %v760, %v768
        %v777 = vmul.f32 %v761, %v769
        %v778 = vmul.f32 %v762, %v770
        %v779 = vmul.f32 %v771, 0.044715
        %v780 = vmul.f32 %v772, 0.044715
        %v781 = vmul.f32 %v773, 0.044715
        %v782 = vmul.f32 %v774, 0.044715
        %v783 = vmul.f32 %v775, 0.044715
        %v784 = vmul.f32 %v776, 0.044715
        %v785 = vmul.f32 %v777, 0.044715
        %v786 = vmul.f32 %v778, 0.044715
        %v787 = vadd.f32 %v755, %v779
        %v788 = vadd.f32 %v756, %v780
        %v789 = vadd.f32 %v757, %v781
        %v790 = vadd.f32 %v758, %v782
        %v791 = vadd.f32 %v759, %v783
        %v792 = vadd.f32 %v760, %v784
        %v793 = vadd.f32 %v761, %v785
        %v794 = vadd.f32 %v762, %v786
        %v795 = vmul.f32 %v787, 0.7978846
        %v796 = vmul.f32 %v788, 0.7978846
        %v797 = vmul.f32 %v789, 0.7978846
        %v798 = vmul.f32 %v790, 0.7978846
        %v799 = vmul.f32 %v791, 0.7978846
        %v800 = vmul.f32 %v792, 0.7978846
        %v801 = vmul.f32 %v793, 0.7978846
        %v802 = vmul.f32 %v794, 0.7978846
        %v803 = vtanh.pop %v795
        %v804 = vtanh.pop %v796
        %v805 = vtanh.pop %v797
        %v806 = vtanh.pop %v798
        %v807 = vtanh.pop %v799
        %v808 = vtanh.pop %v800
        %v809 = vtanh.pop %v801
        %v810 = vtanh.pop %v802
        %v811 = vadd.f32 %v803, 1.0
        %v812 = vadd.f32 %v804, 1.0
        %v813 = vadd.f32 %v805, 1.0
        %v814 = vadd.f32 %v806, 1.0
        %v815 = vadd.f32 %v807, 1.0
        %v816 = vadd.f32 %v808, 1.0
        %v817 = vadd.f32 %v809, 1.0
        %v818 = vadd.f32 %v810, 1.0
        %v819 = vmul.f32 %v811, 0.5
        %v820 = vmul.f32 %v812, 0.5
        %v821 = vmul.f32 %v813, 0.5
        %v822 = vmul.f32 %v814, 0.5
        %v823 = vmul.f32 %v815, 0.5
        %v824 = vmul.f32 %v816, 0.5
        %v825 = vmul.f32 %v817, 0.5
        %v826 = vmul.f32 %v818, 0.5
        %v827 = vmul.f32 %v755, %v819
        %v828 = vmul.f32 %v756, %v820
        %v829 = vmul.f32 %v757, %v821
        %v830 = vmul.f32 %v758, %v822
        %v831 = vmul.f32 %v759, %v823
        %v832 = vmul.f32 %v760, %v824
        %v833 = vmul.f32 %v761, %v825
        %v834 = vmul.f32 %v762, %v826
        %v835 = vpack.c.bf16 %v829, %v827
        %v836 = vpack.c.bf16 %v830, %v828
        %v837 = vpack.c.bf16 %v833, %v831
        %v838 = vpack.c.bf16 %v834, %v832
        %840 = vset.pattern.permute.xlu0 0
        %841 = vperm.xlu0 %840, %v271
        %v842 = vpop.permute.xlu0 %841
        %v845 = vsel %vm359, %v268, 0
        %847 = vmatprep.subr.bf16.mxu0 %v687
        %848 = vmatpush1.bf16.msra.mxu0 %v686
        %849 = vmatprep.subr.bf16.mxu0 %v689
        %850 = vmatpush1.bf16.msra.mxu0 %v688
        %851 = vmatprep.subr.bf16.mxu0 0
        %852 = vmatpush1.bf16.msra.mxu0 0
        %853 = vmatprep.subr.bf16.mxu0 0
        %854 = vmatpush1.bf16.msra.mxu0 0
        %855 = vmatprep.subr.bf16.mxu0 0
        %856 = vmatpush1.bf16.msra.mxu0 0
        %857 = vmatprep.subr.bf16.mxu0 0
        %858 = vmatpush1.bf16.msra.mxu0 0
        %859 = vmatprep.subr.bf16.mxu0 0
        %860 = vmatpush1.bf16.msra.mxu0 0
        %861 = vmatprep.subr.bf16.mxu0 0
        %862 = vmatpush1.bf16.msra.mxu0 0
        %863 = vmatprep.subr.bf16.mxu0 0
        %864 = vmatpush1.bf16.msra.mxu0 0
        %865 = vmatprep.subr.bf16.mxu0 0
        %866 = vmatpush1.bf16.msra.mxu0 0
        %867 = vmatprep.subr.bf16.mxu0 0
        %868 = vmatpush1.bf16.msra.mxu0 0
        %869 = vmatprep.subr.bf16.mxu0 0
        %870 = vmatpush1.bf16.msra.mxu0 0
        %871 = vmatprep.subr.bf16.mxu0 0
        %872 = vmatpush1.bf16.msra.mxu0 0
        %873 = vmatprep.subr.bf16.mxu0 0
        %874 = vmatpush1.bf16.msra.mxu0 0
        %875 = vmatprep.subr.bf16.mxu0 0
        %876 = vmatpush1.bf16.msra.mxu0 0
        %877 = vmatprep.subr.bf16.mxu0 0
        %878 = vmatpush1.bf16.msra.mxu0 0
        %879 = vmatprep.mubr.bf16.mxu0 0
        %880 = vmatmul.mubr.bf16.gmra.mrb[0].mxu0 %v845
        %v881 = vpop.f32.mrb[0].mxu0
        %v882 = vadd.f32 %v842, %v881
        %v883 = vpop.f32.mrb[0].mxu0
        %v884 = vadd.f32 %v842, %v883
        %v885 = vpop.f32.mrb[0].mxu0
        %v886 = vpop.f32.mrb[0].mxu0
        %887 = vdwg.mxu0
        %888 = vmatprep.subr.bf16.mxu0 %v836
        %889 = vmatpush1.bf16.msra.mxu0 %v835
        %890 = vmatprep.subr.bf16.mxu0 %v838
        %891 = vmatpush1.bf16.msra.mxu0 %v837
        %892 = vmatprep.subr.bf16.mxu0 0
        %893 = vmatpush1.bf16.msra.mxu0 0
        %894 = vmatprep.subr.bf16.mxu0 0
        %895 = vmatpush1.bf16.msra.mxu0 0
        %896 = vmatprep.subr.bf16.mxu0 0
        %897 = vmatpush1.bf16.msra.mxu0 0
        %898 = vmatprep.subr.bf16.mxu0 0
        %899 = vmatpush1.bf16.msra.mxu0 0
        %900 = vmatprep.subr.bf16.mxu0 0
        %901 = vmatpush1.bf16.msra.mxu0 0
        %902 = vmatprep.subr.bf16.mxu0 0
        %903 = vmatpush1.bf16.msra.mxu0 0
        %904 = vmatprep.subr.bf16.mxu0 0
        %905 = vmatpush1.bf16.msra.mxu0 0
        %906 = vmatprep.subr.bf16.mxu0 0
        %907 = vmatpush1.bf16.msra.mxu0 0
        %908 = vmatprep.subr.bf16.mxu0 0
        %909 = vmatpush1.bf16.msra.mxu0 0
        %910 = vmatprep.subr.bf16.mxu0 0
        %911 = vmatpush1.bf16.msra.mxu0 0
        %912 = vmatprep.subr.bf16.mxu0 0
        %913 = vmatpush1.bf16.msra.mxu0 0
        %914 = vmatprep.subr.bf16.mxu0 0
        %915 = vmatpush1.bf16.msra.mxu0 0
        %916 = vmatprep.subr.bf16.mxu0 0
        %917 = vmatpush1.bf16.msra.mxu0 0
        %918 = vmatprep.subr.bf16.mxu0 0
        %919 = vmatpush1.bf16.msra.mxu0 0
        %920 = vmatprep.mubr.bf16.mxu0 0
        %921 = vmatmul.mubr.bf16.gmra.mrb[0].mxu0 %v845
        %v922 = vpop.f32.mrb[0].mxu0
        %v923 = vadd.f32 %v842, %v922
        %v924 = vpop.f32.mrb[0].mxu0
        %v925 = vadd.f32 %v842, %v924
        %v926 = vpop.f32.mrb[0].mxu0
        %v927 = vpop.f32.mrb[0].mxu0
        %928 = vdwg.mxu0
        %v929 = vsub.f32 %v923, %v882
        %v930 = vsub.f32 %v925, %v884
        %v931 = vstv %s277
        %v932 = vmul.f32 %v931, %v929
        %v933 = vmul.f32 %v931, %v930
        %v934 = vadd.f32 %v882, %v932
        %v935 = vadd.f32 %v884, %v933
        %v936 = vstv %s275
        %v937 = vmul.f32 %v936, %v273
        %v938 = vmul.f32 %v936, %v274
        %v939 = vstv %s276
        %v940 = vmul.f32 %v939, %v934
        %v941 = vmul.f32 %v939, %v935
        %v942 = vadd.f32 %v937, %v940
        %v943 = vadd.f32 %v938, %v941
        %s944 = sld [smem:[#allocation2 + $0x4]]
        %s945 = sld [smem:[#allocation2 + $0x5]]
        %s946 = sld [smem:[#allocation2 + $0x6]]
        %v947 = vpack.c.bf16 %v942, %v942
        %v948 = vpack.c.bf16 %v943, %v943
        %s949 = scalar_lea.vmem %s1, 64
        %v950 = vld [vmem:[%s949] sm:$0xff]
        %v951 = vld [vmem:[%s949 + $0x8] sm:$0xff]
        %v952 = vld [vmem:[%s949 + $0x10] sm:$0xff]
        %v953 = vld [vmem:[%s949 + $0x18] sm:$0xff]
        %v954 = vld [vmem:[%s949 + $0x20] sm:$0xff]
        %v955 = vld [vmem:[%s949 + $0x28] sm:$0xff]
        %v956 = vld [vmem:[%s949 + $0x30] sm:$0xff]
        %v957 = vld [vmem:[%s949 + $0x38] sm:$0xff]
        %v959 = vsel %vm295, %v947, 0
        %v962 = vsel %vm295, %v948, 0
        %964 = vmatprep.subr.bf16.mxu0 %v962
        %965 = vmatpush1.bf16.msra.mxu0 %v959
        %966 = vmatprep.subr.bf16.mxu0 0
        %967 = vmatpush1.bf16.msra.mxu0 0
        %968 = vmatprep.subr.bf16.mxu0 0
        %969 = vmatpush1.bf16.msra.mxu0 0
        %970 = vmatprep.subr.bf16.mxu0 0
        %971 = vmatpush1.bf16.msra.mxu0 0
        %972 = vmatprep.subr.bf16.mxu0 0
        %973 = vmatpush1.bf16.msra.mxu0 0
        %974 = vmatprep.subr.bf16.mxu0 0
        %975 = vmatpush1.bf16.msra.mxu0 0
        %976 = vmatprep.subr.bf16.mxu0 0
        %977 = vmatpush1.bf16.msra.mxu0 0
        %978 = vmatprep.subr.bf16.mxu0 0
        %979 = vmatpush1.bf16.msra.mxu0 0
        %980 = vmatprep.subr.bf16.mxu0 0
        %981 = vmatpush1.bf16.msra.mxu0 0
        %982 = vmatprep.subr.bf16.mxu0 0
        %983 = vmatpush1.bf16.msra.mxu0 0
        %984 = vmatprep.subr.bf16.mxu0 0
        %985 = vmatpush1.bf16.msra.mxu0 0
        %986 = vmatprep.subr.bf16.mxu0 0
        %987 = vmatpush1.bf16.msra.mxu0 0
        %988 = vmatprep.subr.bf16.mxu0 0
        %989 = vmatpush1.bf16.msra.mxu0 0
        %990 = vmatprep.subr.bf16.mxu0 0
        %991 = vmatpush1.bf16.msra.mxu0 0
        %992 = vmatprep.subr.bf16.mxu0 0
        %993 = vmatpush1.bf16.msra.mxu0 0
        %994 = vmatprep.subr.bf16.mxu0 0
        %995 = vmatpush1.bf16.msra.mxu0 0
        %996 = vmatprep.mubr.bf16.mxu0 0
        %997 = vmatmul.mubr.bf16.gmra.mrb[0].mxu0 %v290
        %v998 = vpop.f32.mrb[0].mxu0
        %v999 = vadd.f32 %v950, %v998
        %v1000 = vpop.f32.mrb[0].mxu0
        %v1001 = vadd.f32 %v951, %v1000
        %v1002 = vpop.f32.mrb[0].mxu0
        %v1003 = vadd.f32 %v952, %v1002
        %v1004 = vpop.f32.mrb[0].mxu0
        %v1005 = vadd.f32 %v953, %v1004
        %1006 = vmatprep.mubr.bf16.mxu0 0
        %1007 = vmatmul.mubr.bf16.gmra.mrb[0].mxu0 %v293
        %v1008 = vpop.f32.mrb[0].mxu0
        %v1009 = vadd.f32 %v954, %v1008
        %v1010 = vpop.f32.mrb[0].mxu0
        %v1011 = vadd.f32 %v955, %v1010
        %v1012 = vpop.f32.mrb[0].mxu0
        %v1013 = vadd.f32 %v956, %v1012
        %v1014 = vpop.f32.mrb[0].mxu0
        %v1015 = vadd.f32 %v957, %v1014
        %1016 = vdwg.mxu0
        %v1017 = vpack.c.bf16 %v1003, %v999
        %v1018 = vpack.c.bf16 %v1005, %v1001
        %v1019 = vpack.c.bf16 %v1013, %v1009
        %v1020 = vpack.c.bf16 %v1015, %v1011
        %1021 = vmatprep.subr.bf16.mxu0 %v1018
        %1022 = vmatpush1.bf16.msra.mxu0 %v1017
        %1023 = vmatprep.subr.bf16.mxu0 %v1020
        %1024 = vmatpush1.bf16.msra.mxu0 %v1019
        %1025 = vmatprep.subr.bf16.mxu0 0
        %1026 = vmatpush1.bf16.msra.mxu0 0
        %1027 = vmatprep.subr.bf16.mxu0 0
        %1028 = vmatpush1.bf16.msra.mxu0 0
        %1029 = vmatprep.subr.bf16.mxu0 0
        %1030 = vmatpush1.bf16.msra.mxu0 0
        %1031 = vmatprep.subr.bf16.mxu0 0
        %1032 = vmatpush1.bf16.msra.mxu0 0
        %1033 = vmatprep.subr.bf16.mxu0 0
        %1034 = vmatpush1.bf16.msra.mxu0 0
        %1035 = vmatprep.subr.bf16.mxu0 0
        %1036 = vmatpush1.bf16.msra.mxu0 0
        %1037 = vmatprep.subr.bf16.mxu0 0
        %1038 = vmatpush1.bf16.msra.mxu0 0
        %1039 = vmatprep.subr.bf16.mxu0 0
        %1040 = vmatpush1.bf16.msra.mxu0 0
        %1041 = vmatprep.subr.bf16.mxu0 0
        %1042 = vmatpush1.bf16.msra.mxu0 0
        %1043 = vmatprep.subr.bf16.mxu0 0
        %1044 = vmatpush1.bf16.msra.mxu0 0
        %1045 = vmatprep.subr.bf16.mxu0 0
        %1046 = vmatpush1.bf16.msra.mxu0 0
        %1047 = vmatprep.subr.bf16.mxu0 0
        %1048 = vmatpush1.bf16.msra.mxu0 0
        %1049 = vmatprep.subr.bf16.mxu0 0
        %1050 = vmatpush1.bf16.msra.mxu0 0
        %1051 = vmatprep.subr.bf16.mxu0 0
        %1052 = vmatpush1.bf16.msra.mxu0 0
        %1053 = vmatprep.mubr.bf16.mxu0 0
        %1054 = vmatmul.mubr.bf16.gmra.mrb[0].mxu0 %v361
        %v1055 = vpop.f32.mrb[0].mxu0
        %v1056 = vadd.f32 0.0, %v1055
        %v1057 = vpop.f32.mrb[0].mxu0
        %v1058 = vadd.f32 0.0, %v1057
        %v1059 = vpop.f32.mrb[0].mxu0
        %v1060 = vadd.f32 0.0, %v1059
        %v1061 = vpop.f32.mrb[0].mxu0
        %v1062 = vadd.f32 0.0, %v1061
        %1063 = vmatprep.mubr.bf16.mxu0 0
        %1064 = vmatmul.mubr.bf16.gmra.mrb[0].mxu0 %v364
        %v1065 = vpop.f32.mrb[0].mxu0
        %v1066 = vadd.f32 0.0, %v1065
        %v1067 = vpop.f32.mrb[0].mxu0
        %v1068 = vadd.f32 0.0, %v1067
        %v1069 = vpop.f32.mrb[0].mxu0
        %v1070 = vadd.f32 0.0, %v1069
        %v1071 = vpop.f32.mrb[0].mxu0
        %v1072 = vadd.f32 0.0, %v1071
        %1073 = vdwg.mxu0
        %v1074 = vpack.c.bf16 %v1060, %v1056
        %v1075 = vpack.c.bf16 %v1062, %v1058
        %v1076 = vpack.c.bf16 %v1070, %v1066
        %v1077 = vpack.c.bf16 %v1072, %v1068
        %1078 = vmatprep.subr.bf16.mxu0 %v1075
        %1079 = vmatpush1.bf16.msra.mxu0 %v1074
        %1080 = vmatprep.subr.bf16.mxu0 %v1077
        %1081 = vmatpush1.bf16.msra.mxu0 %v1076
        %1082 = vmatprep.subr.bf16.mxu0 0
        %1083 = vmatpush1.bf16.msra.mxu0 0
        %1084 = vmatprep.subr.bf16.mxu0 0
        %1085 = vmatpush1.bf16.msra.mxu0 0
        %1086 = vmatprep.subr.bf16.mxu0 0
        %1087 = vmatpush1.bf16.msra.mxu0 0
        %1088 = vmatprep.subr.bf16.mxu0 0
        %1089 = vmatpush1.bf16.msra.mxu0 0
        %1090 = vmatprep.subr.bf16.mxu0 0
        %1091 = vmatpush1.bf16.msra.mxu0 0
        %1092 = vmatprep.subr.bf16.mxu0 0
        %1093 = vmatpush1.bf16.msra.mxu0 0
        %1094 = vmatprep.subr.bf16.mxu0 0
        %1095 = vmatpush1.bf16.msra.mxu0 0
        %1096 = vmatprep.subr.bf16.mxu0 0
        %1097 = vmatpush1.bf16.msra.mxu0 0
        %1098 = vmatprep.subr.bf16.mxu0 0
        %1099 = vmatpush1.bf16.msra.mxu0 0
        %1100 = vmatprep.subr.bf16.mxu0 0
        %1101 = vmatpush1.bf16.msra.mxu0 0
        %1102 = vmatprep.subr.bf16.mxu0 0
        %1103 = vmatpush1.bf16.msra.mxu0 0
        %1104 = vmatprep.subr.bf16.mxu0 0
        %1105 = vmatpush1.bf16.msra.mxu0 0
        %1106 = vmatprep.subr.bf16.mxu0 0
        %1107 = vmatpush1.bf16.msra.mxu0 0
        %1108 = vmatprep.subr.bf16.mxu0 0
        %1109 = vmatpush1.bf16.msra.mxu0 0
        %1110 = vmatprep.mubr.bf16.mxu0 0
        %1111 = vmatmul.mubr.bf16.gmra.mrb[0].mxu0 %v424
        %v1112 = vpop.f32.mrb[0].mxu0
        %v1113 = vadd.f32 0.0, %v1112
        %v1114 = vpop.f32.mrb[0].mxu0
        %v1115 = vadd.f32 0.0, %v1114
        %v1116 = vpop.f32.mrb[0].mxu0
        %v1117 = vadd.f32 0.0, %v1116
        %v1118 = vpop.f32.mrb[0].mxu0
        %v1119 = vadd.f32 0.0, %v1118
        %1120 = vdwg.mxu0
        %v1121 = vrot.slane %v1113, 4
        %v1122 = vmax.f32 %v1113, %v1121
        %v1123 = vrot.slane %v1122, 2
        %v1124 = vmax.f32 %v1122, %v1123
        %v1125 = vrot.slane %v1124, 1
        %v1126 = vmax.f32 %v1124, %v1125
        %v1127 = vrot.slane %v1115, 4
        %v1128 = vmax.f32 %v1115, %v1127
        %v1129 = vrot.slane %v1128, 2
        %v1130 = vmax.f32 %v1128, %v1129
        %v1131 = vrot.slane %v1130, 1
        %v1132 = vmax.f32 %v1130, %v1131
        %v1133 = vsub.f32 %v1113, %v1126
        %v1134 = vsub.f32 %v1115, %v1132
        %v1135 = vmul.f32 %v1133, 1.442695
        %v1136 = vpow.pop %v1135
        %v1137 = vmul.f32 %v1134, 1.442695
        %v1138 = vpow.pop %v1137
        %v1139 = vrot.slane %v1136, 4
        %v1140 = vadd.f32 %v1136, %v1139
        %v1141 = vrot.slane %v1140, 2
        %v1142 = vadd.f32 %v1140, %v1141
        %v1143 = vrot.slane %v1142, 1
        %v1144 = vadd.f32 %v1142, %v1143
        %v1145 = vrot.slane %v1138, 4
        %v1146 = vadd.f32 %v1138, %v1145
        %v1147 = vrot.slane %v1146, 2
        %v1148 = vadd.f32 %v1146, %v1147
        %v1149 = vrot.slane %v1148, 1
        %v1150 = vadd.f32 %v1148, %v1149
        %v1151 = vrcp.pop %v1144
        %v1152 = vrcp.pop %v1150
        %v1153 = vmul.f32 %v1136, %v1151
        %v1154 = vmul.f32 %v1138, %v1152
        %v1155 = vpack.c.bf16 %v1153, %v1153
        %v1156 = vpack.c.bf16 %v1154, %v1154
        %v1157 = vrot.slane %v1117, 4
        %v1158 = vmax.f32 %v1117, %v1157
        %v1159 = vrot.slane %v1158, 2
        %v1160 = vmax.f32 %v1158, %v1159
        %v1161 = vrot.slane %v1160, 1
        %v1162 = vmax.f32 %v1160, %v1161
        %v1163 = vrot.slane %v1119, 4
        %v1164 = vmax.f32 %v1119, %v1163
        %v1165 = vrot.slane %v1164, 2
        %v1166 = vmax.f32 %v1164, %v1165
        %v1167 = vrot.slane %v1166, 1
        %v1168 = vmax.f32 %v1166, %v1167
        %v1169 = vsub.f32 %v1117, %v1162
        %v1170 = vsub.f32 %v1119, %v1168
        %v1171 = vmul.f32 %v1169, 1.442695
        %v1172 = vpow.pop %v1171
        %v1173 = vmul.f32 %v1170, 1.442695
        %v1174 = vpow.pop %v1173
        %v1175 = vrot.slane %v1172, 4
        %v1176 = vadd.f32 %v1172, %v1175
        %v1177 = vrot.slane %v1176, 2
        %v1178 = vadd.f32 %v1176, %v1177
        %v1179 = vrot.slane %v1178, 1
        %v1180 = vadd.f32 %v1178, %v1179
        %v1181 = vrot.slane %v1174, 4
        %v1182 = vadd.f32 %v1174, %v1181
        %v1183 = vrot.slane %v1182, 2
        %v1184 = vadd.f32 %v1182, %v1183
        %v1185 = vrot.slane %v1184, 1
        %v1186 = vadd.f32 %v1184, %v1185
        %v1187 = vrcp.pop %v1180
        %v1188 = vrcp.pop %v1186
        %v1189 = vmul.f32 %v1172, %v1187
        %v1190 = vmul.f32 %v1174, %v1188
        %v1191 = vpack.c.bf16 %v1189, %v1189
        %v1192 = vpack.c.bf16 %v1190, %v1190
        %v1194 = vsel %vm295, %v1155, 0
        %v1197 = vsel %vm295, %v1156, 0
        %1199 = vmatprep.subr.bf16.mxu0 %v1197
        %1200 = vmatpush1.bf16.msra.mxu0 %v1194
        %1201 = vmatprep.subr.bf16.mxu0 0
        %1202 = vmatpush1.bf16.msra.mxu0 0
        %1203 = vmatprep.subr.bf16.mxu0 0
        %1204 = vmatpush1.bf16.msra.mxu0 0
        %1205 = vmatprep.subr.bf16.mxu0 0
        %1206 = vmatpush1.bf16.msra.mxu0 0
        %1207 = vmatprep.subr.bf16.mxu0 0
        %1208 = vmatpush1.bf16.msra.mxu0 0
        %1209 = vmatprep.subr.bf16.mxu0 0
        %1210 = vmatpush1.bf16.msra.mxu0 0
        %1211 = vmatprep.subr.bf16.mxu0 0
        %1212 = vmatpush1.bf16.msra.mxu0 0
        %1213 = vmatprep.subr.bf16.mxu0 0
        %1214 = vmatpush1.bf16.msra.mxu0 0
        %1215 = vmatprep.subr.bf16.mxu0 0
        %1216 = vmatpush1.bf16.msra.mxu0 0
        %1217 = vmatprep.subr.bf16.mxu0 0
        %1218 = vmatpush1.bf16.msra.mxu0 0
        %1219 = vmatprep.subr.bf16.mxu0 0
        %1220 = vmatpush1.bf16.msra.mxu0 0
        %1221 = vmatprep.subr.bf16.mxu0 0
        %1222 = vmatpush1.bf16.msra.mxu0 0
        %1223 = vmatprep.subr.bf16.mxu0 0
        %1224 = vmatpush1.bf16.msra.mxu0 0
        %1225 = vmatprep.subr.bf16.mxu0 0
        %1226 = vmatpush1.bf16.msra.mxu0 0
        %1227 = vmatprep.subr.bf16.mxu0 0
        %1228 = vmatpush1.bf16.msra.mxu0 0
        %1229 = vmatprep.subr.bf16.mxu0 0
        %1230 = vmatpush1.bf16.msra.mxu0 0
        %1231 = vmatprep.mubr.bf16.mxu0 0
        %1232 = vmatmul.mubr.bf16.gmra.mrb[0].mxu0 %v542
        %v1233 = vpop.f32.mrb[0].mxu0
        %v1234 = vadd.f32 0.0, %v1233
        %v1235 = vpop.f32.mrb[0].mxu0
        %v1236 = vadd.f32 0.0, %v1235
        %v1237 = vpop.f32.mrb[0].mxu0
        %v1238 = vadd.f32 0.0, %v1237
        %v1239 = vpop.f32.mrb[0].mxu0
        %v1240 = vadd.f32 0.0, %v1239
        %1241 = vmatprep.mubr.bf16.mxu0 0
        %1242 = vmatmul.mubr.bf16.gmra.mrb[0].mxu0 %v545
        %v1243 = vpop.f32.mrb[0].mxu0
        %v1244 = vadd.f32 0.0, %v1243
        %v1245 = vpop.f32.mrb[0].mxu0
        %v1246 = vadd.f32 0.0, %v1245
        %v1247 = vpop.f32.mrb[0].mxu0
        %v1248 = vadd.f32 0.0, %v1247
        %v1249 = vpop.f32.mrb[0].mxu0
        %v1250 = vadd.f32 0.0, %v1249
        %1251 = vdwg.mxu0
        %v1252 = vadd.f32 %v999, %v1234
        %v1253 = vadd.f32 %v1001, %v1236
        %v1254 = vadd.f32 %v1003, %v1238
        %v1255 = vadd.f32 %v1005, %v1240
        %v1256 = vadd.f32 %v1009, %v1244
        %v1257 = vadd.f32 %v1011, %v1246
        %v1258 = vadd.f32 %v1013, %v1248
        %v1259 = vadd.f32 %v1015, %v1250
        %v1260 = vmul.f32 %v1252, %v1252
        %v1261 = vmul.f32 %v1253, %v1253
        %v1262 = vmul.f32 %v1254, %v1254
        %v1263 = vmul.f32 %v1255, %v1255
        %v1264 = vmul.f32 %v1256, %v1256
        %v1265 = vmul.f32 %v1257, %v1257
        %v1266 = vmul.f32 %v1258, %v1258
        %v1267 = vmul.f32 %v1259, %v1259
        %v1268 = vmul.f32 %v1252, %v1260
        %v1269 = vmul.f32 %v1253, %v1261
        %v1270 = vmul.f32 %v1254, %v1262
        %v1271 = vmul.f32 %v1255, %v1263
        %v1272 = vmul.f32 %v1256, %v1264
        %v1273 = vmul.f32 %v1257, %v1265
        %v1274 = vmul.f32 %v1258, %v1266
        %v1275 = vmul.f32 %v1259, %v1267
        %v1276 = vmul.f32 %v1268, 0.044715
        %v1277 = vmul.f32 %v1269, 0.044715
        %v1278 = vmul.f32 %v1270, 0.044715
        %v1279 = vmul.f32 %v1271, 0.044715
        %v1280 = vmul.f32 %v1272, 0.044715
        %v1281 = vmul.f32 %v1273, 0.044715
        %v1282 = vmul.f32 %v1274, 0.044715
        %v1283 = vmul.f32 %v1275, 0.044715
        %v1284 = vadd.f32 %v1252, %v1276
        %v1285 = vadd.f32 %v1253, %v1277
        %v1286 = vadd.f32 %v1254, %v1278
        %v1287 = vadd.f32 %v1255, %v1279
        %v1288 = vadd.f32 %v1256, %v1280
        %v1289 = vadd.f32 %v1257, %v1281
        %v1290 = vadd.f32 %v1258, %v1282
        %v1291 = vadd.f32 %v1259, %v1283
        %v1292 = vmul.f32 %v1284, 0.7978846
        %v1293 = vmul.f32 %v1285, 0.7978846
        %v1294 = vmul.f32 %v1286, 0.7978846
        %v1295 = vmul.f32 %v1287, 0.7978846
        %v1296 = vmul.f32 %v1288, 0.7978846
        %v1297 = vmul.f32 %v1289, 0.7978846
        %v1298 = vmul.f32 %v1290, 0.7978846
        %v1299 = vmul.f32 %v1291, 0.7978846
        %v1300 = vtanh.pop %v1292
        %v1301 = vtanh.pop %v1293
        %v1302 = vtanh.pop %v1294
        %v1303 = vtanh.pop %v1295
        %v1304 = vtanh.pop %v1296
        %v1305 = vtanh.pop %v1297
        %v1306 = vtanh.pop %v1298
        %v1307 = vtanh.pop %v1299
        %v1308 = vadd.f32 %v1300, 1.0
        %v1309 = vadd.f32 %v1301, 1.0
        %v1310 = vadd.f32 %v1302, 1.0
        %v1311 = vadd.f32 %v1303, 1.0
        %v1312 = vadd.f32 %v1304, 1.0
        %v1313 = vadd.f32 %v1305, 1.0
        %v1314 = vadd.f32 %v1306, 1.0
        %v1315 = vadd.f32 %v1307, 1.0
        %v1316 = vmul.f32 %v1308, 0.5
        %v1317 = vmul.f32 %v1309, 0.5
        %v1318 = vmul.f32 %v1310, 0.5
        %v1319 = vmul.f32 %v1311, 0.5
        %v1320 = vmul.f32 %v1312, 0.5
        %v1321 = vmul.f32 %v1313, 0.5
        %v1322 = vmul.f32 %v1314, 0.5
        %v1323 = vmul.f32 %v1315, 0.5
        %v1324 = vmul.f32 %v1252, %v1316
        %v1325 = vmul.f32 %v1253, %v1317
        %v1326 = vmul.f32 %v1254, %v1318
        %v1327 = vmul.f32 %v1255, %v1319
        %v1328 = vmul.f32 %v1256, %v1320
        %v1329 = vmul.f32 %v1257, %v1321
        %v1330 = vmul.f32 %v1258, %v1322
        %v1331 = vmul.f32 %v1259, %v1323
        %v1332 = vpack.c.bf16 %v1326, %v1324
        %v1333 = vpack.c.bf16 %v1327, %v1325
        %v1334 = vpack.c.bf16 %v1330, %v1328
        %v1335 = vpack.c.bf16 %v1331, %v1329
        %v1337 = vsel %vm295, %v1191, 0
        %v1340 = vsel %vm295, %v1192, 0
        %1342 = vmatprep.subr.bf16.mxu0 %v1340
        %1343 = vmatpush1.bf16.msra.mxu0 %v1337
        %1344 = vmatprep.subr.bf16.mxu0 0
        %1345 = vmatpush1.bf16.msra.mxu0 0
        %1346 = vmatprep.subr.bf16.mxu0 0
        %1347 = vmatpush1.bf16.msra.mxu0 0
        %1348 = vmatprep.subr.bf16.mxu0 0
        %1349 = vmatpush1.bf16.msra.mxu0 0
        %1350 = vmatprep.subr.bf16.mxu0 0
        %1351 = vmatpush1.bf16.msra.mxu0 0
        %1352 = vmatprep.subr.bf16.mxu0 0
        %1353 = vmatpush1.bf16.msra.mxu0 0
        %1354 = vmatprep.subr.bf16.mxu0 0
        %1355 = vmatpush1.bf16.msra.mxu0 0
        %1356 = vmatprep.subr.bf16.mxu0 0
        %1357 = vmatpush1.bf16.msra.mxu0 0
        %1358 = vmatprep.subr.bf16.mxu0 0
        %1359 = vmatpush1.bf16.msra.mxu0 0
        %1360 = vmatprep.subr.bf16.mxu0 0
        %1361 = vmatpush1.bf16.msra.mxu0 0
        %1362 = vmatprep.subr.bf16.mxu0 0
        %1363 = vmatpush1.bf16.msra.mxu0 0
        %1364 = vmatprep.subr.bf16.mxu0 0
        %1365 = vmatpush1.bf16.msra.mxu0 0
        %1366 = vmatprep.subr.bf16.mxu0 0
        %1367 = vmatpush1.bf16.msra.mxu0 0
        %1368 = vmatprep.subr.bf16.mxu0 0
        %1369 = vmatpush1.bf16.msra.mxu0 0
        %1370 = vmatprep.subr.bf16.mxu0 0
        %1371 = vmatpush1.bf16.msra.mxu0 0
        %1372 = vmatprep.subr.bf16.mxu0 0
        %1373 = vmatpush1.bf16.msra.mxu0 0
        %1374 = vmatprep.mubr.bf16.mxu0 0
        %1375 = vmatmul.mubr.bf16.gmra.mrb[0].mxu0 %v691
        %v1376 = vpop.f32.mrb[0].mxu0
        %v1377 = vadd.f32 0.0, %v1376
        %v1378 = vpop.f32.mrb[0].mxu0
        %v1379 = vadd.f32 0.0, %v1378
        %v1380 = vpop.f32.mrb[0].mxu0
        %v1381 = vadd.f32 0.0, %v1380
        %v1382 = vpop.f32.mrb[0].mxu0
        %v1383 = vadd.f32 0.0, %v1382
        %1384 = vmatprep.mubr.bf16.mxu0 0
        %1385 = vmatmul.mubr.bf16.gmra.mrb[0].mxu0 %v694
        %v1386 = vpop.f32.mrb[0].mxu0
        %v1387 = vadd.f32 0.0, %v1386
        %v1388 = vpop.f32.mrb[0].mxu0
        %v1389 = vadd.f32 0.0, %v1388
        %v1390 = vpop.f32.mrb[0].mxu0
        %v1391 = vadd.f32 0.0, %v1390
        %v1392 = vpop.f32.mrb[0].mxu0
        %v1393 = vadd.f32 0.0, %v1392
        %1394 = vdwg.mxu0
        %v1395 = vadd.f32 %v999, %v1377
        %v1396 = vadd.f32 %v1001, %v1379
        %v1397 = vadd.f32 %v1003, %v1381
        %v1398 = vadd.f32 %v1005, %v1383
        %v1399 = vadd.f32 %v1009, %v1387
        %v1400 = vadd.f32 %v1011, %v1389
        %v1401 = vadd.f32 %v1013, %v1391
        %v1402 = vadd.f32 %v1015, %v1393
        %v1403 = vmul.f32 %v1395, %v1395
        %v1404 = vmul.f32 %v1396, %v1396
        %v1405 = vmul.f32 %v1397, %v1397
        %v1406 = vmul.f32 %v1398, %v1398
        %v1407 = vmul.f32 %v1399, %v1399
        %v1408 = vmul.f32 %v1400, %v1400
        %v1409 = vmul.f32 %v1401, %v1401
        %v1410 = vmul.f32 %v1402, %v1402
        %v1411 = vmul.f32 %v1395, %v1403
        %v1412 = vmul.f32 %v1396, %v1404
        %v1413 = vmul.f32 %v1397, %v1405
        %v1414 = vmul.f32 %v1398, %v1406
        %v1415 = vmul.f32 %v1399, %v1407
        %v1416 = vmul.f32 %v1400, %v1408
        %v1417 = vmul.f32 %v1401, %v1409
        %v1418 = vmul.f32 %v1402, %v1410
        %v1419 = vmul.f32 %v1411, 0.044715
        %v1420 = vmul.f32 %v1412, 0.044715
        %v1421 = vmul.f32 %v1413, 0.044715
        %v1422 = vmul.f32 %v1414, 0.044715
        %v1423 = vmul.f32 %v1415, 0.044715
        %v1424 = vmul.f32 %v1416, 0.044715
        %v1425 = vmul.f32 %v1417, 0.044715
        %v1426 = vmul.f32 %v1418, 0.044715
        %v1427 = vadd.f32 %v1395, %v1419
        %v1428 = vadd.f32 %v1396, %v1420
        %v1429 = vadd.f32 %v1397, %v1421
        %v1430 = vadd.f32 %v1398, %v1422
        %v1431 = vadd.f32 %v1399, %v1423
        %v1432 = vadd.f32 %v1400, %v1424
        %v1433 = vadd.f32 %v1401, %v1425
        %v1434 = vadd.f32 %v1402, %v1426
        %v1435 = vmul.f32 %v1427, 0.7978846
        %v1436 = vmul.f32 %v1428, 0.7978846
        %v1437 = vmul.f32 %v1429, 0.7978846
        %v1438 = vmul.f32 %v1430, 0.7978846
        %v1439 = vmul.f32 %v1431, 0.7978846
        %v1440 = vmul.f32 %v1432, 0.7978846
        %v1441 = vmul.f32 %v1433, 0.7978846
        %v1442 = vmul.f32 %v1434, 0.7978846
        %v1443 = vtanh.pop %v1435
        %v1444 = vtanh.pop %v1436
        %v1445 = vtanh.pop %v1437
        %v1446 = vtanh.pop %v1438
        %v1447 = vtanh.pop %v1439
        %v1448 = vtanh.pop %v1440
        %v1449 = vtanh.pop %v1441
        %v1450 = vtanh.pop %v1442
        %v1451 = vadd.f32 %v1443, 1.0
        %v1452 = vadd.f32 %v1444, 1.0
        %v1453 = vadd.f32 %v1445, 1.0
        %v1454 = vadd.f32 %v1446, 1.0
        %v1455 = vadd.f32 %v1447, 1.0
        %v1456 = vadd.f32 %v1448, 1.0
        %v1457 = vadd.f32 %v1449, 1.0
        %v1458 = vadd.f32 %v1450, 1.0
        %v1459 = vmul.f32 %v1451, 0.5
        %v1460 = vmul.f32 %v1452, 0.5
        %v1461 = vmul.f32 %v1453, 0.5
        %v1462 = vmul.f32 %v1454, 0.5
        %v1463 = vmul.f32 %v1455, 0.5
        %v1464 = vmul.f32 %v1456, 0.5
        %v1465 = vmul.f32 %v1457, 0.5
        %v1466 = vmul.f32 %v1458, 0.5
        %v1467 = vmul.f32 %v1395, %v1459
        %v1468 = vmul.f32 %v1396, %v1460
        %v1469 = vmul.f32 %v1397, %v1461
        %v1470 = vmul.f32 %v1398, %v1462
        %v1471 = vmul.f32 %v1399, %v1463
        %v1472 = vmul.f32 %v1400, %v1464
        %v1473 = vmul.f32 %v1401, %v1465
        %v1474 = vmul.f32 %v1402, %v1466
        %v1475 = vpack.c.bf16 %v1469, %v1467
        %v1476 = vpack.c.bf16 %v1470, %v1468
        %v1477 = vpack.c.bf16 %v1473, %v1471
        %v1478 = vpack.c.bf16 %v1474, %v1472
        %1479 = vmatprep.subr.bf16.mxu0 %v1333
        %1480 = vmatpush1.bf16.msra.mxu0 %v1332
        %1481 = vmatprep.subr.bf16.mxu0 %v1335
        %1482 = vmatpush1.bf16.msra.mxu0 %v1334
        %1483 = vmatprep.subr.bf16.mxu0 0
        %1484 = vmatpush1.bf16.msra.mxu0 0
        %1485 = vmatprep.subr.bf16.mxu0 0
        %1486 = vmatpush1.bf16.msra.mxu0 0
        %1487 = vmatprep.subr.bf16.mxu0 0
        %1488 = vmatpush1.bf16.msra.mxu0 0
        %1489 = vmatprep.subr.bf16.mxu0 0
        %1490 = vmatpush1.bf16.msra.mxu0 0
        %1491 = vmatprep.subr.bf16.mxu0 0
        %1492 = vmatpush1.bf16.msra.mxu0 0
        %1493 = vmatprep.subr.bf16.mxu0 0
        %1494 = vmatpush1.bf16.msra.mxu0 0
        %1495 = vmatprep.subr.bf16.mxu0 0
        %1496 = vmatpush1.bf16.msra.mxu0 0
        %1497 = vmatprep.subr.bf16.mxu0 0
        %1498 = vmatpush1.bf16.msra.mxu0 0
        %1499 = vmatprep.subr.bf16.mxu0 0
        %1500 = vmatpush1.bf16.msra.mxu0 0
        %1501 = vmatprep.subr.bf16.mxu0 0
        %1502 = vmatpush1.bf16.msra.mxu0 0
        %1503 = vmatprep.subr.bf16.mxu0 0
        %1504 = vmatpush1.bf16.msra.mxu0 0
        %1505 = vmatprep.subr.bf16.mxu0 0
        %1506 = vmatpush1.bf16.msra.mxu0 0
        %1507 = vmatprep.subr.bf16.mxu0 0
        %1508 = vmatpush1.bf16.msra.mxu0 0
        %1509 = vmatprep.subr.bf16.mxu0 0
        %1510 = vmatpush1.bf16.msra.mxu0 0
        %1511 = vmatprep.mubr.bf16.mxu0 0
        %1512 = vmatmul.mubr.bf16.gmra.mrb[0].mxu0 %v845
        %v1513 = vpop.f32.mrb[0].mxu0
        %v1514 = vadd.f32 %v842, %v1513
        %v1515 = vpop.f32.mrb[0].mxu0
        %v1516 = vadd.f32 %v842, %v1515
        %v1517 = vpop.f32.mrb[0].mxu0
        %v1518 = vpop.f32.mrb[0].mxu0
        %1519 = vdwg.mxu0
        %1520 = vmatprep.subr.bf16.mxu0 %v1476
        %1521 = vmatpush1.bf16.msra.mxu0 %v1475
        %1522 = vmatprep.subr.bf16.mxu0 %v1478
        %1523 = vmatpush1.bf16.msra.mxu0 %v1477
        %1524 = vmatprep.subr.bf16.mxu0 0
        %1525 = vmatpush1.bf16.msra.mxu0 0
        %1526 = vmatprep.subr.bf16.mxu0 0
        %1527 = vmatpush1.bf16.msra.mxu0 0
        %1528 = vmatprep.subr.bf16.mxu0 0
        %1529 = vmatpush1.bf16.msra.mxu0 0
        %1530 = vmatprep.subr.bf16.mxu0 0
        %1531 = vmatpush1.bf16.msra.mxu0 0
        %1532 = vmatprep.subr.bf16.mxu0 0
        %1533 = vmatpush1.bf16.msra.mxu0 0
        %1534 = vmatprep.subr.bf16.mxu0 0
        %1535 = vmatpush1.bf16.msra.mxu0 0
        %1536 = vmatprep.subr.bf16.mxu0 0
        %1537 = vmatpush1.bf16.msra.mxu0 0
        %1538 = vmatprep.subr.bf16.mxu0 0
        %1539 = vmatpush1.bf16.msra.mxu0 0
        %1540 = vmatprep.subr.bf16.mxu0 0
        %1541 = vmatpush1.bf16.msra.mxu0 0
        %1542 = vmatprep.subr.bf16.mxu0 0
        %1543 = vmatpush1.bf16.msra.mxu0 0
        %1544 = vmatprep.subr.bf16.mxu0 0
        %1545 = vmatpush1.bf16.msra.mxu0 0
        %1546 = vmatprep.subr.bf16.mxu0 0
        %1547 = vmatpush1.bf16.msra.mxu0 0
        %1548 = vmatprep.subr.bf16.mxu0 0
        %1549 = vmatpush1.bf16.msra.mxu0 0
        %1550 = vmatprep.subr.bf16.mxu0 0
        %1551 = vmatpush1.bf16.msra.mxu0 0
        %1552 = vmatprep.mubr.bf16.mxu0 0
        %1553 = vmatmul.mubr.bf16.gmra.mrb[0].mxu0 %v845
        %v1554 = vpop.f32.mrb[0].mxu0
        %v1555 = vadd.f32 %v842, %v1554
        %v1556 = vpop.f32.mrb[0].mxu0
        %v1557 = vadd.f32 %v842, %v1556
        %v1558 = vpop.f32.mrb[0].mxu0
        %v1559 = vpop.f32.mrb[0].mxu0
        %1560 = vdwg.mxu0
        %v1561 = vsub.f32 %v1555, %v1514
        %v1562 = vsub.f32 %v1557, %v1516
        %v1563 = vstv %s946
        %v1564 = vmul.f32 %v1563, %v1561
        %v1565 = vmul.f32 %v1563, %v1562
        %v1566 = vadd.f32 %v1514, %v1564
        %v1567 = vadd.f32 %v1516, %v1565
        %v1568 = vstv %s944
        %v1569 = vmul.f32 %v1568, %v942
        %v1570 = vmul.f32 %v1568, %v943
        %v1571 = vstv %s945
        %v1572 = vmul.f32 %v1571, %v1566
        %v1573 = vmul.f32 %v1571, %v1567
        %v1574 = vadd.f32 %v1569, %v1572
        %v1575 = vadd.f32 %v1570, %v1573
        %s1576 = sld [smem:[#allocation2 + $0x8]]
        %s1577 = sld [smem:[#allocation2 + $0x9]]
        %s1578 = sld [smem:[#allocation2 + $0xa]]
        %v1579 = vpack.c.bf16 %v1574, %v1574
        %v1580 = vpack.c.bf16 %v1575, %v1575
        %s1581 = scalar_lea.vmem %s1, 128
        %v1582 = vld [vmem:[%s1581] sm:$0xff]
        %v1583 = vld [vmem:[%s1581 + $0x8] sm:$0xff]
        %v1584 = vld [vmem:[%s1581 + $0x10] sm:$0xff]
        %v1585 = vld [vmem:[%s1581 + $0x18] sm:$0xff]
        %v1586 = vld [vmem:[%s1581 + $0x20] sm:$0xff]
        %v1587 = vld [vmem:[%s1581 + $0x28] sm:$0xff]
        %v1588 = vld [vmem:[%s1581 + $0x30] sm:$0xff]
        %v1589 = vld [vmem:[%s1581 + $0x38] sm:$0xff]
        %v1591 = vsel %vm295, %v1579, 0
        %v1594 = vsel %vm295, %v1580, 0
        %1596 = vmatprep.subr.bf16.mxu0 %v1594
        %1597 = vmatpush1.bf16.msra.mxu0 %v1591
        %1598 = vmatprep.subr.bf16.mxu0 0
        %1599 = vmatpush1.bf16.msra.mxu0 0
        %1600 = vmatprep.subr.bf16.mxu0 0
        %1601 = vmatpush1.bf16.msra.mxu0 0
        %1602 = vmatprep.subr.bf16.mxu0 0
        %1603 = vmatpush1.bf16.msra.mxu0 0
        %1604 = vmatprep.subr.bf16.mxu0 0
        %1605 = vmatpush1.bf16.msra.mxu0 0
        %1606 = vmatprep.subr.bf16.mxu0 0
        %1607 = vmatpush1.bf16.msra.mxu0 0
        %1608 = vmatprep.subr.bf16.mxu0 0
        %1609 = vmatpush1.bf16.msra.mxu0 0
        %1610 = vmatprep.subr.bf16.mxu0 0
        %1611 = vmatpush1.bf16.msra.mxu0 0
        %1612 = vmatprep.subr.bf16.mxu0 0
        %1613 = vmatpush1.bf16.msra.mxu0 0
        %1614 = vmatprep.subr.bf16.mxu0 0
        %1615 = vmatpush1.bf16.msra.mxu0 0
        %1616 = vmatprep.subr.bf16.mxu0 0
        %1617 = vmatpush1.bf16.msra.mxu0 0
        %1618 = vmatprep.subr.bf16.mxu0 0
        %1619 = vmatpush1.bf16.msra.mxu0 0
        %1620 = vmatprep.subr.bf16.mxu0 0
        %1621 = vmatpush1.bf16.msra.mxu0 0
        %1622 = vmatprep.subr.bf16.mxu0 0
        %1623 = vmatpush1.bf16.msra.mxu0 0
        %1624 = vmatprep.subr.bf16.mxu0 0
        %1625 = vmatpush1.bf16.msra.mxu0 0
        %1626 = vmatprep.subr.bf16.mxu0 0
        %1627 = vmatpush1.bf16.msra.mxu0 0
        %1628 = vmatprep.mubr.bf16.mxu0 0
        %1629 = vmatmul.mubr.bf16.gmra.mrb[0].mxu0 %v290
        %v1630 = vpop.f32.mrb[0].mxu0
        %v1631 = vadd.f32 %v1582, %v1630
        %v1632 = vpop.f32.mrb[0].mxu0
        %v1633 = vadd.f32 %v1583, %v1632
        %v1634 = vpop.f32.mrb[0].mxu0
        %v1635 = vadd.f32 %v1584, %v1634
        %v1636 = vpop.f32.mrb[0].mxu0
        %v1637 = vadd.f32 %v1585, %v1636
        %1638 = vmatprep.mubr.bf16.mxu0 0
        %1639 = vmatmul.mubr.bf16.gmra.mrb[0].mxu0 %v293
        %v1640 = vpop.f32.mrb[0].mxu0
        %v1641 = vadd.f32 %v1586, %v1640
        %v1642 = vpop.f32.mrb[0].mxu0
        %v1643 = vadd.f32 %v1587, %v1642
        %v1644 = vpop.f32.mrb[0].mxu0
        %v1645 = vadd.f32 %v1588, %v1644
        %v1646 = vpop.f32.mrb[0].mxu0
        %v1647 = vadd.f32 %v1589, %v1646
        %1648 = vdwg.mxu0
        %v1649 = vpack.c.bf16 %v1635, %v1631
        %v1650 = vpack.c.bf16 %v1637, %v1633
        %v1651 = vpack.c.bf16 %v1645, %v1641
        %v1652 = vpack.c.bf16 %v1647, %v1643
        %1653 = vmatprep.subr.bf16.mxu0 %v1650
        %1654 = vmatpush1.bf16.msra.mxu0 %v1649
        %1655 = vmatprep.subr.bf16.mxu0 %v1652
        %1656 = vmatpush1.bf16.msra.mxu0 %v1651
        %1657 = vmatprep.subr.bf16.mxu0 0
        %1658 = vmatpush1.bf16.msra.mxu0 0
        %1659 = vmatprep.subr.bf16.mxu0 0
        %1660 = vmatpush1.bf16.msra.mxu0 0
        %1661 = vmatprep.subr.bf16.mxu0 0
        %1662 = vmatpush1.bf16.msra.mxu0 0
        %1663 = vmatprep.subr.bf16.mxu0 0
        %1664 = vmatpush1.bf16.msra.mxu0 0
        %1665 = vmatprep.subr.bf16.mxu0 0
        %1666 = vmatpush1.bf16.msra.mxu0 0
        %1667 = vmatprep.subr.bf16.mxu0 0
        %1668 = vmatpush1.bf16.msra.mxu0 0
        %1669 = vmatprep.subr.bf16.mxu0 0
        %1670 = vmatpush1.bf16.msra.mxu0 0
        %1671 = vmatprep.subr.bf16.mxu0 0
        %1672 = vmatpush1.bf16.msra.mxu0 0
        %1673 = vmatprep.subr.bf16.mxu0 0
        %1674 = vmatpush1.bf16.msra.mxu0 0
        %1675 = vmatprep.subr.bf16.mxu0 0
        %1676 = vmatpush1.bf16.msra.mxu0 0
        %1677 = vmatprep.subr.bf16.mxu0 0
        %1678 = vmatpush1.bf16.msra.mxu0 0
        %1679 = vmatprep.subr.bf16.mxu0 0
        %1680 = vmatpush1.bf16.msra.mxu0 0
        %1681 = vmatprep.subr.bf16.mxu0 0
        %1682 = vmatpush1.bf16.msra.mxu0 0
        %1683 = vmatprep.subr.bf16.mxu0 0
        %1684 = vmatpush1.bf16.msra.mxu0 0
        %1685 = vmatprep.mubr.bf16.mxu0 0
        %1686 = vmatmul.mubr.bf16.gmra.mrb[0].mxu0 %v361
        %v1687 = vpop.f32.mrb[0].mxu0
        %v1688 = vadd.f32 0.0, %v1687
        %v1689 = vpop.f32.mrb[0].mxu0
        %v1690 = vadd.f32 0.0, %v1689
        %v1691 = vpop.f32.mrb[0].mxu0
        %v1692 = vadd.f32 0.0, %v1691
        %v1693 = vpop.f32.mrb[0].mxu0
        %v1694 = vadd.f32 0.0, %v1693
        %1695 = vmatprep.mubr.bf16.mxu0 0
        %1696 = vmatmul.mubr.bf16.gmra.mrb[0].mxu0 %v364
        %v1697 = vpop.f32.mrb[0].mxu0
        %v1698 = vadd.f32 0.0, %v1697
        %v1699 = vpop.f32.mrb[0].mxu0
        %v1700 = vadd.f32 0.0, %v1699
        %v1701 = vpop.f32.mrb[0].mxu0
        %v1702 = vadd.f32 0.0, %v1701
        %v1703 = vpop.f32.mrb[0].mxu0
        %v1704 = vadd.f32 0.0, %v1703
        %1705 = vdwg.mxu0
        %v1706 = vpack.c.bf16 %v1692, %v1688
        %v1707 = vpack.c.bf16 %v1694, %v1690
        %v1708 = vpack.c.bf16 %v1702, %v1698
        %v1709 = vpack.c.bf16 %v1704, %v1700
        %1710 = vmatprep.subr.bf16.mxu0 %v1707
        %1711 = vmatpush1.bf16.msra.mxu0 %v1706
        %1712 = vmatprep.subr.bf16.mxu0 %v1709
        %1713 = vmatpush1.bf16.msra.mxu0 %v1708
        %1714 = vmatprep.subr.bf16.mxu0 0
        %1715 = vmatpush1.bf16.msra.mxu0 0
        %1716 = vmatprep.subr.bf16.mxu0 0
        %1717 = vmatpush1.bf16.msra.mxu0 0
        %1718 = vmatprep.subr.bf16.mxu0 0
        %1719 = vmatpush1.bf16.msra.mxu0 0
        %1720 = vmatprep.subr.bf16.mxu0 0
        %1721 = vmatpush1.bf16.msra.mxu0 0
        %1722 = vmatprep.subr.bf16.mxu0 0
        %1723 = vmatpush1.bf16.msra.mxu0 0
        %1724 = vmatprep.subr.bf16.mxu0 0
        %1725 = vmatpush1.bf16.msra.mxu0 0
        %1726 = vmatprep.subr.bf16.mxu0 0
        %1727 = vmatpush1.bf16.msra.mxu0 0
        %1728 = vmatprep.subr.bf16.mxu0 0
        %1729 = vmatpush1.bf16.msra.mxu0 0
        %1730 = vmatprep.subr.bf16.mxu0 0
        %1731 = vmatpush1.bf16.msra.mxu0 0
        %1732 = vmatprep.subr.bf16.mxu0 0
        %1733 = vmatpush1.bf16.msra.mxu0 0
        %1734 = vmatprep.subr.bf16.mxu0 0
        %1735 = vmatpush1.bf16.msra.mxu0 0
        %1736 = vmatprep.subr.bf16.mxu0 0
        %1737 = vmatpush1.bf16.msra.mxu0 0
        %1738 = vmatprep.subr.bf16.mxu0 0
        %1739 = vmatpush1.bf16.msra.mxu0 0
        %1740 = vmatprep.subr.bf16.mxu0 0
        %1741 = vmatpush1.bf16.msra.mxu0 0
        %1742 = vmatprep.mubr.bf16.mxu0 0
        %1743 = vmatmul.mubr.bf16.gmra.mrb[0].mxu0 %v424
        %v1744 = vpop.f32.mrb[0].mxu0
        %v1745 = vadd.f32 0.0, %v1744
        %v1746 = vpop.f32.mrb[0].mxu0
        %v1747 = vadd.f32 0.0, %v1746
        %v1748 = vpop.f32.mrb[0].mxu0
        %v1749 = vadd.f32 0.0, %v1748
        %v1750 = vpop.f32.mrb[0].mxu0
        %v1751 = vadd.f32 0.0, %v1750
        %1752 = vdwg.mxu0
        %v1753 = vrot.slane %v1745, 4
        %v1754 = vmax.f32 %v1745, %v1753
        %v1755 = vrot.slane %v1754, 2
        %v1756 = vmax.f32 %v1754, %v1755
        %v1757 = vrot.slane %v1756, 1
        %v1758 = vmax.f32 %v1756, %v1757
        %v1759 = vrot.slane %v1747, 4
        %v1760 = vmax.f32 %v1747, %v1759
        %v1761 = vrot.slane %v1760, 2
        %v1762 = vmax.f32 %v1760, %v1761
        %v1763 = vrot.slane %v1762, 1
        %v1764 = vmax.f32 %v1762, %v1763
        %v1765 = vsub.f32 %v1745, %v1758
        %v1766 = vsub.f32 %v1747, %v1764
        %v1767 = vmul.f32 %v1765, 1.442695
        %v1768 = vpow.pop %v1767
        %v1769 = vmul.f32 %v1766, 1.442695
        %v1770 = vpow.pop %v1769
        %v1771 = vrot.slane %v1768, 4
        %v1772 = vadd.f32 %v1768, %v1771
        %v1773 = vrot.slane %v1772, 2
        %v1774 = vadd.f32 %v1772, %v1773
        %v1775 = vrot.slane %v1774, 1
        %v1776 = vadd.f32 %v1774, %v1775
        %v1777 = vrot.slane %v1770, 4
        %v1778 = vadd.f32 %v1770, %v1777
        %v1779 = vrot.slane %v1778, 2
        %v1780 = vadd.f32 %v1778, %v1779
        %v1781 = vrot.slane %v1780, 1
        %v1782 = vadd.f32 %v1780, %v1781
        %v1783 = vrcp.pop %v1776
        %v1784 = vrcp.pop %v1782
        %v1785 = vmul.f32 %v1768, %v1783
        %v1786 = vmul.f32 %v1770, %v1784
        %v1787 = vpack.c.bf16 %v1785, %v1785
        %v1788 = vpack.c.bf16 %v1786, %v1786
        %v1789 = vrot.slane %v1749, 4
        %v1790 = vmax.f32 %v1749, %v1789
        %v1791 = vrot.slane %v1790, 2
        %v1792 = vmax.f32 %v1790, %v1791
        %v1793 = vrot.slane %v1792, 1
        %v1794 = vmax.f32 %v1792, %v1793
        %v1795 = vrot.slane %v1751, 4
        %v1796 = vmax.f32 %v1751, %v1795
        %v1797 = vrot.slane %v1796, 2
        %v1798 = vmax.f32 %v1796, %v1797
        %v1799 = vrot.slane %v1798, 1
        %v1800 = vmax.f32 %v1798, %v1799
        %v1801 = vsub.f32 %v1749, %v1794
        %v1802 = vsub.f32 %v1751, %v1800
        %v1803 = vmul.f32 %v1801, 1.442695
        %v1804 = vpow.pop %v1803
        %v1805 = vmul.f32 %v1802, 1.442695
        %v1806 = vpow.pop %v1805
        %v1807 = vrot.slane %v1804, 4
        %v1808 = vadd.f32 %v1804, %v1807
        %v1809 = vrot.slane %v1808, 2
        %v1810 = vadd.f32 %v1808, %v1809
        %v1811 = vrot.slane %v1810, 1
        %v1812 = vadd.f32 %v1810, %v1811
        %v1813 = vrot.slane %v1806, 4
        %v1814 = vadd.f32 %v1806, %v1813
        %v1815 = vrot.slane %v1814, 2
        %v1816 = vadd.f32 %v1814, %v1815
        %v1817 = vrot.slane %v1816, 1
        %v1818 = vadd.f32 %v1816, %v1817
        %v1819 = vrcp.pop %v1812
        %v1820 = vrcp.pop %v1818
        %v1821 = vmul.f32 %v1804, %v1819
        %v1822 = vmul.f32 %v1806, %v1820
        %v1823 = vpack.c.bf16 %v1821, %v1821
        %v1824 = vpack.c.bf16 %v1822, %v1822
        %v1826 = vsel %vm295, %v1787, 0
        %v1829 = vsel %vm295, %v1788, 0
        %1831 = vmatprep.subr.bf16.mxu0 %v1829
        %1832 = vmatpush1.bf16.msra.mxu0 %v1826
        %1833 = vmatprep.subr.bf16.mxu0 0
        %1834 = vmatpush1.bf16.msra.mxu0 0
        %1835 = vmatprep.subr.bf16.mxu0 0
        %1836 = vmatpush1.bf16.msra.mxu0 0
        %1837 = vmatprep.subr.bf16.mxu0 0
        %1838 = vmatpush1.bf16.msra.mxu0 0
        %1839 = vmatprep.subr.bf16.mxu0 0
        %1840 = vmatpush1.bf16.msra.mxu0 0
        %1841 = vmatprep.subr.bf16.mxu0 0
        %1842 = vmatpush1.bf16.msra.mxu0 0
        %1843 = vmatprep.subr.bf16.mxu0 0
        %1844 = vmatpush1.bf16.msra.mxu0 0
        %1845 = vmatprep.subr.bf16.mxu0 0
        %1846 = vmatpush1.bf16.msra.mxu0 0
        %1847 = vmatprep.subr.bf16.mxu0 0
        %1848 = vmatpush1.bf16.msra.mxu0 0
        %1849 = vmatprep.subr.bf16.mxu0 0
        %1850 = vmatpush1.bf16.msra.mxu0 0
        %1851 = vmatprep.subr.bf16.mxu0 0
        %1852 = vmatpush1.bf16.msra.mxu0 0
        %1853 = vmatprep.subr.bf16.mxu0 0
        %1854 = vmatpush1.bf16.msra.mxu0 0
        %1855 = vmatprep.subr.bf16.mxu0 0
        %1856 = vmatpush1.bf16.msra.mxu0 0
        %1857 = vmatprep.subr.bf16.mxu0 0
        %1858 = vmatpush1.bf16.msra.mxu0 0
        %1859 = vmatprep.subr.bf16.mxu0 0
        %1860 = vmatpush1.bf16.msra.mxu0 0
        %1861 = vmatprep.subr.bf16.mxu0 0
        %1862 = vmatpush1.bf16.msra.mxu0 0
        %1863 = vmatprep.mubr.bf16.mxu0 0
        %1864 = vmatmul.mubr.bf16.gmra.mrb[0].mxu0 %v542
        %v1865 = vpop.f32.mrb[0].mxu0
        %v1866 = vadd.f32 0.0, %v1865
        %v1867 = vpop.f32.mrb[0].mxu0
        %v1868 = vadd.f32 0.0, %v1867
        %v1869 = vpop.f32.mrb[0].mxu0
        %v1870 = vadd.f32 0.0, %v1869
        %v1871 = vpop.f32.mrb[0].mxu0
        %v1872 = vadd.f32 0.0, %v1871
        %1873 = vmatprep.mubr.bf16.mxu0 0
        %1874 = vmatmul.mubr.bf16.gmra.mrb[0].mxu0 %v545
        %v1875 = vpop.f32.mrb[0].mxu0
        %v1876 = vadd.f32 0.0, %v1875
        %v1877 = vpop.f32.mrb[0].mxu0
        %v1878 = vadd.f32 0.0, %v1877
        %v1879 = vpop.f32.mrb[0].mxu0
        %v1880 = vadd.f32 0.0, %v1879
        %v1881 = vpop.f32.mrb[0].mxu0
        %v1882 = vadd.f32 0.0, %v1881
        %1883 = vdwg.mxu0
        %v1884 = vadd.f32 %v1631, %v1866
        %v1885 = vadd.f32 %v1633, %v1868
        %v1886 = vadd.f32 %v1635, %v1870
        %v1887 = vadd.f32 %v1637, %v1872
        %v1888 = vadd.f32 %v1641, %v1876
        %v1889 = vadd.f32 %v1643, %v1878
        %v1890 = vadd.f32 %v1645, %v1880
        %v1891 = vadd.f32 %v1647, %v1882
        %v1892 = vmul.f32 %v1884, %v1884
        %v1893 = vmul.f32 %v1885, %v1885
        %v1894 = vmul.f32 %v1886, %v1886
        %v1895 = vmul.f32 %v1887, %v1887
        %v1896 = vmul.f32 %v1888, %v1888
        %v1897 = vmul.f32 %v1889, %v1889
        %v1898 = vmul.f32 %v1890, %v1890
        %v1899 = vmul.f32 %v1891, %v1891
        %v1900 = vmul.f32 %v1884, %v1892
        %v1901 = vmul.f32 %v1885, %v1893
        %v1902 = vmul.f32 %v1886, %v1894
        %v1903 = vmul.f32 %v1887, %v1895
        %v1904 = vmul.f32 %v1888, %v1896
        %v1905 = vmul.f32 %v1889, %v1897
        %v1906 = vmul.f32 %v1890, %v1898
        %v1907 = vmul.f32 %v1891, %v1899
        %v1908 = vmul.f32 %v1900, 0.044715
        %v1909 = vmul.f32 %v1901, 0.044715
        %v1910 = vmul.f32 %v1902, 0.044715
        %v1911 = vmul.f32 %v1903, 0.044715
        %v1912 = vmul.f32 %v1904, 0.044715
        %v1913 = vmul.f32 %v1905, 0.044715
        %v1914 = vmul.f32 %v1906, 0.044715
        %v1915 = vmul.f32 %v1907, 0.044715
        %v1916 = vadd.f32 %v1884, %v1908
        %v1917 = vadd.f32 %v1885, %v1909
        %v1918 = vadd.f32 %v1886, %v1910
        %v1919 = vadd.f32 %v1887, %v1911
        %v1920 = vadd.f32 %v1888, %v1912
        %v1921 = vadd.f32 %v1889, %v1913
        %v1922 = vadd.f32 %v1890, %v1914
        %v1923 = vadd.f32 %v1891, %v1915
        %v1924 = vmul.f32 %v1916, 0.7978846
        %v1925 = vmul.f32 %v1917, 0.7978846
        %v1926 = vmul.f32 %v1918, 0.7978846
        %v1927 = vmul.f32 %v1919, 0.7978846
        %v1928 = vmul.f32 %v1920, 0.7978846
        %v1929 = vmul.f32 %v1921, 0.7978846
        %v1930 = vmul.f32 %v1922, 0.7978846
        %v1931 = vmul.f32 %v1923, 0.7978846
        %v1932 = vtanh.pop %v1924
        %v1933 = vtanh.pop %v1925
        %v1934 = vtanh.pop %v1926
        %v1935 = vtanh.pop %v1927
        %v1936 = vtanh.pop %v1928
        %v1937 = vtanh.pop %v1929
        %v1938 = vtanh.pop %v1930
        %v1939 = vtanh.pop %v1931
        %v1940 = vadd.f32 %v1932, 1.0
        %v1941 = vadd.f32 %v1933, 1.0
        %v1942 = vadd.f32 %v1934, 1.0
        %v1943 = vadd.f32 %v1935, 1.0
        %v1944 = vadd.f32 %v1936, 1.0
        %v1945 = vadd.f32 %v1937, 1.0
        %v1946 = vadd.f32 %v1938, 1.0
        %v1947 = vadd.f32 %v1939, 1.0
        %v1948 = vmul.f32 %v1940, 0.5
        %v1949 = vmul.f32 %v1941, 0.5
        %v1950 = vmul.f32 %v1942, 0.5
        %v1951 = vmul.f32 %v1943, 0.5
        %v1952 = vmul.f32 %v1944, 0.5
        %v1953 = vmul.f32 %v1945, 0.5
        %v1954 = vmul.f32 %v1946, 0.5
        %v1955 = vmul.f32 %v1947, 0.5
        %v1956 = vmul.f32 %v1884, %v1948
        %v1957 = vmul.f32 %v1885, %v1949
        %v1958 = vmul.f32 %v1886, %v1950
        %v1959 = vmul.f32 %v1887, %v1951
        %v1960 = vmul.f32 %v1888, %v1952
        %v1961 = vmul.f32 %v1889, %v1953
        %v1962 = vmul.f32 %v1890, %v1954
        %v1963 = vmul.f32 %v1891, %v1955
        %v1964 = vpack.c.bf16 %v1958, %v1956
        %v1965 = vpack.c.bf16 %v1959, %v1957
        %v1966 = vpack.c.bf16 %v1962, %v1960
        %v1967 = vpack.c.bf16 %v1963, %v1961
        %v1969 = vsel %vm295, %v1823, 0
        %v1972 = vsel %vm295, %v1824, 0
        %1974 = vmatprep.subr.bf16.mxu0 %v1972
        %1975 = vmatpush1.bf16.msra.mxu0 %v1969
        %1976 = vmatprep.subr.bf16.mxu0 0
        %1977 = vmatpush1.bf16.msra.mxu0 0
        %1978 = vmatprep.subr.bf16.mxu0 0
        %1979 = vmatpush1.bf16.msra.mxu0 0
        %1980 = vmatprep.subr.bf16.mxu0 0
        %1981 = vmatpush1.bf16.msra.mxu0 0
        %1982 = vmatprep.subr.bf16.mxu0 0
        %1983 = vmatpush1.bf16.msra.mxu0 0
        %1984 = vmatprep.subr.bf16.mxu0 0
        %1985 = vmatpush1.bf16.msra.mxu0 0
        %1986 = vmatprep.subr.bf16.mxu0 0
        %1987 = vmatpush1.bf16.msra.mxu0 0
        %1988 = vmatprep.subr.bf16.mxu0 0
        %1989 = vmatpush1.bf16.msra.mxu0 0
        %1990 = vmatprep.subr.bf16.mxu0 0
        %1991 = vmatpush1.bf16.msra.mxu0 0
        %1992 = vmatprep.subr.bf16.mxu0 0
        %1993 = vmatpush1.bf16.msra.mxu0 0
        %1994 = vmatprep.subr.bf16.mxu0 0
        %1995 = vmatpush1.bf16.msra.mxu0 0
        %1996 = vmatprep.subr.bf16.mxu0 0
        %1997 = vmatpush1.bf16.msra.mxu0 0
        %1998 = vmatprep.subr.bf16.mxu0 0
        %1999 = vmatpush1.bf16.msra.mxu0 0
        %2000 = vmatprep.subr.bf16.mxu0 0
        %2001 = vmatpush1.bf16.msra.mxu0 0
        %2002 = vmatprep.subr.bf16.mxu0 0
        %2003 = vmatpush1.bf16.msra.mxu0 0
        %2004 = vmatprep.subr.bf16.mxu0 0
        %2005 = vmatpush1.bf16.msra.mxu0 0
        %2006 = vmatprep.mubr.bf16.mxu0 0
        %2007 = vmatmul.mubr.bf16.gmra.mrb[0].mxu0 %v691
        %v2008 = vpop.f32.mrb[0].mxu0
        %v2009 = vadd.f32 0.0, %v2008
        %v2010 = vpop.f32.mrb[0].mxu0
        %v2011 = vadd.f32 0.0, %v2010
        %v2012 = vpop.f32.mrb[0].mxu0
        %v2013 = vadd.f32 0.0, %v2012
        %v2014 = vpop.f32.mrb[0].mxu0
        %v2015 = vadd.f32 0.0, %v2014
        %2016 = vmatprep.mubr.bf16.mxu0 0
        %2017 = vmatmul.mubr.bf16.gmra.mrb[0].mxu0 %v694
        %v2018 = vpop.f32.mrb[0].mxu0
        %v2019 = vadd.f32 0.0, %v2018
        %v2020 = vpop.f32.mrb[0].mxu0
        %v2021 = vadd.f32 0.0, %v2020
        %v2022 = vpop.f32.mrb[0].mxu0
        %v2023 = vadd.f32 0.0, %v2022
        %v2024 = vpop.f32.mrb[0].mxu0
        %v2025 = vadd.f32 0.0, %v2024
        %2026 = vdwg.mxu0
        %v2027 = vadd.f32 %v1631, %v2009
        %v2028 = vadd.f32 %v1633, %v2011
        %v2029 = vadd.f32 %v1635, %v2013
        %v2030 = vadd.f32 %v1637, %v2015
        %v2031 = vadd.f32 %v1641, %v2019
        %v2032 = vadd.f32 %v1643, %v2021
        %v2033 = vadd.f32 %v1645, %v2023
        %v2034 = vadd.f32 %v1647, %v2025
        %v2035 = vmul.f32 %v2027, %v2027
        %v2036 = vmul.f32 %v2028, %v2028
        %v2037 = vmul.f32 %v2029, %v2029
        %v2038 = vmul.f32 %v2030, %v2030
        %v2039 = vmul.f32 %v2031, %v2031
        %v2040 = vmul.f32 %v2032, %v2032
        %v2041 = vmul.f32 %v2033, %v2033
        %v2042 = vmul.f32 %v2034, %v2034
        %v2043 = vmul.f32 %v2027, %v2035
        %v2044 = vmul.f32 %v2028, %v2036
        %v2045 = vmul.f32 %v2029, %v2037
        %v2046 = vmul.f32 %v2030, %v2038
        %v2047 = vmul.f32 %v2031, %v2039
        %v2048 = vmul.f32 %v2032, %v2040
        %v2049 = vmul.f32 %v2033, %v2041
        %v2050 = vmul.f32 %v2034, %v2042
        %v2051 = vmul.f32 %v2043, 0.044715
        %v2052 = vmul.f32 %v2044, 0.044715
        %v2053 = vmul.f32 %v2045, 0.044715
        %v2054 = vmul.f32 %v2046, 0.044715
        %v2055 = vmul.f32 %v2047, 0.044715
        %v2056 = vmul.f32 %v2048, 0.044715
        %v2057 = vmul.f32 %v2049, 0.044715
        %v2058 = vmul.f32 %v2050, 0.044715
        %v2059 = vadd.f32 %v2027, %v2051
        %v2060 = vadd.f32 %v2028, %v2052
        %v2061 = vadd.f32 %v2029, %v2053
        %v2062 = vadd.f32 %v2030, %v2054
        %v2063 = vadd.f32 %v2031, %v2055
        %v2064 = vadd.f32 %v2032, %v2056
        %v2065 = vadd.f32 %v2033, %v2057
        %v2066 = vadd.f32 %v2034, %v2058
        %v2067 = vmul.f32 %v2059, 0.7978846
        %v2068 = vmul.f32 %v2060, 0.7978846
        %v2069 = vmul.f32 %v2061, 0.7978846
        %v2070 = vmul.f32 %v2062, 0.7978846
        %v2071 = vmul.f32 %v2063, 0.7978846
        %v2072 = vmul.f32 %v2064, 0.7978846
        %v2073 = vmul.f32 %v2065, 0.7978846
        %v2074 = vmul.f32 %v2066, 0.7978846
        %v2075 = vtanh.pop %v2067
        %v2076 = vtanh.pop %v2068
        %v2077 = vtanh.pop %v2069
        %v2078 = vtanh.pop %v2070
        %v2079 = vtanh.pop %v2071
        %v2080 = vtanh.pop %v2072
        %v2081 = vtanh.pop %v2073
        %v2082 = vtanh.pop %v2074
        %v2083 = vadd.f32 %v2075, 1.0
        %v2084 = vadd.f32 %v2076, 1.0
        %v2085 = vadd.f32 %v2077, 1.0
        %v2086 = vadd.f32 %v2078, 1.0
        %v2087 = vadd.f32 %v2079, 1.0
        %v2088 = vadd.f32 %v2080, 1.0
        %v2089 = vadd.f32 %v2081, 1.0
        %v2090 = vadd.f32 %v2082, 1.0
        %v2091 = vmul.f32 %v2083, 0.5
        %v2092 = vmul.f32 %v2084, 0.5
        %v2093 = vmul.f32 %v2085, 0.5
        %v2094 = vmul.f32 %v2086, 0.5
        %v2095 = vmul.f32 %v2087, 0.5
        %v2096 = vmul.f32 %v2088, 0.5
        %v2097 = vmul.f32 %v2089, 0.5
        %v2098 = vmul.f32 %v2090, 0.5
        %v2099 = vmul.f32 %v2027, %v2091
        %v2100 = vmul.f32 %v2028, %v2092
        %v2101 = vmul.f32 %v2029, %v2093
        %v2102 = vmul.f32 %v2030, %v2094
        %v2103 = vmul.f32 %v2031, %v2095
        %v2104 = vmul.f32 %v2032, %v2096
        %v2105 = vmul.f32 %v2033, %v2097
        %v2106 = vmul.f32 %v2034, %v2098
        %v2107 = vpack.c.bf16 %v2101, %v2099
        %v2108 = vpack.c.bf16 %v2102, %v2100
        %v2109 = vpack.c.bf16 %v2105, %v2103
        %v2110 = vpack.c.bf16 %v2106, %v2104
        %2111 = vmatprep.subr.bf16.mxu0 %v1965
        %2112 = vmatpush1.bf16.msra.mxu0 %v1964
        %2113 = vmatprep.subr.bf16.mxu0 %v1967
        %2114 = vmatpush1.bf16.msra.mxu0 %v1966
        %2115 = vmatprep.subr.bf16.mxu0 0
        %2116 = vmatpush1.bf16.msra.mxu0 0
        %2117 = vmatprep.subr.bf16.mxu0 0
        %2118 = vmatpush1.bf16.msra.mxu0 0
        %2119 = vmatprep.subr.bf16.mxu0 0
        %2120 = vmatpush1.bf16.msra.mxu0 0
        %2121 = vmatprep.subr.bf16.mxu0 0
        %2122 = vmatpush1.bf16.msra.mxu0 0
        %2123 = vmatprep.subr.bf16.mxu0 0
        %2124 = vmatpush1.bf16.msra.mxu0 0
        %2125 = vmatprep.subr.bf16.mxu0 0
        %2126 = vmatpush1.bf16.msra.mxu0 0
        %2127 = vmatprep.subr.bf16.mxu0 0
        %2128 = vmatpush1.bf16.msra.mxu0 0
        %2129 = vmatprep.subr.bf16.mxu0 0
        %2130 = vmatpush1.bf16.msra.mxu0 0
        %2131 = vmatprep.subr.bf16.mxu0 0
        %2132 = vmatpush1.bf16.msra.mxu0 0
        %2133 = vmatprep.subr.bf16.mxu0 0
        %2134 = vmatpush1.bf16.msra.mxu0 0
        %2135 = vmatprep.subr.bf16.mxu0 0
        %2136 = vmatpush1.bf16.msra.mxu0 0
        %2137 = vmatprep.subr.bf16.mxu0 0
        %2138 = vmatpush1.bf16.msra.mxu0 0
        %2139 = vmatprep.subr.bf16.mxu0 0
        %2140 = vmatpush1.bf16.msra.mxu0 0
        %2141 = vmatprep.subr.bf16.mxu0 0
        %2142 = vmatpush1.bf16.msra.mxu0 0
        %2143 = vmatprep.mubr.bf16.mxu0 0
        %2144 = vmatmul.mubr.bf16.gmra.mrb[0].mxu0 %v845
        %v2145 = vpop.f32.mrb[0].mxu0
        %v2146 = vadd.f32 %v842, %v2145
        %v2147 = vpop.f32.mrb[0].mxu0
        %v2148 = vadd.f32 %v842, %v2147
        %v2149 = vpop.f32.mrb[0].mxu0
        %v2150 = vpop.f32.mrb[0].mxu0
        %2151 = vdwg.mxu0
        %2152 = vmatprep.subr.bf16.mxu0 %v2108
        %2153 = vmatpush1.bf16.msra.mxu0 %v2107
        %2154 = vmatprep.subr.bf16.mxu0 %v2110
        %2155 = vmatpush1.bf16.msra.mxu0 %v2109
        %2156 = vmatprep.subr.bf16.mxu0 0
        %2157 = vmatpush1.bf16.msra.mxu0 0
        %2158 = vmatprep.subr.bf16.mxu0 0
        %2159 = vmatpush1.bf16.msra.mxu0 0
        %2160 = vmatprep.subr.bf16.mxu0 0
        %2161 = vmatpush1.bf16.msra.mxu0 0
        %2162 = vmatprep.subr.bf16.mxu0 0
        %2163 = vmatpush1.bf16.msra.mxu0 0
        %2164 = vmatprep.subr.bf16.mxu0 0
        %2165 = vmatpush1.bf16.msra.mxu0 0
        %2166 = vmatprep.subr.bf16.mxu0 0
        %2167 = vmatpush1.bf16.msra.mxu0 0
        %2168 = vmatprep.subr.bf16.mxu0 0
        %2169 = vmatpush1.bf16.msra.mxu0 0
        %2170 = vmatprep.subr.bf16.mxu0 0
        %2171 = vmatpush1.bf16.msra.mxu0 0
        %2172 = vmatprep.subr.bf16.mxu0 0
        %2173 = vmatpush1.bf16.msra.mxu0 0
        %2174 = vmatprep.subr.bf16.mxu0 0
        %2175 = vmatpush1.bf16.msra.mxu0 0
        %2176 = vmatprep.subr.bf16.mxu0 0
        %2177 = vmatpush1.bf16.msra.mxu0 0
        %2178 = vmatprep.subr.bf16.mxu0 0
        %2179 = vmatpush1.bf16.msra.mxu0 0
        %2180 = vmatprep.subr.bf16.mxu0 0
        %2181 = vmatpush1.bf16.msra.mxu0 0
        %2182 = vmatprep.subr.bf16.mxu0 0
        %2183 = vmatpush1.bf16.msra.mxu0 0
        %2184 = vmatprep.mubr.bf16.mxu0 0
        %2185 = vmatmul.mubr.bf16.gmra.mrb[0].mxu0 %v845
        %v2186 = vpop.f32.mrb[0].mxu0
        %v2187 = vadd.f32 %v842, %v2186
        %v2188 = vpop.f32.mrb[0].mxu0
        %v2189 = vadd.f32 %v842, %v2188
        %v2190 = vpop.f32.mrb[0].mxu0
        %v2191 = vpop.f32.mrb[0].mxu0
        %2192 = vdwg.mxu0
        %v2193 = vsub.f32 %v2187, %v2146
        %v2194 = vsub.f32 %v2189, %v2148
        %v2195 = vstv %s1578
        %v2196 = vmul.f32 %v2195, %v2193
        %v2197 = vmul.f32 %v2195, %v2194
        %v2198 = vadd.f32 %v2146, %v2196
        %v2199 = vadd.f32 %v2148, %v2197
        %v2200 = vstv %s1576
        %v2201 = vmul.f32 %v2200, %v1574
        %v2202 = vmul.f32 %v2200, %v1575
        %v2203 = vstv %s1577
        %v2204 = vmul.f32 %v2203, %v2198
        %v2205 = vmul.f32 %v2203, %v2199
        %v2206 = vadd.f32 %v2201, %v2204
        %v2207 = vadd.f32 %v2202, %v2205
        %s2208 = sld [smem:[#allocation2 + $0xc]]
        %s2209 = sld [smem:[#allocation2 + $0xd]]
        %s2210 = sld [smem:[#allocation2 + $0xe]]
        %v2211 = vpack.c.bf16 %v2206, %v2206
        %v2212 = vpack.c.bf16 %v2207, %v2207
        %s2213 = scalar_lea.vmem %s1, 192
        %v2214 = vld [vmem:[%s2213] sm:$0xff]
        %v2215 = vld [vmem:[%s2213 + $0x8] sm:$0xff]
        %v2216 = vld [vmem:[%s2213 + $0x10] sm:$0xff]
        %v2217 = vld [vmem:[%s2213 + $0x18] sm:$0xff]
        %v2218 = vld [vmem:[%s2213 + $0x20] sm:$0xff]
        %v2219 = vld [vmem:[%s2213 + $0x28] sm:$0xff]
        %v2220 = vld [vmem:[%s2213 + $0x30] sm:$0xff]
        %v2221 = vld [vmem:[%s2213 + $0x38] sm:$0xff]
        %v2223 = vsel %vm295, %v2211, 0
        %v2226 = vsel %vm295, %v2212, 0
        %2228 = vmatprep.subr.bf16.mxu0 %v2226
        %2229 = vmatpush1.bf16.msra.mxu0 %v2223
        %2230 = vmatprep.subr.bf16.mxu0 0
        %2231 = vmatpush1.bf16.msra.mxu0 0
        %2232 = vmatprep.subr.bf16.mxu0 0
        %2233 = vmatpush1.bf16.msra.mxu0 0
        %2234 = vmatprep.subr.bf16.mxu0 0
        %2235 = vmatpush1.bf16.msra.mxu0 0
        %2236 = vmatprep.subr.bf16.mxu0 0
        %2237 = vmatpush1.bf16.msra.mxu0 0
        %2238 = vmatprep.subr.bf16.mxu0 0
        %2239 = vmatpush1.bf16.msra.mxu0 0
        %2240 = vmatprep.subr.bf16.mxu0 0
        %2241 = vmatpush1.bf16.msra.mxu0 0
        %2242 = vmatprep.subr.bf16.mxu0 0
        %2243 = vmatpush1.bf16.msra.mxu0 0
        %2244 = vmatprep.subr.bf16.mxu0 0
        %2245 = vmatpush1.bf16.msra.mxu0 0
        %2246 = vmatprep.subr.bf16.mxu0 0
        %2247 = vmatpush1.bf16.msra.mxu0 0
        %2248 = vmatprep.subr.bf16.mxu0 0
        %2249 = vmatpush1.bf16.msra.mxu0 0
        %2250 = vmatprep.subr.bf16.mxu0 0
        %2251 = vmatpush1.bf16.msra.mxu0 0
        %2252 = vmatprep.subr.bf16.mxu0 0
        %2253 = vmatpush1.bf16.msra.mxu0 0
        %2254 = vmatprep.subr.bf16.mxu0 0
        %2255 = vmatpush1.bf16.msra.mxu0 0
        %2256 = vmatprep.subr.bf16.mxu0 0
        %2257 = vmatpush1.bf16.msra.mxu0 0
        %2258 = vmatprep.subr.bf16.mxu0 0
        %2259 = vmatpush1.bf16.msra.mxu0 0
        %2260 = vmatprep.mubr.bf16.mxu0 0
        %2261 = vmatmul.mubr.bf16.gmra.mrb[0].mxu0 %v290
        %v2262 = vpop.f32.mrb[0].mxu0
        %v2263 = vadd.f32 %v2214, %v2262
        %v2264 = vpop.f32.mrb[0].mxu0
        %v2265 = vadd.f32 %v2215, %v2264
        %v2266 = vpop.f32.mrb[0].mxu0
        %v2267 = vadd.f32 %v2216, %v2266
        %v2268 = vpop.f32.mrb[0].mxu0
        %v2269 = vadd.f32 %v2217, %v2268
        %2270 = vmatprep.mubr.bf16.mxu0 0
        %2271 = vmatmul.mubr.bf16.gmra.mrb[0].mxu0 %v293
        %v2272 = vpop.f32.mrb[0].mxu0
        %v2273 = vadd.f32 %v2218, %v2272
        %v2274 = vpop.f32.mrb[0].mxu0
        %v2275 = vadd.f32 %v2219, %v2274
        %v2276 = vpop.f32.mrb[0].mxu0
        %v2277 = vadd.f32 %v2220, %v2276
        %v2278 = vpop.f32.mrb[0].mxu0
        %v2279 = vadd.f32 %v2221, %v2278
        %2280 = vdwg.mxu0
        %v2281 = vpack.c.bf16 %v2267, %v2263
        %v2282 = vpack.c.bf16 %v2269, %v2265
        %v2283 = vpack.c.bf16 %v2277, %v2273
        %v2284 = vpack.c.bf16 %v2279, %v2275
        %2285 = vmatprep.subr.bf16.mxu0 %v2282
        %2286 = vmatpush1.bf16.msra.mxu0 %v2281
        %2287 = vmatprep.subr.bf16.mxu0 %v2284
        %2288 = vmatpush1.bf16.msra.mxu0 %v2283
        %2289 = vmatprep.subr.bf16.mxu0 0
        %2290 = vmatpush1.bf16.msra.mxu0 0
        %2291 = vmatprep.subr.bf16.mxu0 0
        %2292 = vmatpush1.bf16.msra.mxu0 0
        %2293 = vmatprep.subr.bf16.mxu0 0
        %2294 = vmatpush1.bf16.msra.mxu0 0
        %2295 = vmatprep.subr.bf16.mxu0 0
        %2296 = vmatpush1.bf16.msra.mxu0 0
        %2297 = vmatprep.subr.bf16.mxu0 0
        %2298 = vmatpush1.bf16.msra.mxu0 0
        %2299 = vmatprep.subr.bf16.mxu0 0
        %2300 = vmatpush1.bf16.msra.mxu0 0
        %2301 = vmatprep.subr.bf16.mxu0 0
        %2302 = vmatpush1.bf16.msra.mxu0 0
        %2303 = vmatprep.subr.bf16.mxu0 0
        %2304 = vmatpush1.bf16.msra.mxu0 0
        %2305 = vmatprep.subr.bf16.mxu0 0
        %2306 = vmatpush1.bf16.msra.mxu0 0
        %2307 = vmatprep.subr.bf16.mxu0 0
        %2308 = vmatpush1.bf16.msra.mxu0 0
        %2309 = vmatprep.subr.bf16.mxu0 0
        %2310 = vmatpush1.bf16.msra.mxu0 0
        %2311 = vmatprep.subr.bf16.mxu0 0
        %2312 = vmatpush1.bf16.msra.mxu0 0
        %2313 = vmatprep.subr.bf16.mxu0 0
        %2314 = vmatpush1.bf16.msra.mxu0 0
        %2315 = vmatprep.subr.bf16.mxu0 0
        %2316 = vmatpush1.bf16.msra.mxu0 0
        %2317 = vmatprep.mubr.bf16.mxu0 0
        %2318 = vmatmul.mubr.bf16.gmra.mrb[0].mxu0 %v361
        %v2319 = vpop.f32.mrb[0].mxu0
        %v2320 = vadd.f32 0.0, %v2319
        %v2321 = vpop.f32.mrb[0].mxu0
        %v2322 = vadd.f32 0.0, %v2321
        %v2323 = vpop.f32.mrb[0].mxu0
        %v2324 = vadd.f32 0.0, %v2323
        %v2325 = vpop.f32.mrb[0].mxu0
        %v2326 = vadd.f32 0.0, %v2325
        %2327 = vmatprep.mubr.bf16.mxu0 0
        %2328 = vmatmul.mubr.bf16.gmra.mrb[0].mxu0 %v364
        %v2329 = vpop.f32.mrb[0].mxu0
        %v2330 = vadd.f32 0.0, %v2329
        %v2331 = vpop.f32.mrb[0].mxu0
        %v2332 = vadd.f32 0.0, %v2331
        %v2333 = vpop.f32.mrb[0].mxu0
        %v2334 = vadd.f32 0.0, %v2333
        %v2335 = vpop.f32.mrb[0].mxu0
        %v2336 = vadd.f32 0.0, %v2335
        %2337 = vdwg.mxu0
        %v2338 = vpack.c.bf16 %v2324, %v2320
        %v2339 = vpack.c.bf16 %v2326, %v2322
        %v2340 = vpack.c.bf16 %v2334, %v2330
        %v2341 = vpack.c.bf16 %v2336, %v2332
        %2342 = vmatprep.subr.bf16.mxu0 %v2339
        %2343 = vmatpush1.bf16.msra.mxu0 %v2338
        %2344 = vmatprep.subr.bf16.mxu0 %v2341
        %2345 = vmatpush1.bf16.msra.mxu0 %v2340
        %2346 = vmatprep.subr.bf16.mxu0 0
        %2347 = vmatpush1.bf16.msra.mxu0 0
        %2348 = vmatprep.subr.bf16.mxu0 0
        %2349 = vmatpush1.bf16.msra.mxu0 0
        %2350 = vmatprep.subr.bf16.mxu0 0
        %2351 = vmatpush1.bf16.msra.mxu0 0
        %2352 = vmatprep.subr.bf16.mxu0 0
        %2353 = vmatpush1.bf16.msra.mxu0 0
        %2354 = vmatprep.subr.bf16.mxu0 0
        %2355 = vmatpush1.bf16.msra.mxu0 0
        %2356 = vmatprep.subr.bf16.mxu0 0
        %2357 = vmatpush1.bf16.msra.mxu0 0
        %2358 = vmatprep.subr.bf16.mxu0 0
        %2359 = vmatpush1.bf16.msra.mxu0 0
        %2360 = vmatprep.subr.bf16.mxu0 0
        %2361 = vmatpush1.bf16.msra.mxu0 0
        %2362 = vmatprep.subr.bf16.mxu0 0
        %2363 = vmatpush1.bf16.msra.mxu0 0
        %2364 = vmatprep.subr.bf16.mxu0 0
        %2365 = vmatpush1.bf16.msra.mxu0 0
        %2366 = vmatprep.subr.bf16.mxu0 0
        %2367 = vmatpush1.bf16.msra.mxu0 0
        %2368 = vmatprep.subr.bf16.mxu0 0
        %2369 = vmatpush1.bf16.msra.mxu0 0
        %2370 = vmatprep.subr.bf16.mxu0 0
        %2371 = vmatpush1.bf16.msra.mxu0 0
        %2372 = vmatprep.subr.bf16.mxu0 0
        %2373 = vmatpush1.bf16.msra.mxu0 0
        %2374 = vmatprep.mubr.bf16.mxu0 0
        %2375 = vmatmul.mubr.bf16.gmra.mrb[0].mxu0 %v424
        %v2376 = vpop.f32.mrb[0].mxu0
        %v2377 = vadd.f32 0.0, %v2376
        %v2378 = vpop.f32.mrb[0].mxu0
        %v2379 = vadd.f32 0.0, %v2378
        %v2380 = vpop.f32.mrb[0].mxu0
        %v2381 = vadd.f32 0.0, %v2380
        %v2382 = vpop.f32.mrb[0].mxu0
        %v2383 = vadd.f32 0.0, %v2382
        %2384 = vdwg.mxu0
        %v2385 = vrot.slane %v2377, 4
        %v2386 = vmax.f32 %v2377, %v2385
        %v2387 = vrot.slane %v2386, 2
        %v2388 = vmax.f32 %v2386, %v2387
        %v2389 = vrot.slane %v2388, 1
        %v2390 = vmax.f32 %v2388, %v2389
        %v2391 = vrot.slane %v2379, 4
        %v2392 = vmax.f32 %v2379, %v2391
        %v2393 = vrot.slane %v2392, 2
        %v2394 = vmax.f32 %v2392, %v2393
        %v2395 = vrot.slane %v2394, 1
        %v2396 = vmax.f32 %v2394, %v2395
        %v2397 = vsub.f32 %v2377, %v2390
        %v2398 = vsub.f32 %v2379, %v2396
        %v2399 = vmul.f32 %v2397, 1.442695
        %v2400 = vpow.pop %v2399
        %v2401 = vmul.f32 %v2398, 1.442695
        %v2402 = vpow.pop %v2401
        %v2403 = vrot.slane %v2400, 4
        %v2404 = vadd.f32 %v2400, %v2403
        %v2405 = vrot.slane %v2404, 2
        %v2406 = vadd.f32 %v2404, %v2405
        %v2407 = vrot.slane %v2406, 1
        %v2408 = vadd.f32 %v2406, %v2407
        %v2409 = vrot.slane %v2402, 4
        %v2410 = vadd.f32 %v2402, %v2409
        %v2411 = vrot.slane %v2410, 2
        %v2412 = vadd.f32 %v2410, %v2411
        %v2413 = vrot.slane %v2412, 1
        %v2414 = vadd.f32 %v2412, %v2413
        %v2415 = vrcp.pop %v2408
        %v2416 = vrcp.pop %v2414
        %v2417 = vmul.f32 %v2400, %v2415
        %v2418 = vmul.f32 %v2402, %v2416
        %v2419 = vpack.c.bf16 %v2417, %v2417
        %v2420 = vpack.c.bf16 %v2418, %v2418
        %v2421 = vrot.slane %v2381, 4
        %v2422 = vmax.f32 %v2381, %v2421
        %v2423 = vrot.slane %v2422, 2
        %v2424 = vmax.f32 %v2422, %v2423
        %v2425 = vrot.slane %v2424, 1
        %v2426 = vmax.f32 %v2424, %v2425
        %v2427 = vrot.slane %v2383, 4
        %v2428 = vmax.f32 %v2383, %v2427
        %v2429 = vrot.slane %v2428, 2
        %v2430 = vmax.f32 %v2428, %v2429
        %v2431 = vrot.slane %v2430, 1
        %v2432 = vmax.f32 %v2430, %v2431
        %v2433 = vsub.f32 %v2381, %v2426
        %v2434 = vsub.f32 %v2383, %v2432
        %v2435 = vmul.f32 %v2433, 1.442695
        %v2436 = vpow.pop %v2435
        %v2437 = vmul.f32 %v2434, 1.442695
        %v2438 = vpow.pop %v2437
        %v2439 = vrot.slane %v2436, 4
        %v2440 = vadd.f32 %v2436, %v2439
        %v2441 = vrot.slane %v2440, 2
        %v2442 = vadd.f32 %v2440, %v2441
        %v2443 = vrot.slane %v2442, 1
        %v2444 = vadd.f32 %v2442, %v2443
        %v2445 = vrot.slane %v2438, 4
        %v2446 = vadd.f32 %v2438, %v2445
        %v2447 = vrot.slane %v2446, 2
        %v2448 = vadd.f32 %v2446, %v2447
        %v2449 = vrot.slane %v2448, 1
        %v2450 = vadd.f32 %v2448, %v2449
        %v2451 = vrcp.pop %v2444
        %v2452 = vrcp.pop %v2450
        %v2453 = vmul.f32 %v2436, %v2451
        %v2454 = vmul.f32 %v2438, %v2452
        %v2455 = vpack.c.bf16 %v2453, %v2453
        %v2456 = vpack.c.bf16 %v2454, %v2454
        %v2458 = vsel %vm295, %v2419, 0
        %v2461 = vsel %vm295, %v2420, 0
        %2463 = vmatprep.subr.bf16.mxu0 %v2461
        %2464 = vmatpush1.bf16.msra.mxu0 %v2458
        %2465 = vmatprep.subr.bf16.mxu0 0
        %2466 = vmatpush1.bf16.msra.mxu0 0
        %2467 = vmatprep.subr.bf16.mxu0 0
        %2468 = vmatpush1.bf16.msra.mxu0 0
        %2469 = vmatprep.subr.bf16.mxu0 0
        %2470 = vmatpush1.bf16.msra.mxu0 0
        %2471 = vmatprep.subr.bf16.mxu0 0
        %2472 = vmatpush1.bf16.msra.mxu0 0
        %2473 = vmatprep.subr.bf16.mxu0 0
        %2474 = vmatpush1.bf16.msra.mxu0 0
        %2475 = vmatprep.subr.bf16.mxu0 0
        %2476 = vmatpush1.bf16.msra.mxu0 0
        %2477 = vmatprep.subr.bf16.mxu0 0
        %2478 = vmatpush1.bf16.msra.mxu0 0
        %2479 = vmatprep.subr.bf16.mxu0 0
        %2480 = vmatpush1.bf16.msra.mxu0 0
        %2481 = vmatprep.subr.bf16.mxu0 0
        %2482 = vmatpush1.bf16.msra.mxu0 0
        %2483 = vmatprep.subr.bf16.mxu0 0
        %2484 = vmatpush1.bf16.msra.mxu0 0
        %2485 = vmatprep.subr.bf16.mxu0 0
        %2486 = vmatpush1.bf16.msra.mxu0 0
        %2487 = vmatprep.subr.bf16.mxu0 0
        %2488 = vmatpush1.bf16.msra.mxu0 0
        %2489 = vmatprep.subr.bf16.mxu0 0
        %2490 = vmatpush1.bf16.msra.mxu0 0
        %2491 = vmatprep.subr.bf16.mxu0 0
        %2492 = vmatpush1.bf16.msra.mxu0 0
        %2493 = vmatprep.subr.bf16.mxu0 0
        %2494 = vmatpush1.bf16.msra.mxu0 0
        %2495 = vmatprep.mubr.bf16.mxu0 0
        %2496 = vmatmul.mubr.bf16.gmra.mrb[0].mxu0 %v542
        %v2497 = vpop.f32.mrb[0].mxu0
        %v2498 = vadd.f32 0.0, %v2497
        %v2499 = vpop.f32.mrb[0].mxu0
        %v2500 = vadd.f32 0.0, %v2499
        %v2501 = vpop.f32.mrb[0].mxu0
        %v2502 = vadd.f32 0.0, %v2501
        %v2503 = vpop.f32.mrb[0].mxu0
        %v2504 = vadd.f32 0.0, %v2503
        %2505 = vmatprep.mubr.bf16.mxu0 0
        %2506 = vmatmul.mubr.bf16.gmra.mrb[0].mxu0 %v545
        %v2507 = vpop.f32.mrb[0].mxu0
        %v2508 = vadd.f32 0.0, %v2507
        %v2509 = vpop.f32.mrb[0].mxu0
        %v2510 = vadd.f32 0.0, %v2509
        %v2511 = vpop.f32.mrb[0].mxu0
        %v2512 = vadd.f32 0.0, %v2511
        %v2513 = vpop.f32.mrb[0].mxu0
        %v2514 = vadd.f32 0.0, %v2513
        %2515 = vdwg.mxu0
        %v2516 = vadd.f32 %v2263, %v2498
        %v2517 = vadd.f32 %v2265, %v2500
        %v2518 = vadd.f32 %v2267, %v2502
        %v2519 = vadd.f32 %v2269, %v2504
        %v2520 = vadd.f32 %v2273, %v2508
        %v2521 = vadd.f32 %v2275, %v2510
        %v2522 = vadd.f32 %v2277, %v2512
        %v2523 = vadd.f32 %v2279, %v2514
        %v2524 = vmul.f32 %v2516, %v2516
        %v2525 = vmul.f32 %v2517, %v2517
        %v2526 = vmul.f32 %v2518, %v2518
        %v2527 = vmul.f32 %v2519, %v2519
        %v2528 = vmul.f32 %v2520, %v2520
        %v2529 = vmul.f32 %v2521, %v2521
        %v2530 = vmul.f32 %v2522, %v2522
        %v2531 = vmul.f32 %v2523, %v2523
        %v2532 = vmul.f32 %v2516, %v2524
        %v2533 = vmul.f32 %v2517, %v2525
        %v2534 = vmul.f32 %v2518, %v2526
        %v2535 = vmul.f32 %v2519, %v2527
        %v2536 = vmul.f32 %v2520, %v2528
        %v2537 = vmul.f32 %v2521, %v2529
        %v2538 = vmul.f32 %v2522, %v2530
        %v2539 = vmul.f32 %v2523, %v2531
        %v2540 = vmul.f32 %v2532, 0.044715
        %v2541 = vmul.f32 %v2533, 0.044715
        %v2542 = vmul.f32 %v2534, 0.044715
        %v2543 = vmul.f32 %v2535, 0.044715
        %v2544 = vmul.f32 %v2536, 0.044715
        %v2545 = vmul.f32 %v2537, 0.044715
        %v2546 = vmul.f32 %v2538, 0.044715
        %v2547 = vmul.f32 %v2539, 0.044715
        %v2548 = vadd.f32 %v2516, %v2540
        %v2549 = vadd.f32 %v2517, %v2541
        %v2550 = vadd.f32 %v2518, %v2542
        %v2551 = vadd.f32 %v2519, %v2543
        %v2552 = vadd.f32 %v2520, %v2544
        %v2553 = vadd.f32 %v2521, %v2545
        %v2554 = vadd.f32 %v2522, %v2546
        %v2555 = vadd.f32 %v2523, %v2547
        %v2556 = vmul.f32 %v2548, 0.7978846
        %v2557 = vmul.f32 %v2549, 0.7978846
        %v2558 = vmul.f32 %v2550, 0.7978846
        %v2559 = vmul.f32 %v2551, 0.7978846
        %v2560 = vmul.f32 %v2552, 0.7978846
        %v2561 = vmul.f32 %v2553, 0.7978846
        %v2562 = vmul.f32 %v2554, 0.7978846
        %v2563 = vmul.f32 %v2555, 0.7978846
        %v2564 = vtanh.pop %v2556
        %v2565 = vtanh.pop %v2557
        %v2566 = vtanh.pop %v2558
        %v2567 = vtanh.pop %v2559
        %v2568 = vtanh.pop %v2560
        %v2569 = vtanh.pop %v2561
        %v2570 = vtanh.pop %v2562
        %v2571 = vtanh.pop %v2563
        %v2572 = vadd.f32 %v2564, 1.0
        %v2573 = vadd.f32 %v2565, 1.0
        %v2574 = vadd.f32 %v2566, 1.0
        %v2575 = vadd.f32 %v2567, 1.0
        %v2576 = vadd.f32 %v2568, 1.0
        %v2577 = vadd.f32 %v2569, 1.0
        %v2578 = vadd.f32 %v2570, 1.0
        %v2579 = vadd.f32 %v2571, 1.0
        %v2580 = vmul.f32 %v2572, 0.5
        %v2581 = vmul.f32 %v2573, 0.5
        %v2582 = vmul.f32 %v2574, 0.5
        %v2583 = vmul.f32 %v2575, 0.5
        %v2584 = vmul.f32 %v2576, 0.5
        %v2585 = vmul.f32 %v2577, 0.5
        %v2586 = vmul.f32 %v2578, 0.5
        %v2587 = vmul.f32 %v2579, 0.5
        %v2588 = vmul.f32 %v2516, %v2580
        %v2589 = vmul.f32 %v2517, %v2581
        %v2590 = vmul.f32 %v2518, %v2582
        %v2591 = vmul.f32 %v2519, %v2583
        %v2592 = vmul.f32 %v2520, %v2584
        %v2593 = vmul.f32 %v2521, %v2585
        %v2594 = vmul.f32 %v2522, %v2586
        %v2595 = vmul.f32 %v2523, %v2587
        %v2596 = vpack.c.bf16 %v2590, %v2588
        %v2597 = vpack.c.bf16 %v2591, %v2589
        %v2598 = vpack.c.bf16 %v2594, %v2592
        %v2599 = vpack.c.bf16 %v2595, %v2593
        %v2601 = vsel %vm295, %v2455, 0
        %v2604 = vsel %vm295, %v2456, 0
        %2606 = vmatprep.subr.bf16.mxu0 %v2604
        %2607 = vmatpush1.bf16.msra.mxu0 %v2601
        %2608 = vmatprep.subr.bf16.mxu0 0
        %2609 = vmatpush1.bf16.msra.mxu0 0
        %2610 = vmatprep.subr.bf16.mxu0 0
        %2611 = vmatpush1.bf16.msra.mxu0 0
        %2612 = vmatprep.subr.bf16.mxu0 0
        %2613 = vmatpush1.bf16.msra.mxu0 0
        %2614 = vmatprep.subr.bf16.mxu0 0
        %2615 = vmatpush1.bf16.msra.mxu0 0
        %2616 = vmatprep.subr.bf16.mxu0 0
        %2617 = vmatpush1.bf16.msra.mxu0 0
        %2618 = vmatprep.subr.bf16.mxu0 0
        %2619 = vmatpush1.bf16.msra.mxu0 0
        %2620 = vmatprep.subr.bf16.mxu0 0
        %2621 = vmatpush1.bf16.msra.mxu0 0
        %2622 = vmatprep.subr.bf16.mxu0 0
        %2623 = vmatpush1.bf16.msra.mxu0 0
        %2624 = vmatprep.subr.bf16.mxu0 0
        %2625 = vmatpush1.bf16.msra.mxu0 0
        %2626 = vmatprep.subr.bf16.mxu0 0
        %2627 = vmatpush1.bf16.msra.mxu0 0
        %2628 = vmatprep.subr.bf16.mxu0 0
        %2629 = vmatpush1.bf16.msra.mxu0 0
        %2630 = vmatprep.subr.bf16.mxu0 0
        %2631 = vmatpush1.bf16.msra.mxu0 0
        %2632 = vmatprep.subr.bf16.mxu0 0
        %2633 = vmatpush1.bf16.msra.mxu0 0
        %2634 = vmatprep.subr.bf16.mxu0 0
        %2635 = vmatpush1.bf16.msra.mxu0 0
        %2636 = vmatprep.subr.bf16.mxu0 0
        %2637 = vmatpush1.bf16.msra.mxu0 0
        %2638 = vmatprep.mubr.bf16.mxu0 0
        %2639 = vmatmul.mubr.bf16.gmra.mrb[0].mxu0 %v691
        %v2640 = vpop.f32.mrb[0].mxu0
        %v2641 = vadd.f32 0.0, %v2640
        %v2642 = vpop.f32.mrb[0].mxu0
        %v2643 = vadd.f32 0.0, %v2642
        %v2644 = vpop.f32.mrb[0].mxu0
        %v2645 = vadd.f32 0.0, %v2644
        %v2646 = vpop.f32.mrb[0].mxu0
        %v2647 = vadd.f32 0.0, %v2646
        %2648 = vmatprep.mubr.bf16.mxu0 0
        %2649 = vmatmul.mubr.bf16.gmra.mrb[0].mxu0 %v694
        %v2650 = vpop.f32.mrb[0].mxu0
        %v2651 = vadd.f32 0.0, %v2650
        %v2652 = vpop.f32.mrb[0].mxu0
        %v2653 = vadd.f32 0.0, %v2652
        %v2654 = vpop.f32.mrb[0].mxu0
        %v2655 = vadd.f32 0.0, %v2654
        %v2656 = vpop.f32.mrb[0].mxu0
        %v2657 = vadd.f32 0.0, %v2656
        %2658 = vdwg.mxu0
        %v2659 = vadd.f32 %v2263, %v2641
        %v2660 = vadd.f32 %v2265, %v2643
        %v2661 = vadd.f32 %v2267, %v2645
        %v2662 = vadd.f32 %v2269, %v2647
        %v2663 = vadd.f32 %v2273, %v2651
        %v2664 = vadd.f32 %v2275, %v2653
        %v2665 = vadd.f32 %v2277, %v2655
        %v2666 = vadd.f32 %v2279, %v2657
        %v2667 = vmul.f32 %v2659, %v2659
        %v2668 = vmul.f32 %v2660, %v2660
        %v2669 = vmul.f32 %v2661, %v2661
        %v2670 = vmul.f32 %v2662, %v2662
        %v2671 = vmul.f32 %v2663, %v2663
        %v2672 = vmul.f32 %v2664, %v2664
        %v2673 = vmul.f32 %v2665, %v2665
        %v2674 = vmul.f32 %v2666, %v2666
        %v2675 = vmul.f32 %v2659, %v2667
        %v2676 = vmul.f32 %v2660, %v2668
        %v2677 = vmul.f32 %v2661, %v2669
        %v2678 = vmul.f32 %v2662, %v2670
        %v2679 = vmul.f32 %v2663, %v2671
        %v2680 = vmul.f32 %v2664, %v2672
        %v2681 = vmul.f32 %v2665, %v2673
        %v2682 = vmul.f32 %v2666, %v2674
        %v2683 = vmul.f32 %v2675, 0.044715
        %v2684 = vmul.f32 %v2676, 0.044715
        %v2685 = vmul.f32 %v2677, 0.044715
        %v2686 = vmul.f32 %v2678, 0.044715
        %v2687 = vmul.f32 %v2679, 0.044715
        %v2688 = vmul.f32 %v2680, 0.044715
        %v2689 = vmul.f32 %v2681, 0.044715
        %v2690 = vmul.f32 %v2682, 0.044715
        %v2691 = vadd.f32 %v2659, %v2683
        %v2692 = vadd.f32 %v2660, %v2684
        %v2693 = vadd.f32 %v2661, %v2685
        %v2694 = vadd.f32 %v2662, %v2686
        %v2695 = vadd.f32 %v2663, %v2687
        %v2696 = vadd.f32 %v2664, %v2688
        %v2697 = vadd.f32 %v2665, %v2689
        %v2698 = vadd.f32 %v2666, %v2690
        %v2699 = vmul.f32 %v2691, 0.7978846
        %v2700 = vmul.f32 %v2692, 0.7978846
        %v2701 = vmul.f32 %v2693, 0.7978846
        %v2702 = vmul.f32 %v2694, 0.7978846
        %v2703 = vmul.f32 %v2695, 0.7978846
        %v2704 = vmul.f32 %v2696, 0.7978846
        %v2705 = vmul.f32 %v2697, 0.7978846
        %v2706 = vmul.f32 %v2698, 0.7978846
        %v2707 = vtanh.pop %v2699
        %v2708 = vtanh.pop %v2700
        %v2709 = vtanh.pop %v2701
        %v2710 = vtanh.pop %v2702
        %v2711 = vtanh.pop %v2703
        %v2712 = vtanh.pop %v2704
        %v2713 = vtanh.pop %v2705
        %v2714 = vtanh.pop %v2706
        %v2715 = vadd.f32 %v2707, 1.0
        %v2716 = vadd.f32 %v2708, 1.0
        %v2717 = vadd.f32 %v2709, 1.0
        %v2718 = vadd.f32 %v2710, 1.0
        %v2719 = vadd.f32 %v2711, 1.0
        %v2720 = vadd.f32 %v2712, 1.0
        %v2721 = vadd.f32 %v2713, 1.0
        %v2722 = vadd.f32 %v2714, 1.0
        %v2723 = vmul.f32 %v2715, 0.5
        %v2724 = vmul.f32 %v2716, 0.5
        %v2725 = vmul.f32 %v2717, 0.5
        %v2726 = vmul.f32 %v2718, 0.5
        %v2727 = vmul.f32 %v2719, 0.5
        %v2728 = vmul.f32 %v2720, 0.5
        %v2729 = vmul.f32 %v2721, 0.5
        %v2730 = vmul.f32 %v2722, 0.5
        %v2731 = vmul.f32 %v2659, %v2723
        %v2732 = vmul.f32 %v2660, %v2724
        %v2733 = vmul.f32 %v2661, %v2725
        %v2734 = vmul.f32 %v2662, %v2726
        %v2735 = vmul.f32 %v2663, %v2727
        %v2736 = vmul.f32 %v2664, %v2728
        %v2737 = vmul.f32 %v2665, %v2729
        %v2738 = vmul.f32 %v2666, %v2730
        %v2739 = vpack.c.bf16 %v2733, %v2731
        %v2740 = vpack.c.bf16 %v2734, %v2732
        %v2741 = vpack.c.bf16 %v2737, %v2735
        %v2742 = vpack.c.bf16 %v2738, %v2736
        %2743 = vmatprep.subr.bf16.mxu0 %v2597
        %2744 = vmatpush1.bf16.msra.mxu0 %v2596
        %2745 = vmatprep.subr.bf16.mxu0 %v2599
        %2746 = vmatpush1.bf16.msra.mxu0 %v2598
        %2747 = vmatprep.subr.bf16.mxu0 0
        %2748 = vmatpush1.bf16.msra.mxu0 0
        %2749 = vmatprep.subr.bf16.mxu0 0
        %2750 = vmatpush1.bf16.msra.mxu0 0
        %2751 = vmatprep.subr.bf16.mxu0 0
        %2752 = vmatpush1.bf16.msra.mxu0 0
        %2753 = vmatprep.subr.bf16.mxu0 0
        %2754 = vmatpush1.bf16.msra.mxu0 0
        %2755 = vmatprep.subr.bf16.mxu0 0
        %2756 = vmatpush1.bf16.msra.mxu0 0
        %2757 = vmatprep.subr.bf16.mxu0 0
        %2758 = vmatpush1.bf16.msra.mxu0 0
        %2759 = vmatprep.subr.bf16.mxu0 0
        %2760 = vmatpush1.bf16.msra.mxu0 0
        %2761 = vmatprep.subr.bf16.mxu0 0
        %2762 = vmatpush1.bf16.msra.mxu0 0
        %2763 = vmatprep.subr.bf16.mxu0 0
        %2764 = vmatpush1.bf16.msra.mxu0 0
        %2765 = vmatprep.subr.bf16.mxu0 0
        %2766 = vmatpush1.bf16.msra.mxu0 0
        %2767 = vmatprep.subr.bf16.mxu0 0
        %2768 = vmatpush1.bf16.msra.mxu0 0
        %2769 = vmatprep.subr.bf16.mxu0 0
        %2770 = vmatpush1.bf16.msra.mxu0 0
        %2771 = vmatprep.subr.bf16.mxu0 0
        %2772 = vmatpush1.bf16.msra.mxu0 0
        %2773 = vmatprep.subr.bf16.mxu0 0
        %2774 = vmatpush1.bf16.msra.mxu0 0
        %2775 = vmatprep.mubr.bf16.mxu0 0
        %2776 = vmatmul.mubr.bf16.gmra.mrb[0].mxu0 %v845
        %v2777 = vpop.f32.mrb[0].mxu0
        %v2778 = vadd.f32 %v842, %v2777
        %v2779 = vpop.f32.mrb[0].mxu0
        %v2780 = vadd.f32 %v842, %v2779
        %v2781 = vpop.f32.mrb[0].mxu0
        %v2782 = vpop.f32.mrb[0].mxu0
        %2783 = vdwg.mxu0
        %2784 = vmatprep.subr.bf16.mxu0 %v2740
        %2785 = vmatpush1.bf16.msra.mxu0 %v2739
        %2786 = vmatprep.subr.bf16.mxu0 %v2742
        %2787 = vmatpush1.bf16.msra.mxu0 %v2741
        %2788 = vmatprep.subr.bf16.mxu0 0
        %2789 = vmatpush1.bf16.msra.mxu0 0
        %2790 = vmatprep.subr.bf16.mxu0 0
        %2791 = vmatpush1.bf16.msra.mxu0 0
        %2792 = vmatprep.subr.bf16.mxu0 0
        %2793 = vmatpush1.bf16.msra.mxu0 0
        %2794 = vmatprep.subr.bf16.mxu0 0
        %2795 = vmatpush1.bf16.msra.mxu0 0
        %2796 = vmatprep.subr.bf16.mxu0 0
        %2797 = vmatpush1.bf16.msra.mxu0 0
        %2798 = vmatprep.subr.bf16.mxu0 0
        %2799 = vmatpush1.bf16.msra.mxu0 0
        %2800 = vmatprep.subr.bf16.mxu0 0
        %2801 = vmatpush1.bf16.msra.mxu0 0
        %2802 = vmatprep.subr.bf16.mxu0 0
        %2803 = vmatpush1.bf16.msra.mxu0 0
        %2804 = vmatprep.subr.bf16.mxu0 0
        %2805 = vmatpush1.bf16.msra.mxu0 0
        %2806 = vmatprep.subr.bf16.mxu0 0
        %2807 = vmatpush1.bf16.msra.mxu0 0
        %2808 = vmatprep.subr.bf16.mxu0 0
        %2809 = vmatpush1.bf16.msra.mxu0 0
        %2810 = vmatprep.subr.bf16.mxu0 0
        %2811 = vmatpush1.bf16.msra.mxu0 0
        %2812 = vmatprep.subr.bf16.mxu0 0
        %2813 = vmatpush1.bf16.msra.mxu0 0
        %2814 = vmatprep.subr.bf16.mxu0 0
        %2815 = vmatpush1.bf16.msra.mxu0 0
        %2816 = vmatprep.mubr.bf16.mxu0 0
        %2817 = vmatmul.mubr.bf16.gmra.mrb[0].mxu0 %v845
        %v2818 = vpop.f32.mrb[0].mxu0
        %v2819 = vadd.f32 %v842, %v2818
        %v2820 = vpop.f32.mrb[0].mxu0
        %v2821 = vadd.f32 %v842, %v2820
        %v2822 = vpop.f32.mrb[0].mxu0
        %v2823 = vpop.f32.mrb[0].mxu0
        %2824 = vdwg.mxu0
        %v2825 = vsub.f32 %v2819, %v2778
        %v2826 = vsub.f32 %v2821, %v2780
        %v2827 = vstv %s2210
        %v2828 = vmul.f32 %v2827, %v2825
        %v2829 = vmul.f32 %v2827, %v2826
        %v2830 = vadd.f32 %v2778, %v2828
        %v2831 = vadd.f32 %v2780, %v2829
        %v2832 = vstv %s2208
        %v2833 = vmul.f32 %v2832, %v2206
        %v2834 = vmul.f32 %v2832, %v2207
        %v2835 = vstv %s2209
        %v2836 = vmul.f32 %v2835, %v2830
        %v2837 = vmul.f32 %v2835, %v2831
        %v2838 = vadd.f32 %v2833, %v2836
        %v2839 = vadd.f32 %v2834, %v2837
        %v2840 = vpack.c.bf16 %v2838, %v2838
        %v2841 = vpack.c.bf16 %v2839, %v2839
        %2843 = vset.pattern.permute.xlu0 0
        %2844 = vperm.xlu0 %2843, %v272
        %v2845 = vpop.permute.xlu0 %2844
        %v2848 = vsel %vm288, %v270, 0
        %v2851 = vsel %vm295, %v2840, 0
        %v2854 = vsel %vm295, %v2841, 0
        %2856 = vmatprep.subr.bf16.mxu0 %v2854
        %2857 = vmatpush1.bf16.msra.mxu0 %v2851
        %2858 = vmatprep.subr.bf16.mxu0 0
        %2859 = vmatpush1.bf16.msra.mxu0 0
        %2860 = vmatprep.subr.bf16.mxu0 0
        %2861 = vmatpush1.bf16.msra.mxu0 0
        %2862 = vmatprep.subr.bf16.mxu0 0
        %2863 = vmatpush1.bf16.msra.mxu0 0
        %2864 = vmatprep.subr.bf16.mxu0 0
        %2865 = vmatpush1.bf16.msra.mxu0 0
        %2866 = vmatprep.subr.bf16.mxu0 0
        %2867 = vmatpush1.bf16.msra.mxu0 0
        %2868 = vmatprep.subr.bf16.mxu0 0
        %2869 = vmatpush1.bf16.msra.mxu0 0
        %2870 = vmatprep.subr.bf16.mxu0 0
        %2871 = vmatpush1.bf16.msra.mxu0 0
        %2872 = vmatprep.subr.bf16.mxu0 0
        %2873 = vmatpush1.bf16.msra.mxu0 0
        %2874 = vmatprep.subr.bf16.mxu0 0
        %2875 = vmatpush1.bf16.msra.mxu0 0
        %2876 = vmatprep.subr.bf16.mxu0 0
        %2877 = vmatpush1.bf16.msra.mxu0 0
        %2878 = vmatprep.subr.bf16.mxu0 0
        %2879 = vmatpush1.bf16.msra.mxu0 0
        %2880 = vmatprep.subr.bf16.mxu0 0
        %2881 = vmatpush1.bf16.msra.mxu0 0
        %2882 = vmatprep.subr.bf16.mxu0 0
        %2883 = vmatpush1.bf16.msra.mxu0 0
        %2884 = vmatprep.subr.bf16.mxu0 0
        %2885 = vmatpush1.bf16.msra.mxu0 0
        %2886 = vmatprep.subr.bf16.mxu0 0
        %2887 = vmatpush1.bf16.msra.mxu0 0
        %2888 = vmatprep.mubr.bf16.mxu0 0
        %2889 = vmatmul.mubr.bf16.gmra.mrb[0].mxu0 %v2848
        %v2890 = vpop.f32.mrb[0].mxu0
        %v2891 = vadd.f32 %v2845, %v2890
        %v2892 = vpop.f32.mrb[0].mxu0
        %v2893 = vadd.f32 %v2845, %v2892
        %v2894 = vpop.f32.mrb[0].mxu0
        %v2895 = vpop.f32.mrb[0].mxu0
        %2896 = vdwg.mxu0
        %v2897 = vmul.f32 %v2891, 0.5
        %v2898 = vmul.f32 %v2893, 0.5
        %v2899 = vadd.f32 %v2897, 0.5
        %v2900 = vadd.f32 %v2898, 0.5
        %v2901 = vmax.f32 %v2899, 0.0
        %v2902 = vmax.f32 %v2900, 0.0
        %v2903 = vmin.f32 %v2901, 1.0
        %v2904 = vmin.f32 %v2902, 1.0
        %2905 = vst [vmem:[%s238] sm:$0xff] %v2903
        %2906 = vst [vmem:[%s238 + $0x8] sm:$0xff] %v2904
        %p2907 = scmp.lt.s32.totalorder %s17, 1
        %s2908 = scalar_select %p2907, %s17, 1
        %s2909 = smul.addr %s2908, 2
        %s2910 = smul.addr %s2909, 8
        %s2911 = scalar_lea.vmem %s5, %s2910
        // Predicated region
        $region45: #{_forward_core.1} parent=39 // pred_check
          %p2912 = pneg %p145
        $region46: #{_forward_core.1} parent=39 // pred_check_branch
          %2914 = sbr.rel (%p2912) target = $region48
        $region47: #{_forward_core.1} parent=39 // pred_region
          _
        $region48: #{_forward_core.1} parent=39 // pred_fallthru
          _
      $region40: #{_forward_core.1} parent=5 // pred_fallthru
        _
      %p2915 = scmp.le.s32.totalorder 2, %s12
      // Predicated region
      $region49: #{_forward_core.1} parent=5 // pred_check
        %p2916 = pneg %p2915
      $region50: #{_forward_core.1} parent=5 // pred_check_branch
        %2918 = sbr.rel (%p2916) target = $region52
      $region51: #{_forward_core.1} parent=5 // pred_region
        %s2919 = ssub.s32 %s12, 2
        // Predicated region
        $region53: #{_forward_core.1} parent=51 // pred_check
          %p2920 = pneg %p151
        $region54: #{_forward_core.1} parent=51 // pred_check_branch
          %2922 = sbr.rel (%p2920) target = $region56
        $region55: #{_forward_core.1} parent=51 // pred_region
          %p2923 = scmp.lt.s32.totalorder %s18, 1
          %s2924 = scalar_select %p2923, %s18, 1
          %s2925 = smul.addr %s2924, 2
          %s2926 = smul.addr %s2925, 8
          %s2927 = scalar_lea.vmem %s5, %s2926
        $region56: #{_forward_core.1} parent=51 // pred_fallthru
          _
      $region52: #{_forward_core.1} parent=5 // pred_fallthru
        _
    $region6: #{_forward_core.1} parent=1 // loop_footer
      %s16 = sadd.s32 1, %s12
    $region7: #{_forward_core.1} parent=1 // loop_footer_branch
      %11 = sbr.rel target = $region3
    $region8: #{_forward_core.1} parent=1 // loop_exit
      _
    %2928 = vsyncpa [#allocation3], 1
    %s2929 = scalar_lea.sflag [#allocation3], 1
    %2930 = vsyncpa %s2929, 1

</llo_original>
